<compile_context>
chip_gen: v5e
topology: v5e:2x2
jax: 0.10.0
libtpu: 0.0.40
codegen_flags: <defaults>
</compile_context>

<pallas_src>
import functools

import jax
import jax.numpy as jnp
from jax.experimental import pallas as pl
from jax.experimental.pallas import tpu as pltpu

NEG_BIG = -9000000000000000.0   # mask value used by the PyTorch module
LEAKY_SLOPE = 0.01              # nn.LeakyReLU() default negative_slope


def _round_up(x, m):
    return (x + m - 1) // m * m


def _has_bf16_vector_units():
    """True on chips with bf16 VPU/EUP (v6e, v7x); False on v5e and earlier."""
    try:
        kind = jax.devices()[0].device_kind.lower()
    except Exception:
        return False
    if "tpu" not in kind:
        return False
    return not any(tag in kind for tag in ("v2", "v3", "v4", "v5"))


# ---------------------------------------------------------------------------
# Stage 1: fused linear + attention projections (row-tiled over nodes).
#   x_ref   : (TR, Dp)  bf16  row tile of (padded) node features
#   w_ref   : (Dp, Dp)  bf16  padded linear weight (layout: H = X @ W + b)
#   b_ref   : (1, Dp)   f32
#   w12_ref : (Dp, 128) f32   [w1 | w2 | 0...]   (fused, lane padded)
#   b12_ref : (1, 128)  f32   [b1 | b2 | 0...]
# outputs:
#   h_ref   : (TR, Dp)  bf16  H row tile (only consumed by att @ H)
#   e1_ref  : (TR, 1)   f32   query-side logits
#   e2_ref  : (TR, 1)   f32   key-side logits (transposed in the wrapper)
# ---------------------------------------------------------------------------
def proj_kernel(x_ref, w_ref, b_ref, w12_ref, b12_ref, h_ref, e1_ref, e2_ref):
    # bf16 operands on the MXU, f32 accumulation.
    h = jnp.dot(x_ref[...], w_ref[...],
                preferred_element_type=jnp.float32) + b_ref[...]
    # Tiny fused projection matmul (f32 operands: negligible cost, tight logits).
    e = jnp.dot(h, w12_ref[...], preferred_element_type=jnp.float32) + b12_ref[...]
    h_ref[...] = h.astype(h_ref.dtype)
    e1_ref[...] = e[:, 0:1]
    e2_ref[...] = e[:, 1:2]


# ---------------------------------------------------------------------------
# Stage 2: flash-style masked row softmax + aggregation.
#   grid = (num_row_tiles, num_col_tiles); col axis (last) is the online-
#   softmax reduction (scratch carries running max / denom / numerator).
#   e1_ref  : (TR, 1)    f32
#   e2t_ref : (1, TC)    f32   key-side logits, lane-dense
#   adj_ref : (TR, TC)   int8  adjacency tile (!= 0 means edge)
#   h_ref   : (TC, Dp)   bf16  streamed column block of H
#   out_ref : (TR, Dp)   f32
# ---------------------------------------------------------------------------
def flash_attn_kernel(e1_ref, e2t_ref, adj_ref, h_ref, out_ref,
                      m_sc, l_sc, acc_sc, *, bf16_softmax):
    j = pl.program_id(1)
    nc = pl.num_programs(1)

    @pl.when(j == 0)
    def _init():
        m_sc[...] = jnp.full(m_sc.shape, -jnp.inf, m_sc.dtype)
        l_sc[...] = jnp.zeros(l_sc.shape, l_sc.dtype)
        acc_sc[...] = jnp.zeros(acc_sc.shape, acc_sc.dtype)

    # e = e1 + e2^T for this (row_tile, col_tile); LeakyReLU; mask non-edges.
    s = e1_ref[...] + e2t_ref[...]                 # (TR,1)+(1,TC) -> (TR,TC) f32
    s = jnp.maximum(s, LEAKY_SLOPE * s)            # LeakyReLU, no cmp+select
    s = jnp.where(adj_ref[...] != 0, s, NEG_BIG)   # int8 compare, no int32 widen

    # Online softmax update (running stats stay f32 on all generations).
    m_prev = m_sc[...]
    m_new = jnp.maximum(m_prev, jnp.max(s, axis=1, keepdims=True))
    alpha = jnp.exp(m_prev - m_new)

    if bf16_softmax:
        # v6e / v7x: bf16 exp (2x EUP throughput) and bf16 matmul operand.
        p = jnp.exp((s - m_new).astype(jnp.bfloat16))
        p_sum = jnp.sum(p.astype(jnp.float32), axis=1, keepdims=True)
    else:
        # v5e: no bf16 VPU/EUP -> keep the softmax math f32.
        p32 = jnp.exp(s - m_new)
        p = p32.astype(jnp.bfloat16)
        p_sum = jnp.sum(p32, axis=1, keepdims=True)

    l_sc[...] = alpha * l_sc[...] + p_sum
    acc_sc[...] = alpha * acc_sc[...] + jnp.dot(
        p, h_ref[...], preferred_element_type=jnp.float32)
    m_sc[...] = m_new

    @pl.when(j == nc - 1)
    def _finalize():
        out_ref[...] = (acc_sc[...] *
                        pl.reciprocal(l_sc[...], approx=True)).astype(out_ref.dtype)


@functools.partial(jax.jit,
                   static_argnames=("tile_rows", "tile_cols", "bf16_softmax"))
def gat_layer(X, adj, W, b, w1, b1, w2, b2, *,
              tile_rows=256, tile_cols=256, bf16_softmax=None):
    N, D = X.shape
    if bf16_softmax is None:            # resolved at trace time (static)
        bf16_softmax = _has_bf16_vector_units()

    tr, tc = tile_rows, tile_cols
    # Keep >= 2 row tiles when possible so v7x's two TensorCores both get work.
    while tr > 128 and _round_up(N, tr) // tr < 2:
        tr //= 2
    n_pad = _round_up(N, max(tr, tc))   # power-of-two tiles -> multiple of both
    d_pad = _round_up(D, 128)           # lane-dense feature slab
    f32 = jnp.float32
    bf16 = jnp.bfloat16

    # Zero-pad to TPU-friendly shapes.  X / W ship as bf16 (pure MXU operands);
    # padded feature columns stay zero; padded node columns are masked via adj=0.
    Xp = jnp.zeros((n_pad, d_pad), bf16).at[:N, :D].set(X.astype(bf16))
    Wp = jnp.zeros((d_pad, d_pad), bf16).at[:D, :D].set(W.astype(bf16))
    bp = jnp.zeros((1, d_pad), f32).at[:, :D].set(b.astype(f32).reshape(1, D))
    w12 = jnp.concatenate([w1, w2], axis=1).astype(f32)              # (D, 2)
    w12p = jnp.zeros((d_pad, 128), f32).at[:D, :2].set(w12)
    b12 = jnp.concatenate(
        [b1.reshape(1, 1), b2.reshape(1, 1)], axis=1).astype(f32)    # (1, 2)
    b12p = jnp.zeros((1, 128), f32).at[:, :2].set(b12)
    adj_i8 = jnp.zeros((n_pad, n_pad), jnp.int8).at[:N, :N].set(
        (adj > 0).astype(jnp.int8))

    nr = n_pad // tr
    nc = n_pad // tc

    # ---------------- stage 1: H, e1, e2 ----------------
    h, e1, e2 = pl.pallas_call(
        proj_kernel,
        out_shape=(jax.ShapeDtypeStruct((n_pad, d_pad), bf16),
                   jax.ShapeDtypeStruct((n_pad, 1), f32),
                   jax.ShapeDtypeStruct((n_pad, 1), f32)),
        grid_spec=pltpu.PrefetchScalarGridSpec(
            num_scalar_prefetch=0,
            grid=(nr,),
            in_specs=[pl.BlockSpec((tr, d_pad), lambda i: (i, 0)),
                      pl.BlockSpec((d_pad, d_pad), lambda i: (0, 0)),
                      pl.BlockSpec((1, d_pad), lambda i: (0, 0)),
                      pl.BlockSpec((d_pad, 128), lambda i: (0, 0)),
                      pl.BlockSpec((1, 128), lambda i: (0, 0))],
            out_specs=[pl.BlockSpec((tr, d_pad), lambda i: (i, 0)),
                       pl.BlockSpec((tr, 1), lambda i: (i, 0)),
                       pl.BlockSpec((tr, 1), lambda i: (i, 0))]),
        compiler_params=pltpu.CompilerParams(
            dimension_semantics=("parallel",),
            vmem_limit_bytes=32 << 20),
        cost_estimate=pl.CostEstimate(
            flops=2 * n_pad * d_pad * d_pad + 2 * n_pad * d_pad * 128,
            transcendentals=0,
            bytes_accessed=(n_pad * d_pad * 2 + d_pad * d_pad * 2
                            + d_pad * 128 * 4 + n_pad * d_pad * 2
                            + 2 * n_pad * 4)),
    )(Xp, Wp, bp, w12p, b12p)

    # Free (N,1)->(1,N) reshape in XLA; gives a lane-dense key-side logit slab.
    e2t = e2.reshape(1, n_pad)

    # ---------------- stage 2: masked online softmax + att @ H ----------------
    out_p = pl.pallas_call(
        functools.partial(flash_attn_kernel, bf16_softmax=bf16_softmax),
        out_shape=jax.ShapeDtypeStruct((n_pad, d_pad), f32),
        grid_spec=pltpu.PrefetchScalarGridSpec(
            num_scalar_prefetch=0,
            grid=(nr, nc),
            in_specs=[pl.BlockSpec((tr, 1), lambda i, j: (i, 0)),       # e1 rows
                      pl.BlockSpec((1, tc), lambda i, j: (0, j)),       # e2^T cols
                      pl.BlockSpec((tr, tc), lambda i, j: (i, j)),      # adj tile
                      pl.BlockSpec((tc, d_pad), lambda i, j: (j, 0))],  # H streamed
            out_specs=pl.BlockSpec((tr, d_pad), lambda i, j: (i, 0)),
            scratch_shapes=[pltpu.VMEM((tr, 1), f32),        # running max
                            pltpu.VMEM((tr, 1), f32),        # running denom
                            pltpu.VMEM((tr, d_pad), f32)]),  # running numerator
        compiler_params=pltpu.CompilerParams(
            dimension_semantics=("parallel", "arbitrary"),
            vmem_limit_bytes=32 << 20),
        cost_estimate=pl.CostEstimate(
            flops=2 * n_pad * n_pad * d_pad + 8 * n_pad * n_pad,
            transcendentals=n_pad * n_pad,
            bytes_accessed=(n_pad * n_pad * 1            # adj (int8)
                            + nr * n_pad * d_pad * 2     # H streamed per row tile
                            + n_pad * d_pad * 4          # output
                            + 3 * n_pad * 4)),
    )(e1, e2t, adj_i8, h)

    return out_p[:N, :D]


def gat_layer_ref(X, adj, W, b, w1, b1, w2, b2):
    """Pure-JAX f32 reference mirroring the PyTorch forward."""
    H = X @ W + b
    e = (H @ w1 + b1) + (H @ w2 + b2).T
    e = jnp.where(e > 0, e, LEAKY_SLOPE * e)
    att = jnp.where(adj > 0, e, jnp.full_like(e, NEG_BIG))
    att = jax.nn.softmax(att, axis=1)
    return att @ H


if __name__ == "__main__":
    # Small graph; N deliberately NOT a tile multiple to exercise the
    # padding + padded-column masking path.
    N, D = 300, 32

    key = jax.random.PRNGKey(0)
    kx, kadj, kw, kb, kw1, kb1, kw2, kb2 = jax.random.split(key, 8)

    X = jax.random.normal(kx, (N, D), dtype=jnp.float32)
    adj = (jax.random.uniform(kadj, (N, N)) > 0.5).astype(jnp.float32)
    adj = jnp.maximum(adj, jnp.eye(N, dtype=jnp.float32))   # self loops

    # nn.Linear(input_size, input_size): weight stored transposed (H = X @ W + b)
    W = jax.random.normal(kw, (D, D), dtype=jnp.float32) * 0.1
    b = jax.random.normal(kb, (1, D), dtype=jnp.float32) * 0.1
    # nn.Linear(input_size, 1) x2
    w1 = jax.random.normal(kw1, (D, 1), dtype=jnp.float32) * 0.1
    b1 = jax.random.normal(kb1, (1, 1), dtype=jnp.float32) * 0.1
    w2 = jax.random.normal(kw2, (D, 1), dtype=jnp.float32) * 0.1
    b2 = jax.random.normal(kb2, (1, 1), dtype=jnp.float32) * 0.1

    out = jax.block_until_ready(gat_layer(X, adj, W, b, w1, b1, w2, b2))
    ref = gat_layer_ref(X, adj, W, b, w1, b1, w2, b2)

    assert out.shape == (N, D)
    max_err = jnp.max(jnp.abs(out - ref))
    # bf16 MXU operands + (optional) bf16 exp + approx reciprocal => looser
    # than pure-f32 tolerance.
    assert jnp.allclose(out, ref, atol=2e-2, rtol=2e-2), (
        f"mismatch vs reference: max |diff| = {max_err}")

    print("KERNEL_OK")
</pallas_src>

<mosaic_0001>
module attributes {stable_mosaic.version = 11 : i64} {
  func.func @proj_kernel(%arg0: i32, %arg1: memref<256x128xbf16, #tpu.memory_space<vmem>>, %arg2: memref<128x128xbf16, #tpu.memory_space<vmem>>, %arg3: memref<1x128xf32, #tpu.memory_space<vmem>>, %arg4: memref<128x128xf32, #tpu.memory_space<vmem>>, %arg5: memref<1x128xf32, #tpu.memory_space<vmem>>, %arg6: memref<256x128xbf16, #tpu.memory_space<vmem>>, %arg7: memref<256x1xf32, #tpu.memory_space<vmem>>, %arg8: memref<256x1xf32, #tpu.memory_space<vmem>>) attributes {dimension_semantics = [#tpu.dimension_semantics<parallel>], iteration_bounds = array<i64: 2>, scalar_prefetch = 0 : i64, scratch_operands = 0 : i64, tpu.core_type = #tpu.core_type<tc>, window_params = [{transform_indices = @transform_0, window_bounds = array<i64: 256, 128>}, {pipeline_mode = #tpu.pipeline_mode<synchronous>, transform_indices = @transform_1, window_bounds = array<i64: 128, 128>}, {pipeline_mode = #tpu.pipeline_mode<synchronous>, transform_indices = @transform_2, window_bounds = array<i64: 1, 128>}, {pipeline_mode = #tpu.pipeline_mode<synchronous>, transform_indices = @transform_3, window_bounds = array<i64: 128, 128>}, {pipeline_mode = #tpu.pipeline_mode<synchronous>, transform_indices = @transform_4, window_bounds = array<i64: 1, 128>}, {transform_indices = @transform_5, window_bounds = array<i64: 256, 128>}, {transform_indices = @transform_6, window_bounds = array<i64: 256, 1>}, {transform_indices = @transform_7, window_bounds = array<i64: 256, 1>}]} {
    %c0 = arith.constant 0 : index
    %c0_0 = arith.constant 0 : index
    %0 = vector.load %arg1[%c0, %c0_0] : memref<256x128xbf16, #tpu.memory_space<vmem>>, vector<256x128xbf16>
    %c0_1 = arith.constant 0 : index
    %c0_2 = arith.constant 0 : index
    %1 = vector.load %arg2[%c0_1, %c0_2] : memref<128x128xbf16, #tpu.memory_space<vmem>>, vector<128x128xbf16>
    %cst = arith.constant dense<0.000000e+00> : vector<256x128xf32>
    %2 = tpu.matmul %0, %1, %cst {dimension_numbers = #tpu.dot_dimension_numbers<[1], [0], [0], [1], [0, 0, 1, 1], [], []>} : vector<256x128xbf16>, vector<128x128xbf16>, vector<256x128xf32> -> vector<256x128xf32>
    %c0_3 = arith.constant 0 : index
    %c0_4 = arith.constant 0 : index
    %3 = vector.load %arg3[%c0_3, %c0_4] : memref<1x128xf32, #tpu.memory_space<vmem>>, vector<1x128xf32>
    %4 = vector.broadcast %3 : vector<1x128xf32> to vector<256x128xf32>
    %5 = arith.addf %2, %4 : vector<256x128xf32>
    %c0_5 = arith.constant 0 : index
    %c0_6 = arith.constant 0 : index
    %6 = vector.load %arg4[%c0_5, %c0_6] : memref<128x128xf32, #tpu.memory_space<vmem>>, vector<128x128xf32>
    %cst_7 = arith.constant dense<0.000000e+00> : vector<256x128xf32>
    %7 = tpu.matmul %5, %6, %cst_7 {dimension_numbers = #tpu.dot_dimension_numbers<[1], [0], [0], [1], [0, 0, 1, 1], [], []>} : vector<256x128xf32>, vector<128x128xf32>, vector<256x128xf32> -> vector<256x128xf32>
    %c0_8 = arith.constant 0 : index
    %c0_9 = arith.constant 0 : index
    %8 = vector.load %arg5[%c0_8, %c0_9] : memref<1x128xf32, #tpu.memory_space<vmem>>, vector<1x128xf32>
    %9 = vector.broadcast %8 : vector<1x128xf32> to vector<256x128xf32>
    %10 = arith.addf %7, %9 : vector<256x128xf32>
    %11 = arith.truncf %5 : vector<256x128xf32> to vector<256x128xbf16>
    %c0_10 = arith.constant 0 : index
    %c0_11 = arith.constant 0 : index
    %12 = vector.load %arg6[%c0_10, %c0_11] : memref<256x128xbf16, #tpu.memory_space<vmem>>, vector<256x128xbf16>
    tpu.vector_store %arg6[%c0_10, %c0_11], %11 {strides = array<i32>} : memref<256x128xbf16, #tpu.memory_space<vmem>>, vector<256x128xbf16>,
    %13 = vector.extract_strided_slice %10 {offsets = [0, 0], sizes = [256, 1], strides = [1, 1]} : vector<256x128xf32> to vector<256x1xf32>
    %c0_12 = arith.constant 0 : index
    %c0_13 = arith.constant 0 : index
    %14 = vector.load %arg7[%c0_12, %c0_13] : memref<256x1xf32, #tpu.memory_space<vmem>>, vector<256x1xf32>
    tpu.vector_store %arg7[%c0_12, %c0_13], %13 {strides = array<i32>} : memref<256x1xf32, #tpu.memory_space<vmem>>, vector<256x1xf32>,
    %15 = vector.extract_strided_slice %10 {offsets = [0, 1], sizes = [256, 1], strides = [1, 1]} : vector<256x128xf32> to vector<256x1xf32>
    %c0_14 = arith.constant 0 : index
    %c0_15 = arith.constant 0 : index
    %16 = vector.load %arg8[%c0_14, %c0_15] : memref<256x1xf32, #tpu.memory_space<vmem>>, vector<256x1xf32>
    tpu.vector_store %arg8[%c0_14, %c0_15], %15 {strides = array<i32>} : memref<256x1xf32, #tpu.memory_space<vmem>>, vector<256x1xf32>,
    return
  }
  func.func @transform_0(%arg0: i32) -> (i32, i32) {
    %c0_i32 = arith.constant 0 : i32
    %c0_i32_0 = arith.constant 0 : i32
    return %arg0, %c0_i32 : i32, i32
  }
  func.func @transform_1(%arg0: i32) -> (i32, i32) {
    %c0_i32 = arith.constant 0 : i32
    %c0_i32_0 = arith.constant 0 : i32
    %c0_i32_1 = arith.constant 0 : i32
    return %c0_i32, %c0_i32_0 : i32, i32
  }
  func.func @transform_2(%arg0: i32) -> (i32, i32) {
    %c0_i32 = arith.constant 0 : i32
    %c0_i32_0 = arith.constant 0 : i32
    %c0_i32_1 = arith.constant 0 : i32
    return %c0_i32, %c0_i32_0 : i32, i32
  }
  func.func @transform_3(%arg0: i32) -> (i32, i32) {
    %c0_i32 = arith.constant 0 : i32
    %c0_i32_0 = arith.constant 0 : i32
    %c0_i32_1 = arith.constant 0 : i32
    return %c0_i32, %c0_i32_0 : i32, i32
  }
  func.func @transform_4(%arg0: i32) -> (i32, i32) {
    %c0_i32 = arith.constant 0 : i32
    %c0_i32_0 = arith.constant 0 : i32
    %c0_i32_1 = arith.constant 0 : i32
    return %c0_i32, %c0_i32_0 : i32, i32
  }
  func.func @transform_5(%arg0: i32) -> (i32, i32) {
    %c0_i32 = arith.constant 0 : i32
    %c0_i32_0 = arith.constant 0 : i32
    return %arg0, %c0_i32 : i32, i32
  }
  func.func @transform_6(%arg0: i32) -> (i32, i32) {
    %c0_i32 = arith.constant 0 : i32
    %c0_i32_0 = arith.constant 0 : i32
    return %arg0, %c0_i32 : i32, i32
  }
  func.func @transform_7(%arg0: i32) -> (i32, i32) {
    %c0_i32 = arith.constant 0 : i32
    %c0_i32_0 = arith.constant 0 : i32
    return %arg0, %c0_i32 : i32, i32
  }
}

module attributes {stable_mosaic.version = 11 : i64} {
  func.func @flash_attn_kernel(%arg0: i32, %arg1: i32, %arg2: memref<256x1xf32, #tpu.memory_space<vmem>>, %arg3: memref<1x256xf32, #tpu.memory_space<vmem>>, %arg4: memref<256x256xi8, #tpu.memory_space<vmem>>, %arg5: memref<256x128xbf16, #tpu.memory_space<vmem>>, %arg6: memref<256x128xf32, #tpu.memory_space<vmem>>, %arg7: memref<256x1xf32, #tpu.memory_space<vmem>>, %arg8: memref<256x1xf32, #tpu.memory_space<vmem>>, %arg9: memref<256x128xf32, #tpu.memory_space<vmem>>) attributes {dimension_semantics = [#tpu.dimension_semantics<parallel>, #tpu.dimension_semantics<arbitrary>], iteration_bounds = array<i64: 2, 2>, scalar_prefetch = 0 : i64, scratch_operands = 3 : i64, tpu.core_type = #tpu.core_type<tc>, window_params = [{transform_indices = @transform_0, window_bounds = array<i64: 256, 1>}, {transform_indices = @transform_1, window_bounds = array<i64: 1, 256>}, {transform_indices = @transform_2, window_bounds = array<i64: 256, 256>}, {transform_indices = @transform_3, window_bounds = array<i64: 256, 128>}, {transform_indices = @transform_4, window_bounds = array<i64: 256, 128>}]} {
    %c0_i32 = arith.constant 0 : i32
    %0 = arith.cmpi eq, %arg1, %c0_i32 : i32
    %1 = arith.extui %0 : i1 to i32
    %c0_i32_0 = arith.constant 0 : i32
    %2 = arith.cmpi ne, %1, %c0_i32_0 : i32
    scf.if %2 {
      %cst_25 = arith.constant 0xFF800000 : f32
      %43 = vector.broadcast %cst_25 : f32 to vector<256x1xf32>
      %c0_26 = arith.constant 0 : index
      %c0_27 = arith.constant 0 : index
      %44 = vector.load %arg7[%c0_26, %c0_27] : memref<256x1xf32, #tpu.memory_space<vmem>>, vector<256x1xf32>
      tpu.vector_store %arg7[%c0_26, %c0_27], %43 {strides = array<i32>} : memref<256x1xf32, #tpu.memory_space<vmem>>, vector<256x1xf32>,
      %cst_28 = arith.constant 0.000000e+00 : f32
      %45 = vector.broadcast %cst_28 : f32 to vector<256x1xf32>
      %c0_29 = arith.constant 0 : index
      %c0_30 = arith.constant 0 : index
      %46 = vector.load %arg8[%c0_29, %c0_30] : memref<256x1xf32, #tpu.memory_space<vmem>>, vector<256x1xf32>
      tpu.vector_store %arg8[%c0_29, %c0_30], %45 {strides = array<i32>} : memref<256x1xf32, #tpu.memory_space<vmem>>, vector<256x1xf32>,
      %cst_31 = arith.constant 0.000000e+00 : f32
      %47 = vector.broadcast %cst_31 : f32 to vector<256x128xf32>
      %c0_32 = arith.constant 0 : index
      %c0_33 = arith.constant 0 : index
      %48 = vector.load %arg9[%c0_32, %c0_33] : memref<256x128xf32, #tpu.memory_space<vmem>>, vector<256x128xf32>
      tpu.vector_store %arg9[%c0_32, %c0_33], %47 {strides = array<i32>} : memref<256x128xf32, #tpu.memory_space<vmem>>, vector<256x128xf32>,
    } else {
    }
    %c0 = arith.constant 0 : index
    %c0_1 = arith.constant 0 : index
    %3 = vector.load %arg2[%c0, %c0_1] : memref<256x1xf32, #tpu.memory_space<vmem>>, vector<256x1xf32>
    %c0_2 = arith.constant 0 : index
    %c0_3 = arith.constant 0 : index
    %4 = vector.load %arg3[%c0_2, %c0_3] : memref<1x256xf32, #tpu.memory_space<vmem>>, vector<1x256xf32>
    %5 = vector.broadcast %3 : vector<256x1xf32> to vector<256x256xf32>
    %6 = vector.broadcast %4 : vector<1x256xf32> to vector<256x256xf32>
    %7 = arith.addf %5, %6 : vector<256x256xf32>
    %cst = arith.constant 0.00999999977 : f32
    %8 = vector.broadcast %cst : f32 to vector<256x256xf32>
    %9 = arith.mulf %8, %7 : vector<256x256xf32>
    %10 = arith.maximumf %7, %9 : vector<256x256xf32>
    %c0_4 = arith.constant 0 : index
    %c0_5 = arith.constant 0 : index
    %11 = vector.load %arg4[%c0_4, %c0_5] : memref<256x256xi8, #tpu.memory_space<vmem>>, vector<256x256xi8>
    %c0_i8 = arith.constant 0 : i8
    %12 = vector.broadcast %c0_i8 : i8 to vector<256x256xi8>
    %13 = arith.cmpi ne, %11, %12 : vector<256x256xi8>
    %cst_6 = arith.constant -9.000000e+15 : f32
    %14 = vector.broadcast %cst_6 : f32 to vector<256x256xf32>
    %15 = arith.select %13, %10, %14 : vector<256x256xi1>, vector<256x256xf32>
    %c0_7 = arith.constant 0 : index
    %c0_8 = arith.constant 0 : index
    %16 = vector.load %arg7[%c0_7, %c0_8] : memref<256x1xf32, #tpu.memory_space<vmem>>, vector<256x1xf32>
    %cst_9 = arith.constant dense<0xFF800000> : vector<256xf32>
    %17 = vector.multi_reduction <maximumf>, %15, %cst_9 [1] : vector<256x256xf32> to vector<256xf32>
    %18 = vector.shape_cast %17 : vector<256xf32> to vector<256x1xf32>
    %19 = arith.maximumf %16, %18 : vector<256x1xf32>
    %20 = arith.subf %16, %19 : vector<256x1xf32>
    %21 = math.exp %20 : vector<256x1xf32>
    %22 = vector.broadcast %19 : vector<256x1xf32> to vector<256x256xf32>
    %23 = arith.subf %15, %22 : vector<256x256xf32>
    %24 = math.exp %23 : vector<256x256xf32>
    %25 = arith.truncf %24 : vector<256x256xf32> to vector<256x256xbf16>
    %cst_10 = arith.constant dense<0.000000e+00> : vector<256xf32>
    %26 = vector.multi_reduction <add>, %24, %cst_10 [1] : vector<256x256xf32> to vector<256xf32>
    %27 = vector.shape_cast %26 : vector<256xf32> to vector<256x1xf32>
    %c0_11 = arith.constant 0 : index
    %c0_12 = arith.constant 0 : index
    %28 = vector.load %arg8[%c0_11, %c0_12] : memref<256x1xf32, #tpu.memory_space<vmem>>, vector<256x1xf32>
    %29 = arith.mulf %21, %28 : vector<256x1xf32>
    %30 = arith.addf %29, %27 : vector<256x1xf32>
    %c0_13 = arith.constant 0 : index
    %c0_14 = arith.constant 0 : index
    %31 = vector.load %arg8[%c0_13, %c0_14] : memref<256x1xf32, #tpu.memory_space<vmem>>, vector<256x1xf32>
    tpu.vector_store %arg8[%c0_13, %c0_14], %30 {strides = array<i32>} : memref<256x1xf32, #tpu.memory_space<vmem>>, vector<256x1xf32>,
    %c0_15 = arith.constant 0 : index
    %c0_16 = arith.constant 0 : index
    %32 = vector.load %arg9[%c0_15, %c0_16] : memref<256x128xf32, #tpu.memory_space<vmem>>, vector<256x128xf32>
    %33 = vector.broadcast %21 : vector<256x1xf32> to vector<256x128xf32>
    %34 = arith.mulf %33, %32 : vector<256x128xf32>
    %c0_17 = arith.constant 0 : index
    %c0_18 = arith.constant 0 : index
    %35 = vector.load %arg5[%c0_17, %c0_18] : memref<256x128xbf16, #tpu.memory_space<vmem>>, vector<256x128xbf16>
    %cst_19 = arith.constant dense<0.000000e+00> : vector<256x128xf32>
    %36 = tpu.matmul %25, %35, %cst_19 {dimension_numbers = #tpu.dot_dimension_numbers<[1], [0], [0], [1], [0, 0, 1, 1], [], []>} : vector<256x256xbf16>, vector<256x128xbf16>, vector<256x128xf32> -> vector<256x128xf32>
    %37 = arith.addf %34, %36 : vector<256x128xf32>
    %c0_20 = arith.constant 0 : index
    %c0_21 = arith.constant 0 : index
    %38 = vector.load %arg9[%c0_20, %c0_21] : memref<256x128xf32, #tpu.memory_space<vmem>>, vector<256x128xf32>
    tpu.vector_store %arg9[%c0_20, %c0_21], %37 {strides = array<i32>} : memref<256x128xf32, #tpu.memory_space<vmem>>, vector<256x128xf32>,
    %c0_22 = arith.constant 0 : index
    %c0_23 = arith.constant 0 : index
    %39 = vector.load %arg7[%c0_22, %c0_23] : memref<256x1xf32, #tpu.memory_space<vmem>>, vector<256x1xf32>
    tpu.vector_store %arg7[%c0_22, %c0_23], %19 {strides = array<i32>} : memref<256x1xf32, #tpu.memory_space<vmem>>, vector<256x1xf32>,
    %c1_i32 = arith.constant 1 : i32
    %40 = arith.cmpi eq, %arg1, %c1_i32 : i32
    %41 = arith.extui %40 : i1 to i32
    %c0_i32_24 = arith.constant 0 : i32
    %42 = arith.cmpi ne, %41, %c0_i32_24 : i32
    scf.if %42 {
      %c0_25 = arith.constant 0 : index
      %c0_26 = arith.constant 0 : index
      %43 = vector.load %arg9[%c0_25, %c0_26] : memref<256x128xf32, #tpu.memory_space<vmem>>, vector<256x128xf32>
      %c0_27 = arith.constant 0 : index
      %c0_28 = arith.constant 0 : index
      %44 = vector.load %arg8[%c0_27, %c0_28] : memref<256x1xf32, #tpu.memory_space<vmem>>, vector<256x1xf32>
      %45 = tpu.reciprocal %44 {approx = true} : vector<256x1xf32> -> vector<256x1xf32>
      %46 = vector.broadcast %45 : vector<256x1xf32> to vector<256x128xf32>
      %47 = arith.mulf %43, %46 : vector<256x128xf32>
      %c0_29 = arith.constant 0 : index
      %c0_30 = arith.constant 0 : index
      %48 = vector.load %arg6[%c0_29, %c0_30] : memref<256x128xf32, #tpu.memory_space<vmem>>, vector<256x128xf32>
      tpu.vector_store %arg6[%c0_29, %c0_30], %47 {strides = array<i32>} : memref<256x128xf32, #tpu.memory_space<vmem>>, vector<256x128xf32>,
    } else {
    }
    return
  }
  func.func @transform_0(%arg0: i32, %arg1: i32) -> (i32, i32) {
    %c0_i32 = arith.constant 0 : i32
    %c0_i32_0 = arith.constant 0 : i32
    return %arg0, %c0_i32 : i32, i32
  }
  func.func @transform_1(%arg0: i32, %arg1: i32) -> (i32, i32) {
    %c0_i32 = arith.constant 0 : i32
    %c0_i32_0 = arith.constant 0 : i32
    return %c0_i32, %arg1 : i32, i32
  }
  func.func @transform_2(%arg0: i32, %arg1: i32) -> (i32, i32) {
    %c0_i32 = arith.constant 0 : i32
    return %arg0, %arg1 : i32, i32
  }
  func.func @transform_3(%arg0: i32, %arg1: i32) -> (i32, i32) {
    %c0_i32 = arith.constant 0 : i32
    %c0_i32_0 = arith.constant 0 : i32
    return %arg1, %c0_i32 : i32, i32
  }
  func.func @transform_4(%arg0: i32, %arg1: i32) -> (i32, i32) {
    %c0_i32 = arith.constant 0 : i32
    %c0_i32_0 = arith.constant 0 : i32
    return %arg0, %c0_i32 : i32, i32
  }
}

</mosaic_0001>

<llo_original>
// kernel: gat_layer.2
$region0: #{gat_layer.2}
  #allocation0 [shape = 'u32[]', space=smem, size = 0x4, offset = 0x4, fixed_abs, tag = 'smem constant byte address 0x4 - core index']
  #allocation1 [shape = 'u32[72,128]{1,0:T(1,128)}', space=vmem, size = 0x9000, scoped, tag = 'internal scratch']
  %s0 = inlined_call_operand.vmem [shape: bf16[512,128], index: 0, kind: input, shape index: {}]
  %s1 = inlined_call_operand.vmem [shape: bf16[128,128], index: 1, kind: input, shape index: {}]
  %s2 = inlined_call_operand.vmem [shape: f32[1,128], index: 2, kind: input, shape index: {}]
  %s3 = inlined_call_operand.vmem [shape: f32[128,128], index: 3, kind: input, shape index: {}]
  %s4 = inlined_call_operand.vmem [shape: f32[1,128], index: 4, kind: input, shape index: {}]
  %s5 = inlined_call_operand.vmem [shape: bf16[512,128], index: 5, kind: output, shape index: {0}]
  %s6 = inlined_call_operand.vmem [shape: f32[512,1], index: 6, kind: output, shape index: {1}]
  %s7 = inlined_call_operand.vmem [shape: f32[512,1], index: 7, kind: output, shape index: {2}]
  %8 = xla_tuple %s5, %s6, %s7
  %s9 = sld [smem:[#allocation0]]
  $region69: #{gat_layer.2} parent=0
    _
  %s11 = ssub.s32 1, %s9
  %s12 = scalar_select 0, %s11, %s9
  loop: start=0, step=1, limit=4
  $region2: #{gat_layer.2} parent=0 // loop_pre_header
    _
  $region3: #{gat_layer.2} parent=0 // loop_header
    %s14 = sphi 0, %s18
    %p15 = scmp.ge.s32.totalorder %s14, 4
    %s24 = sphi 0, %s26
    %s27 = sphi 0, %s24
    %s28 = sphi 0, %s27
    %s44 = sphi 0, %s28
    %s48 = sphi 0, %s48
    %s50 = sphi 0, %s48
    %s51 = sphi 0, %s50
    %s65 = sphi 0, %s51
    %s69 = sphi 0, %s69
    %s71 = sphi 0, %s69
    %s72 = sphi 0, %s71
    %s86 = sphi 0, %s72
    %s90 = sphi 0, %s90
    %s92 = sphi 0, %s90
    %s93 = sphi 0, %s92
    %s107 = sphi 0, %s93
    %s111 = sphi 0, %s111
    %s113 = sphi 0, %s111
    %s114 = sphi 0, %s113
    %s128 = sphi 0, %s114
    %s134 = sphi 0, %s136
    %s137 = sphi 0, %s134
    %s138 = sphi 0, %s137
    %s154 = sphi 0, %s138
    %s160 = sphi 0, %s162
    %s163 = sphi 0, %s160
    %s164 = sphi 0, %s163
    %s180 = sphi 0, %s164
    %s186 = sphi 0, %s188
    %s189 = sphi 0, %s186
    %s190 = sphi 0, %s189
    %s206 = sphi 0, %s190
  $region4: #{gat_layer.2} parent=0 // loop_header_branch
    %17 = sbr.rel (%p15) target = $region8
  $region5: #{gat_layer.2} parent=0 // loop_body
    %s19 = ssub.s32 %s14, 1
    %s20 = ssub.s32 %s14, 2
    %s21 = sadd.s32 %s14, 1
    %s22 = ssub.s32 %s14, %s21
    %p23 = scmp.eq.s32.totalorder %s22, 0
    %s25 = sadd.s32 %s24, 1
    %s26 = scalar_select %p23, %s24, %s25
    %p29 = pneg %p23
    %p30 = scmp.eq.s32.totalorder %s14, 1
    %p31 = por %p29, %p30
    %p32 = scmp.ne.s32.totalorder %s24, %s27
    %p33 = scmp.eq.s32.totalorder %s14, 0
    %p34 = por %p32, %p33
    %p35 = scmp.ne.s32.totalorder %s24, %s27
    %p36 = scmp.eq.s32.totalorder %s19, 1
    %p37 = por %p35, %p36
    %p38 = scmp.ne.s32.totalorder %s27, %s28
    %p39 = scmp.eq.s32.totalorder %s19, 0
    %p40 = por %p38, %p39
    %p41 = scmp.ne.s32.totalorder %s27, %s28
    %p42 = scmp.eq.s32.totalorder %s20, 1
    %p43 = por %p41, %p42
    %p45 = scmp.ne.s32.totalorder %s28, %s44
    %p46 = scmp.eq.s32.totalorder %s20, 0
    %p47 = por %p45, %p46
    %s49 = sadd.s32 %s48, 1
    %p52 = scmp.eq.s32.totalorder %s14, 1
    %p53 = scmp.ne.s32.totalorder %s48, %s50
    %p54 = scmp.eq.s32.totalorder %s14, 0
    %p55 = por %p53, %p54
    %p56 = scmp.ne.s32.totalorder %s48, %s50
    %p57 = scmp.eq.s32.totalorder %s19, 1
    %p58 = por %p56, %p57
    %p59 = scmp.ne.s32.totalorder %s50, %s51
    %p60 = scmp.eq.s32.totalorder %s19, 0
    %p61 = por %p59, %p60
    %p62 = scmp.ne.s32.totalorder %s50, %s51
    %p63 = scmp.eq.s32.totalorder %s20, 1
    %p64 = por %p62, %p63
    %p66 = scmp.ne.s32.totalorder %s51, %s65
    %p67 = scmp.eq.s32.totalorder %s20, 0
    %p68 = por %p66, %p67
    %s70 = sadd.s32 %s69, 1
    %p73 = scmp.eq.s32.totalorder %s14, 1
    %p74 = scmp.ne.s32.totalorder %s69, %s71
    %p75 = scmp.eq.s32.totalorder %s14, 0
    %p76 = por %p74, %p75
    %p77 = scmp.ne.s32.totalorder %s69, %s71
    %p78 = scmp.eq.s32.totalorder %s19, 1
    %p79 = por %p77, %p78
    %p80 = scmp.ne.s32.totalorder %s71, %s72
    %p81 = scmp.eq.s32.totalorder %s19, 0
    %p82 = por %p80, %p81
    %p83 = scmp.ne.s32.totalorder %s71, %s72
    %p84 = scmp.eq.s32.totalorder %s20, 1
    %p85 = por %p83, %p84
    %p87 = scmp.ne.s32.totalorder %s72, %s86
    %p88 = scmp.eq.s32.totalorder %s20, 0
    %p89 = por %p87, %p88
    %s91 = sadd.s32 %s90, 1
    %p94 = scmp.eq.s32.totalorder %s14, 1
    %p95 = scmp.ne.s32.totalorder %s90, %s92
    %p96 = scmp.eq.s32.totalorder %s14, 0
    %p97 = por %p95, %p96
    %p98 = scmp.ne.s32.totalorder %s90, %s92
    %p99 = scmp.eq.s32.totalorder %s19, 1
    %p100 = por %p98, %p99
    %p101 = scmp.ne.s32.totalorder %s92, %s93
    %p102 = scmp.eq.s32.totalorder %s19, 0
    %p103 = por %p101, %p102
    %p104 = scmp.ne.s32.totalorder %s92, %s93
    %p105 = scmp.eq.s32.totalorder %s20, 1
    %p106 = por %p104, %p105
    %p108 = scmp.ne.s32.totalorder %s93, %s107
    %p109 = scmp.eq.s32.totalorder %s20, 0
    %p110 = por %p108, %p109
    %s112 = sadd.s32 %s111, 1
    %p115 = scmp.eq.s32.totalorder %s14, 1
    %p116 = scmp.ne.s32.totalorder %s111, %s113
    %p117 = scmp.eq.s32.totalorder %s14, 0
    %p118 = por %p116, %p117
    %p119 = scmp.ne.s32.totalorder %s111, %s113
    %p120 = scmp.eq.s32.totalorder %s19, 1
    %p121 = por %p119, %p120
    %p122 = scmp.ne.s32.totalorder %s113, %s114
    %p123 = scmp.eq.s32.totalorder %s19, 0
    %p124 = por %p122, %p123
    %p125 = scmp.ne.s32.totalorder %s113, %s114
    %p126 = scmp.eq.s32.totalorder %s20, 1
    %p127 = por %p125, %p126
    %p129 = scmp.ne.s32.totalorder %s114, %s128
    %p130 = scmp.eq.s32.totalorder %s20, 0
    %p131 = por %p129, %p130
    %s132 = ssub.s32 %s14, %s21
    %p133 = scmp.eq.s32.totalorder %s132, 0
    %s135 = sadd.s32 %s134, 1
    %s136 = scalar_select %p133, %s134, %s135
    %p139 = pneg %p133
    %p140 = scmp.eq.s32.totalorder %s14, 1
    %p141 = por %p139, %p140
    %p142 = scmp.ne.s32.totalorder %s134, %s137
    %p143 = scmp.eq.s32.totalorder %s14, 0
    %p144 = por %p142, %p143
    %p145 = scmp.ne.s32.totalorder %s134, %s137
    %p146 = scmp.eq.s32.totalorder %s19, 1
    %p147 = por %p145, %p146
    %p148 = scmp.ne.s32.totalorder %s137, %s138
    %p149 = scmp.eq.s32.totalorder %s19, 0
    %p150 = por %p148, %p149
    %p151 = scmp.ne.s32.totalorder %s137, %s138
    %p152 = scmp.eq.s32.totalorder %s20, 1
    %p153 = por %p151, %p152
    %p155 = scmp.ne.s32.totalorder %s138, %s154
    %p156 = scmp.eq.s32.totalorder %s20, 0
    %p157 = por %p155, %p156
    %s158 = ssub.s32 %s14, %s21
    %p159 = scmp.eq.s32.totalorder %s158, 0
    %s161 = sadd.s32 %s160, 1
    %s162 = scalar_select %p159, %s160, %s161
    %p165 = pneg %p159
    %p166 = scmp.eq.s32.totalorder %s14, 1
    %p167 = por %p165, %p166
    %p168 = scmp.ne.s32.totalorder %s160, %s163
    %p169 = scmp.eq.s32.totalorder %s14, 0
    %p170 = por %p168, %p169
    %p171 = scmp.ne.s32.totalorder %s160, %s163
    %p172 = scmp.eq.s32.totalorder %s19, 1
    %p173 = por %p171, %p172
    %p174 = scmp.ne.s32.totalorder %s163, %s164
    %p175 = scmp.eq.s32.totalorder %s19, 0
    %p176 = por %p174, %p175
    %p177 = scmp.ne.s32.totalorder %s163, %s164
    %p178 = scmp.eq.s32.totalorder %s20, 1
    %p179 = por %p177, %p178
    %p181 = scmp.ne.s32.totalorder %s164, %s180
    %p182 = scmp.eq.s32.totalorder %s20, 0
    %p183 = por %p181, %p182
    %s184 = ssub.s32 %s14, %s21
    %p185 = scmp.eq.s32.totalorder %s184, 0
    %s187 = sadd.s32 %s186, 1
    %s188 = scalar_select %p185, %s186, %s187
    %p191 = pneg %p185
    %p192 = scmp.eq.s32.totalorder %s14, 1
    %p193 = por %p191, %p192
    %p194 = scmp.ne.s32.totalorder %s186, %s189
    %p195 = scmp.eq.s32.totalorder %s14, 0
    %p196 = por %p194, %p195
    %p197 = scmp.ne.s32.totalorder %s186, %s189
    %p198 = scmp.eq.s32.totalorder %s19, 1
    %p199 = por %p197, %p198
    %p200 = scmp.ne.s32.totalorder %s189, %s190
    %p201 = scmp.eq.s32.totalorder %s19, 0
    %p202 = por %p200, %p201
    %p203 = scmp.ne.s32.totalorder %s189, %s190
    %p204 = scmp.eq.s32.totalorder %s20, 1
    %p205 = por %p203, %p204
    %p207 = scmp.ne.s32.totalorder %s190, %s206
    %p208 = scmp.eq.s32.totalorder %s20, 0
    %p209 = por %p207, %p208
    %p210 = scmp.le.s32.totalorder 1, %s14
    %p211 = scmp.lt.s32.totalorder %s14, 3
    %p212 = pnand %p210, %p211
    %p213 = pneg %p212
    // Predicated region
    $region9: #{gat_layer.2} parent=5 // pred_check
      _
    $region10: #{gat_layer.2} parent=5 // pred_check_branch
      %215 = sbr.rel (%p212) target = $region12
    $region11: #{gat_layer.2} parent=5 // pred_region
      %s216 = ssub.s32 %s14, 1
      // Predicated region
      $region13: #{gat_layer.2} parent=11 // pred_check
        %p217 = pneg %p61
      $region14: #{gat_layer.2} parent=11 // pred_check_branch
        %219 = sbr.rel (%p217) target = $region16
      $region15: #{gat_layer.2} parent=11 // pred_region
        _
      $region16: #{gat_layer.2} parent=11 // pred_fallthru
        _
      // Predicated region
      $region17: #{gat_layer.2} parent=11 // pred_check
        %p220 = pneg %p82
      $region18: #{gat_layer.2} parent=11 // pred_check_branch
        %222 = sbr.rel (%p220) target = $region20
      $region19: #{gat_layer.2} parent=11 // pred_region
        _
      $region20: #{gat_layer.2} parent=11 // pred_fallthru
        _
      // Predicated region
      $region21: #{gat_layer.2} parent=11 // pred_check
        %p223 = pneg %p103
      $region22: #{gat_layer.2} parent=11 // pred_check_branch
        %225 = sbr.rel (%p223) target = $region24
      $region23: #{gat_layer.2} parent=11 // pred_region
        _
      $region24: #{gat_layer.2} parent=11 // pred_fallthru
        _
      // Predicated region
      $region25: #{gat_layer.2} parent=11 // pred_check
        %p226 = pneg %p124
      $region26: #{gat_layer.2} parent=11 // pred_check_branch
        %228 = sbr.rel (%p226) target = $region28
      $region27: #{gat_layer.2} parent=11 // pred_region
        _
      $region28: #{gat_layer.2} parent=11 // pred_fallthru
        _
    $region12: #{gat_layer.2} parent=5 // pred_fallthru
      _
    %p229 = scmp.lt.s32.totalorder %s14, 2
    // Predicated region
    $region29: #{gat_layer.2} parent=5 // pred_check
      %p230 = pneg %p229
    $region30: #{gat_layer.2} parent=5 // pred_check_branch
      %232 = sbr.rel (%p230) target = $region32
    $region31: #{gat_layer.2} parent=5 // pred_region
      // Predicated region
      $region33: #{gat_layer.2} parent=31 // pred_check
        %p233 = pneg %p34
      $region34: #{gat_layer.2} parent=31 // pred_check_branch
        %235 = sbr.rel (%p233) target = $region36
      $region35: #{gat_layer.2} parent=31 // pred_region
        %s236 = smul.u32 32, %s14
        %p237 = scmp.lt.s32.totalorder %s236, 63
        %s238 = scalar_select %p237, %s236, 63
        %s239 = smul.addr %s238, 4
        %s240 = scalar_lea.vmem %s0, %s239
        %s241 = smul.u32 32, %s14
      $region36: #{gat_layer.2} parent=31 // pred_fallthru
        _
    $region32: #{gat_layer.2} parent=5 // pred_fallthru
      _
    %p242 = scmp.le.s32.totalorder 1, %s14
    %p243 = scmp.lt.s32.totalorder %s14, 3
    %p244 = pnand %p242, %p243
    %p245 = pneg %p244
    // Predicated region
    $region37: #{gat_layer.2} parent=5 // pred_check
      _
    $region38: #{gat_layer.2} parent=5 // pred_check_branch
      %247 = sbr.rel (%p244) target = $region40
    $region39: #{gat_layer.2} parent=5 // pred_region
      %s248 = ssub.s32 %s14, 1
      %s249 = smul.u32 32, %s19
      %p250 = scmp.lt.s32.totalorder %s249, 63
      %s251 = scalar_select %p250, %s249, 63
      %s252 = smul.addr %s251, 4
      %s253 = scalar_lea.vmem %s0, %s252
      %p254 = pneg %p40
      %p255 = pneg %p37
      %p256 = pneg %p61
      %p257 = pneg %p58
      %p258 = pneg %p82
      %p259 = pneg %p79
      %p260 = pneg %p103
      %p261 = pneg %p100
      %p262 = pneg %p124
      %p263 = pneg %p121
      %p264 = pneg %p150
      %p265 = pneg %p147
      %s266 = smul.u32 32, %s19
      %p267 = scmp.lt.s32.totalorder %s266, 63
      %s268 = scalar_select %p267, %s266, 63
      %s269 = smul.addr %s268, 4
      %s270 = scalar_lea.vmem %s5, %s269
      %p271 = pneg %p176
      %p272 = pneg %p173
      %s273 = smul.u32 32, %s19
      %p274 = scmp.lt.s32.totalorder %s273, 63
      %s275 = scalar_select %p274, %s273, 63
      %s276 = smul.addr %s275, 8
      %s277 = scalar_lea.vmem %s6, %s276
      %p278 = pneg %p202
      %p279 = pneg %p199
      %s280 = smul.u32 32, %s19
      %p281 = scmp.lt.s32.totalorder %s280, 63
      %s282 = scalar_select %p281, %s280, 63
      %s283 = smul.addr %s282, 8
      %s284 = scalar_lea.vmem %s7, %s283
      %s285 = smul.u32 32, %s19
      %p286 = scmp.lt.s32.totalorder %s285, 63
      %s287 = scalar_select %p286, %s285, 63
      %s288 = smul.addr %s287, 4
      %s289 = scalar_lea.vmem %s0, %s288
      %s290 = smul.u32 32, %s19
      %s291 = smul.u32 32, %s19
      %p292 = scmp.lt.s32.totalorder %s291, 63
      %s293 = scalar_select %p292, %s291, 63
      %s294 = smul.addr %s293, 4
      %s295 = scalar_lea.vmem %s5, %s294
      %s296 = smul.u32 32, %s19
      %s297 = smul.u32 32, %s19
      %p298 = scmp.lt.s32.totalorder %s297, 63
      %s299 = scalar_select %p298, %s297, 63
      %s300 = smul.addr %s299, 8
      %s301 = scalar_lea.vmem %s6, %s300
      %s302 = smul.u32 32, %s19
      %s303 = smul.u32 32, %s19
      %p304 = scmp.lt.s32.totalorder %s303, 63
      %s305 = scalar_select %p304, %s303, 63
      %s306 = smul.addr %s305, 8
      %s307 = scalar_lea.vmem %s7, %s306
      %s308 = smul.u32 32, %s19
      %v309 = vld [vmem:[%s289] sm:$0xf]
      %v310 = vld [vmem:[%s289 + $0x4] sm:$0xf]
      %v311 = vld [vmem:[%s289 + $0x8] sm:$0xf]
      %v312 = vld [vmem:[%s289 + $0xc] sm:$0xf]
      %v313 = vld [vmem:[%s289 + $0x10] sm:$0xf]
      %v314 = vld [vmem:[%s289 + $0x14] sm:$0xf]
      %v315 = vld [vmem:[%s289 + $0x18] sm:$0xf]
      %v316 = vld [vmem:[%s289 + $0x1c] sm:$0xf]
      %v317 = vld [vmem:[%s289 + $0x20] sm:$0xf]
      %v318 = vld [vmem:[%s289 + $0x24] sm:$0xf]
      %v319 = vld [vmem:[%s289 + $0x28] sm:$0xf]
      %v320 = vld [vmem:[%s289 + $0x2c] sm:$0xf]
      %v321 = vld [vmem:[%s289 + $0x30] sm:$0xf]
      %v322 = vld [vmem:[%s289 + $0x34] sm:$0xf]
      %v323 = vld [vmem:[%s289 + $0x38] sm:$0xf]
      %v324 = vld [vmem:[%s289 + $0x3c] sm:$0xf]
      %v325 = vld [vmem:[%s289 + $0x40] sm:$0xf]
      %v326 = vld [vmem:[%s289 + $0x44] sm:$0xf]
      %v327 = vld [vmem:[%s289 + $0x48] sm:$0xf]
      %v328 = vld [vmem:[%s289 + $0x4c] sm:$0xf]
      %v329 = vld [vmem:[%s289 + $0x50] sm:$0xf]
      %v330 = vld [vmem:[%s289 + $0x54] sm:$0xf]
      %v331 = vld [vmem:[%s289 + $0x58] sm:$0xf]
      %v332 = vld [vmem:[%s289 + $0x5c] sm:$0xf]
      %v333 = vld [vmem:[%s289 + $0x60] sm:$0xf]
      %v334 = vld [vmem:[%s289 + $0x64] sm:$0xf]
      %v335 = vld [vmem:[%s289 + $0x68] sm:$0xf]
      %v336 = vld [vmem:[%s289 + $0x6c] sm:$0xf]
      %v337 = vld [vmem:[%s289 + $0x70] sm:$0xf]
      %v338 = vld [vmem:[%s289 + $0x74] sm:$0xf]
      %v339 = vld [vmem:[%s289 + $0x78] sm:$0xf]
      %v340 = vld [vmem:[%s289 + $0x7c] sm:$0xf]
      %v341 = vld [vmem:[%s1] sm:$0xf]
      %v342 = vld [vmem:[%s1 + $0x4] sm:$0xf]
      %v343 = vld [vmem:[%s1 + $0x8] sm:$0xf]
      %v344 = vld [vmem:[%s1 + $0xc] sm:$0xf]
      %v345 = vld [vmem:[%s1 + $0x10] sm:$0xf]
      %v346 = vld [vmem:[%s1 + $0x14] sm:$0xf]
      %v347 = vld [vmem:[%s1 + $0x18] sm:$0xf]
      %v348 = vld [vmem:[%s1 + $0x1c] sm:$0xf]
      %v349 = vld [vmem:[%s1 + $0x20] sm:$0xf]
      %v350 = vld [vmem:[%s1 + $0x24] sm:$0xf]
      %v351 = vld [vmem:[%s1 + $0x28] sm:$0xf]
      %v352 = vld [vmem:[%s1 + $0x2c] sm:$0xf]
      %v353 = vld [vmem:[%s1 + $0x30] sm:$0xf]
      %v354 = vld [vmem:[%s1 + $0x34] sm:$0xf]
      %v355 = vld [vmem:[%s1 + $0x38] sm:$0xf]
      %v356 = vld [vmem:[%s1 + $0x3c] sm:$0xf]
      %v357 = vld [vmem:[%s2] sm:$0x1]
      %v359 = vperm.slane %v357, 0
      %v393 = vunpack.c.l.b16 %v309
      %v394 = vunpack.c.l.b16 %v310
      %v395 = vunpack.c.l.b16 %v311
      %v396 = vunpack.c.l.b16 %v312
      %v397 = vunpack.c.l.b16 %v313
      %v398 = vunpack.c.l.b16 %v314
      %v399 = vunpack.c.l.b16 %v315
      %v400 = vunpack.c.l.b16 %v316
      %v401 = vunpack.c.l.b16 %v317
      %v402 = vunpack.c.l.b16 %v318
      %v403 = vunpack.c.l.b16 %v319
      %v404 = vunpack.c.l.b16 %v320
      %v405 = vunpack.c.l.b16 %v321
      %v406 = vunpack.c.l.b16 %v322
      %v407 = vunpack.c.l.b16 %v323
      %v408 = vunpack.c.l.b16 %v324
      %v409 = vunpack.c.l.b16 %v325
      %v410 = vunpack.c.l.b16 %v326
      %v411 = vunpack.c.l.b16 %v327
      %v412 = vunpack.c.l.b16 %v328
      %v413 = vunpack.c.l.b16 %v329
      %v414 = vunpack.c.l.b16 %v330
      %v415 = vunpack.c.l.b16 %v331
      %v416 = vunpack.c.l.b16 %v332
      %v417 = vunpack.c.l.b16 %v333
      %v418 = vunpack.c.l.b16 %v334
      %v419 = vunpack.c.l.b16 %v335
      %v420 = vunpack.c.l.b16 %v336
      %v421 = vunpack.c.l.b16 %v337
      %v422 = vunpack.c.l.b16 %v338
      %v423 = vunpack.c.l.b16 %v339
      %v424 = vunpack.c.l.b16 %v340
      %v425 = vpack.c.b16 %v394, %v393
      %v426 = vpack.c.b16 %v396, %v395
      %v427 = vpack.c.b16 %v398, %v397
      %v428 = vpack.c.b16 %v400, %v399
      %v429 = vpack.c.b16 %v402, %v401
      %v430 = vpack.c.b16 %v404, %v403
      %v431 = vpack.c.b16 %v406, %v405
      %v432 = vpack.c.b16 %v408, %v407
      %v433 = vpack.c.b16 %v410, %v409
      %v434 = vpack.c.b16 %v412, %v411
      %v435 = vpack.c.b16 %v414, %v413
      %v436 = vpack.c.b16 %v416, %v415
      %v437 = vpack.c.b16 %v418, %v417
      %v438 = vpack.c.b16 %v420, %v419
      %v439 = vpack.c.b16 %v422, %v421
      %v440 = vpack.c.b16 %v424, %v423
      %v473 = vunpack.c.l.b16 %v341
      %v474 = vunpack.c.l.b16 %v342
      %v475 = vunpack.c.l.b16 %v343
      %v476 = vunpack.c.l.b16 %v344
      %v477 = vunpack.c.l.b16 %v345
      %v478 = vunpack.c.l.b16 %v346
      %v479 = vunpack.c.l.b16 %v347
      %v480 = vunpack.c.l.b16 %v348
      %v481 = vunpack.c.l.b16 %v349
      %v482 = vunpack.c.l.b16 %v350
      %v483 = vunpack.c.l.b16 %v351
      %v484 = vunpack.c.l.b16 %v352
      %v485 = vunpack.c.l.b16 %v353
      %v486 = vunpack.c.l.b16 %v354
      %v487 = vunpack.c.l.b16 %v355
      %v488 = vunpack.c.l.b16 %v356
      %v489 = vpack.c.b16 %v474, %v473
      %v490 = vpack.c.b16 %v476, %v475
      %v491 = vpack.c.b16 %v478, %v477
      %v492 = vpack.c.b16 %v480, %v479
      %v493 = vpack.c.b16 %v482, %v481
      %v494 = vpack.c.b16 %v484, %v483
      %v495 = vpack.c.b16 %v486, %v485
      %v496 = vpack.c.b16 %v488, %v487
      %505 = vmatpush.bf16.msra.mxu0 %v496
      %506 = vmatpush.bf16.msra.mxu0 %v495
      %507 = vmatpush.bf16.msra.mxu0 %v494
      %508 = vmatpush.bf16.msra.mxu0 %v493
      %509 = vmatpush.bf16.msra.mxu0 %v492
      %510 = vmatpush.bf16.msra.mxu0 %v491
      %511 = vmatpush.bf16.msra.mxu0 %v490
      %512 = vmatpush.bf16.msra.mxu0 %v489
      %513 = vmatmul.bf16.gmra.mxu0 %v425
      %v514 = vpop.f32.mrf.mxu0
      %v515 = vadd.f32 %v359, %v514
      %v516 = vpop.f32.mrf.mxu0
      %v517 = vadd.f32 %v359, %v516
      %518 = vmatmul.bf16.gmra.mxu0 %v426
      %v519 = vpop.f32.mrf.mxu0
      %v520 = vadd.f32 %v359, %v519
      %v521 = vpop.f32.mrf.mxu0
      %v522 = vadd.f32 %v359, %v521
      %523 = vmatmul.bf16.gmra.mxu0 %v427
      %v524 = vpop.f32.mrf.mxu0
      %v525 = vadd.f32 %v359, %v524
      %v526 = vpop.f32.mrf.mxu0
      %v527 = vadd.f32 %v359, %v526
      %528 = vmatmul.bf16.gmra.mxu0 %v428
      %v529 = vpop.f32.mrf.mxu0
      %v530 = vadd.f32 %v359, %v529
      %v531 = vpop.f32.mrf.mxu0
      %v532 = vadd.f32 %v359, %v531
      %533 = vmatmul.bf16.gmra.mxu0 %v429
      %v534 = vpop.f32.mrf.mxu0
      %v535 = vadd.f32 %v359, %v534
      %v536 = vpop.f32.mrf.mxu0
      %v537 = vadd.f32 %v359, %v536
      %538 = vmatmul.bf16.gmra.mxu0 %v430
      %v539 = vpop.f32.mrf.mxu0
      %v540 = vadd.f32 %v359, %v539
      %v541 = vpop.f32.mrf.mxu0
      %v542 = vadd.f32 %v359, %v541
      %543 = vmatmul.bf16.gmra.mxu0 %v431
      %v544 = vpop.f32.mrf.mxu0
      %v545 = vadd.f32 %v359, %v544
      %v546 = vpop.f32.mrf.mxu0
      %v547 = vadd.f32 %v359, %v546
      %548 = vmatmul.bf16.gmra.mxu0 %v432
      %v549 = vpop.f32.mrf.mxu0
      %v550 = vadd.f32 %v359, %v549
      %v551 = vpop.f32.mrf.mxu0
      %v552 = vadd.f32 %v359, %v551
      %553 = vmatmul.bf16.gmra.mxu0 %v433
      %v554 = vpop.f32.mrf.mxu0
      %v555 = vadd.f32 %v359, %v554
      %v556 = vpop.f32.mrf.mxu0
      %v557 = vadd.f32 %v359, %v556
      %558 = vmatmul.bf16.gmra.mxu0 %v434
      %v559 = vpop.f32.mrf.mxu0
      %v560 = vadd.f32 %v359, %v559
      %v561 = vpop.f32.mrf.mxu0
      %v562 = vadd.f32 %v359, %v561
      %563 = vmatmul.bf16.gmra.mxu0 %v435
      %v564 = vpop.f32.mrf.mxu0
      %v565 = vadd.f32 %v359, %v564
      %v566 = vpop.f32.mrf.mxu0
      %v567 = vadd.f32 %v359, %v566
      %568 = vmatmul.bf16.gmra.mxu0 %v436
      %v569 = vpop.f32.mrf.mxu0
      %v570 = vadd.f32 %v359, %v569
      %v571 = vpop.f32.mrf.mxu0
      %v572 = vadd.f32 %v359, %v571
      %573 = vmatmul.bf16.gmra.mxu0 %v437
      %v574 = vpop.f32.mrf.mxu0
      %v575 = vadd.f32 %v359, %v574
      %v576 = vpop.f32.mrf.mxu0
      %v577 = vadd.f32 %v359, %v576
      %578 = vmatmul.bf16.gmra.mxu0 %v438
      %v579 = vpop.f32.mrf.mxu0
      %v580 = vadd.f32 %v359, %v579
      %v581 = vpop.f32.mrf.mxu0
      %v582 = vadd.f32 %v359, %v581
      %583 = vmatmul.bf16.gmra.mxu0 %v439
      %v584 = vpop.f32.mrf.mxu0
      %v585 = vadd.f32 %v359, %v584
      %v586 = vpop.f32.mrf.mxu0
      %v587 = vadd.f32 %v359, %v586
      %588 = vmatmul.bf16.gmra.mxu0 %v440
      %v589 = vpop.f32.mrf.mxu0
      %v590 = vadd.f32 %v359, %v589
      %v591 = vpop.f32.mrf.mxu0
      %v592 = vadd.f32 %v359, %v591
      %593 = vdwg.mxu0
      %v594 = vld [vmem:[%s3] sm:$0xff]
      %v595 = vld [vmem:[%s3 + $0x8] sm:$0xff]
      %v596 = vld [vmem:[%s3 + $0x10] sm:$0xff]
      %v597 = vld [vmem:[%s3 + $0x18] sm:$0xff]
      %v598 = vld [vmem:[%s3 + $0x20] sm:$0xff]
      %v599 = vld [vmem:[%s3 + $0x28] sm:$0xff]
      %v600 = vld [vmem:[%s3 + $0x30] sm:$0xff]
      %v601 = vld [vmem:[%s3 + $0x38] sm:$0xff]
      %v602 = vld [vmem:[%s3 + $0x40] sm:$0xff]
      %v603 = vld [vmem:[%s3 + $0x48] sm:$0xff]
      %v604 = vld [vmem:[%s3 + $0x50] sm:$0xff]
      %v605 = vld [vmem:[%s3 + $0x58] sm:$0xff]
      %v606 = vld [vmem:[%s3 + $0x60] sm:$0xff]
      %v607 = vld [vmem:[%s3 + $0x68] sm:$0xff]
      %v608 = vld [vmem:[%s3 + $0x70] sm:$0xff]
      %v609 = vld [vmem:[%s3 + $0x78] sm:$0xff]
      %v610 = vld [vmem:[%s4] sm:$0x1]
      %v612 = vperm.slane %v610, 0
      %614 = vmatpush.msra.mxu0 %v609
      %615 = vmatpush.msra.mxu0 %v608
      %616 = vmatpush.msra.mxu0 %v607
      %617 = vmatpush.msra.mxu0 %v606
      %618 = vmatpush.msra.mxu0 %v605
      %619 = vmatpush.msra.mxu0 %v604
      %620 = vmatpush.msra.mxu0 %v603
      %621 = vmatpush.msra.mxu0 %v602
      %622 = vmatpush.msra.mxu0 %v601
      %623 = vmatpush.msra.mxu0 %v600
      %624 = vmatpush.msra.mxu0 %v599
      %625 = vmatpush.msra.mxu0 %v598
      %626 = vmatpush.msra.mxu0 %v597
      %627 = vmatpush.msra.mxu0 %v596
      %628 = vmatpush.msra.mxu0 %v595
      %629 = vmatpush.msra.mxu0 %v594
      %630 = vmatmul.f32.gmra.mxu0 %v515
      %v631 = vpop.f32.mrf.mxu0
      %v632 = vadd.f32 %v612, %v631
      %633 = vmatmul.f32.gmra.mxu0 %v517
      %v634 = vpop.f32.mrf.mxu0
      %v635 = vadd.f32 %v612, %v634
      %636 = vmatmul.f32.gmra.mxu0 %v520
      %v637 = vpop.f32.mrf.mxu0
      %v638 = vadd.f32 %v612, %v637
      %639 = vmatmul.f32.gmra.mxu0 %v522
      %v640 = vpop.f32.mrf.mxu0
      %v641 = vadd.f32 %v612, %v640
      %642 = vmatmul.f32.gmra.mxu0 %v525
      %v643 = vpop.f32.mrf.mxu0
      %v644 = vadd.f32 %v612, %v643
      %645 = vmatmul.f32.gmra.mxu0 %v527
      %v646 = vpop.f32.mrf.mxu0
      %v647 = vadd.f32 %v612, %v646
      %648 = vmatmul.f32.gmra.mxu0 %v530
      %v649 = vpop.f32.mrf.mxu0
      %v650 = vadd.f32 %v612, %v649
      %651 = vmatmul.f32.gmra.mxu0 %v532
      %v652 = vpop.f32.mrf.mxu0
      %v653 = vadd.f32 %v612, %v652
      %654 = vmatmul.f32.gmra.mxu0 %v535
      %v655 = vpop.f32.mrf.mxu0
      %v656 = vadd.f32 %v612, %v655
      %657 = vmatmul.f32.gmra.mxu0 %v537
      %v658 = vpop.f32.mrf.mxu0
      %v659 = vadd.f32 %v612, %v658
      %660 = vmatmul.f32.gmra.mxu0 %v540
      %v661 = vpop.f32.mrf.mxu0
      %v662 = vadd.f32 %v612, %v661
      %663 = vmatmul.f32.gmra.mxu0 %v542
      %v664 = vpop.f32.mrf.mxu0
      %v665 = vadd.f32 %v612, %v664
      %666 = vmatmul.f32.gmra.mxu0 %v545
      %v667 = vpop.f32.mrf.mxu0
      %v668 = vadd.f32 %v612, %v667
      %669 = vmatmul.f32.gmra.mxu0 %v547
      %v670 = vpop.f32.mrf.mxu0
      %v671 = vadd.f32 %v612, %v670
      %672 = vmatmul.f32.gmra.mxu0 %v550
      %v673 = vpop.f32.mrf.mxu0
      %v674 = vadd.f32 %v612, %v673
      %675 = vmatmul.f32.gmra.mxu0 %v552
      %v676 = vpop.f32.mrf.mxu0
      %v677 = vadd.f32 %v612, %v676
      %678 = vmatmul.f32.gmra.mxu0 %v555
      %v679 = vpop.f32.mrf.mxu0
      %v680 = vadd.f32 %v612, %v679
      %681 = vmatmul.f32.gmra.mxu0 %v557
      %v682 = vpop.f32.mrf.mxu0
      %v683 = vadd.f32 %v612, %v682
      %684 = vmatmul.f32.gmra.mxu0 %v560
      %v685 = vpop.f32.mrf.mxu0
      %v686 = vadd.f32 %v612, %v685
      %687 = vmatmul.f32.gmra.mxu0 %v562
      %v688 = vpop.f32.mrf.mxu0
      %v689 = vadd.f32 %v612, %v688
      %690 = vmatmul.f32.gmra.mxu0 %v565
      %v691 = vpop.f32.mrf.mxu0
      %v692 = vadd.f32 %v612, %v691
      %693 = vmatmul.f32.gmra.mxu0 %v567
      %v694 = vpop.f32.mrf.mxu0
      %v695 = vadd.f32 %v612, %v694
      %696 = vmatmul.f32.gmra.mxu0 %v570
      %v697 = vpop.f32.mrf.mxu0
      %v698 = vadd.f32 %v612, %v697
      %699 = vmatmul.f32.gmra.mxu0 %v572
      %v700 = vpop.f32.mrf.mxu0
      %v701 = vadd.f32 %v612, %v700
      %702 = vmatmul.f32.gmra.mxu0 %v575
      %v703 = vpop.f32.mrf.mxu0
      %v704 = vadd.f32 %v612, %v703
      %705 = vmatmul.f32.gmra.mxu0 %v577
      %v706 = vpop.f32.mrf.mxu0
      %v707 = vadd.f32 %v612, %v706
      %708 = vmatmul.f32.gmra.mxu0 %v580
      %v709 = vpop.f32.mrf.mxu0
      %v710 = vadd.f32 %v612, %v709
      %711 = vmatmul.f32.gmra.mxu0 %v582
      %v712 = vpop.f32.mrf.mxu0
      %v713 = vadd.f32 %v612, %v712
      %714 = vmatmul.f32.gmra.mxu0 %v585
      %v715 = vpop.f32.mrf.mxu0
      %v716 = vadd.f32 %v612, %v715
      %717 = vmatmul.f32.gmra.mxu0 %v587
      %v718 = vpop.f32.mrf.mxu0
      %v719 = vadd.f32 %v612, %v718
      %720 = vmatmul.f32.gmra.mxu0 %v590
      %v721 = vpop.f32.mrf.mxu0
      %v722 = vadd.f32 %v612, %v721
      %723 = vmatmul.f32.gmra.mxu0 %v592
      %v724 = vpop.f32.mrf.mxu0
      %v725 = vadd.f32 %v612, %v724
      %726 = vdwg.mxu0
      %v727 = vpack.c.bf16 %v515, %v515
      %v728 = vpack.c.bf16 %v517, %v517
      %v729 = vpack.c.bf16 %v520, %v520
      %v730 = vpack.c.bf16 %v522, %v522
      %v731 = vpack.c.bf16 %v525, %v525
      %v732 = vpack.c.bf16 %v527, %v527
      %v733 = vpack.c.bf16 %v530, %v530
      %v734 = vpack.c.bf16 %v532, %v532
      %v735 = vpack.c.bf16 %v535, %v535
      %v736 = vpack.c.bf16 %v537, %v537
      %v737 = vpack.c.bf16 %v540, %v540
      %v738 = vpack.c.bf16 %v542, %v542
      %v739 = vpack.c.bf16 %v545, %v545
      %v740 = vpack.c.bf16 %v547, %v547
      %v741 = vpack.c.bf16 %v550, %v550
      %v742 = vpack.c.bf16 %v552, %v552
      %v743 = vpack.c.bf16 %v555, %v555
      %v744 = vpack.c.bf16 %v557, %v557
      %v745 = vpack.c.bf16 %v560, %v560
      %v746 = vpack.c.bf16 %v562, %v562
      %v747 = vpack.c.bf16 %v565, %v565
      %v748 = vpack.c.bf16 %v567, %v567
      %v749 = vpack.c.bf16 %v570, %v570
      %v750 = vpack.c.bf16 %v572, %v572
      %v751 = vpack.c.bf16 %v575, %v575
      %v752 = vpack.c.bf16 %v577, %v577
      %v753 = vpack.c.bf16 %v580, %v580
      %v754 = vpack.c.bf16 %v582, %v582
      %v755 = vpack.c.bf16 %v585, %v585
      %v756 = vpack.c.bf16 %v587, %v587
      %v757 = vpack.c.bf16 %v590, %v590
      %v758 = vpack.c.bf16 %v592, %v592
      %759 = vst [vmem:[%s295] sm:$0xf] %v727
      %760 = vst [vmem:[%s295 + $0x4] sm:$0xf] %v728
      %761 = vst [vmem:[%s295 + $0x8] sm:$0xf] %v729
      %762 = vst [vmem:[%s295 + $0xc] sm:$0xf] %v730
      %763 = vst [vmem:[%s295 + $0x10] sm:$0xf] %v731
      %764 = vst [vmem:[%s295 + $0x14] sm:$0xf] %v732
      %765 = vst [vmem:[%s295 + $0x18] sm:$0xf] %v733
      %766 = vst [vmem:[%s295 + $0x1c] sm:$0xf] %v734
      %767 = vst [vmem:[%s295 + $0x20] sm:$0xf] %v735
      %768 = vst [vmem:[%s295 + $0x24] sm:$0xf] %v736
      %769 = vst [vmem:[%s295 + $0x28] sm:$0xf] %v737
      %770 = vst [vmem:[%s295 + $0x2c] sm:$0xf] %v738
      %771 = vst [vmem:[%s295 + $0x30] sm:$0xf] %v739
      %772 = vst [vmem:[%s295 + $0x34] sm:$0xf] %v740
      %773 = vst [vmem:[%s295 + $0x38] sm:$0xf] %v741
      %774 = vst [vmem:[%s295 + $0x3c] sm:$0xf] %v742
      %775 = vst [vmem:[%s295 + $0x40] sm:$0xf] %v743
      %776 = vst [vmem:[%s295 + $0x44] sm:$0xf] %v744
      %777 = vst [vmem:[%s295 + $0x48] sm:$0xf] %v745
      %778 = vst [vmem:[%s295 + $0x4c] sm:$0xf] %v746
      %779 = vst [vmem:[%s295 + $0x50] sm:$0xf] %v747
      %780 = vst [vmem:[%s295 + $0x54] sm:$0xf] %v748
      %781 = vst [vmem:[%s295 + $0x58] sm:$0xf] %v749
      %782 = vst [vmem:[%s295 + $0x5c] sm:$0xf] %v750
      %783 = vst [vmem:[%s295 + $0x60] sm:$0xf] %v751
      %784 = vst [vmem:[%s295 + $0x64] sm:$0xf] %v752
      %785 = vst [vmem:[%s295 + $0x68] sm:$0xf] %v753
      %786 = vst [vmem:[%s295 + $0x6c] sm:$0xf] %v754
      %787 = vst [vmem:[%s295 + $0x70] sm:$0xf] %v755
      %788 = vst [vmem:[%s295 + $0x74] sm:$0xf] %v756
      %789 = vst [vmem:[%s295 + $0x78] sm:$0xf] %v757
      %790 = vst [vmem:[%s295 + $0x7c] sm:$0xf] %v758
      %vm791 = vcmask 7168
      %792 = vst.msk [vmem:[%s301] sm:$0xff] %vm791, %v632
      %793 = vst.msk [vmem:[%s301 + $0x8] sm:$0xff] %vm791, %v635
      %794 = vst.msk [vmem:[%s301 + $0x10] sm:$0xff] %vm791, %v638
      %795 = vst.msk [vmem:[%s301 + $0x18] sm:$0xff] %vm791, %v641
      %796 = vst.msk [vmem:[%s301 + $0x20] sm:$0xff] %vm791, %v644
      %797 = vst.msk [vmem:[%s301 + $0x28] sm:$0xff] %vm791, %v647
      %798 = vst.msk [vmem:[%s301 + $0x30] sm:$0xff] %vm791, %v650
      %799 = vst.msk [vmem:[%s301 + $0x38] sm:$0xff] %vm791, %v653
      %800 = vst.msk [vmem:[%s301 + $0x40] sm:$0xff] %vm791, %v656
      %801 = vst.msk [vmem:[%s301 + $0x48] sm:$0xff] %vm791, %v659
      %802 = vst.msk [vmem:[%s301 + $0x50] sm:$0xff] %vm791, %v662
      %803 = vst.msk [vmem:[%s301 + $0x58] sm:$0xff] %vm791, %v665
      %804 = vst.msk [vmem:[%s301 + $0x60] sm:$0xff] %vm791, %v668
      %805 = vst.msk [vmem:[%s301 + $0x68] sm:$0xff] %vm791, %v671
      %806 = vst.msk [vmem:[%s301 + $0x70] sm:$0xff] %vm791, %v674
      %807 = vst.msk [vmem:[%s301 + $0x78] sm:$0xff] %vm791, %v677
      %808 = vst.msk [vmem:[%s301 + $0x80] sm:$0xff] %vm791, %v680
      %809 = vst.msk [vmem:[%s301 + $0x88] sm:$0xff] %vm791, %v683
      %810 = vst.msk [vmem:[%s301 + $0x90] sm:$0xff] %vm791, %v686
      %811 = vst.msk [vmem:[%s301 + $0x98] sm:$0xff] %vm791, %v689
      %812 = vst.msk [vmem:[%s301 + $0xa0] sm:$0xff] %vm791, %v692
      %813 = vst.msk [vmem:[%s301 + $0xa8] sm:$0xff] %vm791, %v695
      %814 = vst.msk [vmem:[%s301 + $0xb0] sm:$0xff] %vm791, %v698
      %815 = vst.msk [vmem:[%s301 + $0xb8] sm:$0xff] %vm791, %v701
      %816 = vst.msk [vmem:[%s301 + $0xc0] sm:$0xff] %vm791, %v704
      %817 = vst.msk [vmem:[%s301 + $0xc8] sm:$0xff] %vm791, %v707
      %818 = vst.msk [vmem:[%s301 + $0xd0] sm:$0xff] %vm791, %v710
      %819 = vst.msk [vmem:[%s301 + $0xd8] sm:$0xff] %vm791, %v713
      %820 = vst.msk [vmem:[%s301 + $0xe0] sm:$0xff] %vm791, %v716
      %821 = vst.msk [vmem:[%s301 + $0xe8] sm:$0xff] %vm791, %v719
      %822 = vst.msk [vmem:[%s301 + $0xf0] sm:$0xff] %vm791, %v722
      %823 = vst.msk [vmem:[%s301 + $0xf8] sm:$0xff] %vm791, %v725
      %856 = vrot.lane.b32.xlu0 %v632, 127
      %v857 = vpop.permute.xlu0 %856
      %858 = vrot.lane.b32.xlu0 %v635, 127
      %v859 = vpop.permute.xlu0 %858
      %860 = vrot.lane.b32.xlu0 %v638, 127
      %v861 = vpop.permute.xlu0 %860
      %862 = vrot.lane.b32.xlu0 %v641, 127
      %v863 = vpop.permute.xlu0 %862
      %864 = vrot.lane.b32.xlu0 %v644, 127
      %v865 = vpop.permute.xlu0 %864
      %866 = vrot.lane.b32.xlu0 %v647, 127
      %v867 = vpop.permute.xlu0 %866
      %868 = vrot.lane.b32.xlu0 %v650, 127
      %v869 = vpop.permute.xlu0 %868
      %870 = vrot.lane.b32.xlu0 %v653, 127
      %v871 = vpop.permute.xlu0 %870
      %872 = vrot.lane.b32.xlu0 %v656, 127
      %v873 = vpop.permute.xlu0 %872
      %874 = vrot.lane.b32.xlu0 %v659, 127
      %v875 = vpop.permute.xlu0 %874
      %876 = vrot.lane.b32.xlu0 %v662, 127
      %v877 = vpop.permute.xlu0 %876
      %878 = vrot.lane.b32.xlu0 %v665, 127
      %v879 = vpop.permute.xlu0 %878
      %880 = vrot.lane.b32.xlu0 %v668, 127
      %v881 = vpop.permute.xlu0 %880
      %882 = vrot.lane.b32.xlu0 %v671, 127
      %v883 = vpop.permute.xlu0 %882
      %884 = vrot.lane.b32.xlu0 %v674, 127
      %v885 = vpop.permute.xlu0 %884
      %886 = vrot.lane.b32.xlu0 %v677, 127
      %v887 = vpop.permute.xlu0 %886
      %888 = vrot.lane.b32.xlu0 %v680, 127
      %v889 = vpop.permute.xlu0 %888
      %890 = vrot.lane.b32.xlu0 %v683, 127
      %v891 = vpop.permute.xlu0 %890
      %892 = vrot.lane.b32.xlu0 %v686, 127
      %v893 = vpop.permute.xlu0 %892
      %894 = vrot.lane.b32.xlu0 %v689, 127
      %v895 = vpop.permute.xlu0 %894
      %896 = vrot.lane.b32.xlu0 %v692, 127
      %v897 = vpop.permute.xlu0 %896
      %898 = vrot.lane.b32.xlu0 %v695, 127
      %v899 = vpop.permute.xlu0 %898
      %900 = vrot.lane.b32.xlu0 %v698, 127
      %v901 = vpop.permute.xlu0 %900
      %902 = vrot.lane.b32.xlu0 %v701, 127
      %v903 = vpop.permute.xlu0 %902
      %904 = vrot.lane.b32.xlu0 %v704, 127
      %v905 = vpop.permute.xlu0 %904
      %906 = vrot.lane.b32.xlu0 %v707, 127
      %v907 = vpop.permute.xlu0 %906
      %908 = vrot.lane.b32.xlu0 %v710, 127
      %v909 = vpop.permute.xlu0 %908
      %910 = vrot.lane.b32.xlu0 %v713, 127
      %v911 = vpop.permute.xlu0 %910
      %912 = vrot.lane.b32.xlu0 %v716, 127
      %v913 = vpop.permute.xlu0 %912
      %914 = vrot.lane.b32.xlu0 %v719, 127
      %v915 = vpop.permute.xlu0 %914
      %916 = vrot.lane.b32.xlu0 %v722, 127
      %v917 = vpop.permute.xlu0 %916
      %918 = vrot.lane.b32.xlu0 %v725, 127
      %v919 = vpop.permute.xlu0 %918
      %952 = vst.msk [vmem:[%s307] sm:$0xff] %vm791, %v857
      %953 = vst.msk [vmem:[%s307 + $0x8] sm:$0xff] %vm791, %v859
      %954 = vst.msk [vmem:[%s307 + $0x10] sm:$0xff] %vm791, %v861
      %955 = vst.msk [vmem:[%s307 + $0x18] sm:$0xff] %vm791, %v863
      %956 = vst.msk [vmem:[%s307 + $0x20] sm:$0xff] %vm791, %v865
      %957 = vst.msk [vmem:[%s307 + $0x28] sm:$0xff] %vm791, %v867
      %958 = vst.msk [vmem:[%s307 + $0x30] sm:$0xff] %vm791, %v869
      %959 = vst.msk [vmem:[%s307 + $0x38] sm:$0xff] %vm791, %v871
      %960 = vst.msk [vmem:[%s307 + $0x40] sm:$0xff] %vm791, %v873
      %961 = vst.msk [vmem:[%s307 + $0x48] sm:$0xff] %vm791, %v875
      %962 = vst.msk [vmem:[%s307 + $0x50] sm:$0xff] %vm791, %v877
      %963 = vst.msk [vmem:[%s307 + $0x58] sm:$0xff] %vm791, %v879
      %964 = vst.msk [vmem:[%s307 + $0x60] sm:$0xff] %vm791, %v881
      %965 = vst.msk [vmem:[%s307 + $0x68] sm:$0xff] %vm791, %v883
      %966 = vst.msk [vmem:[%s307 + $0x70] sm:$0xff] %vm791, %v885
      %967 = vst.msk [vmem:[%s307 + $0x78] sm:$0xff] %vm791, %v887
      %968 = vst.msk [vmem:[%s307 + $0x80] sm:$0xff] %vm791, %v889
      %969 = vst.msk [vmem:[%s307 + $0x88] sm:$0xff] %vm791, %v891
      %970 = vst.msk [vmem:[%s307 + $0x90] sm:$0xff] %vm791, %v893
      %971 = vst.msk [vmem:[%s307 + $0x98] sm:$0xff] %vm791, %v895
      %972 = vst.msk [vmem:[%s307 + $0xa0] sm:$0xff] %vm791, %v897
      %973 = vst.msk [vmem:[%s307 + $0xa8] sm:$0xff] %vm791, %v899
      %974 = vst.msk [vmem:[%s307 + $0xb0] sm:$0xff] %vm791, %v901
      %975 = vst.msk [vmem:[%s307 + $0xb8] sm:$0xff] %vm791, %v903
      %976 = vst.msk [vmem:[%s307 + $0xc0] sm:$0xff] %vm791, %v905
      %977 = vst.msk [vmem:[%s307 + $0xc8] sm:$0xff] %vm791, %v907
      %978 = vst.msk [vmem:[%s307 + $0xd0] sm:$0xff] %vm791, %v909
      %979 = vst.msk [vmem:[%s307 + $0xd8] sm:$0xff] %vm791, %v911
      %980 = vst.msk [vmem:[%s307 + $0xe0] sm:$0xff] %vm791, %v913
      %981 = vst.msk [vmem:[%s307 + $0xe8] sm:$0xff] %vm791, %v915
      %982 = vst.msk [vmem:[%s307 + $0xf0] sm:$0xff] %vm791, %v917
      %983 = vst.msk [vmem:[%s307 + $0xf8] sm:$0xff] %vm791, %v919
      %s984 = smul.u32 32, %s19
      %p985 = scmp.lt.s32.totalorder %s984, 63
      %s986 = scalar_select %p985, %s984, 63
      %s987 = smul.addr %s986, 4
      %s988 = scalar_lea.vmem %s5, %s987
      %s989 = smul.u32 32, %s19
      %p990 = scmp.lt.s32.totalorder %s989, 63
      %s991 = scalar_select %p990, %s989, 63
      %s992 = smul.addr %s991, 8
      %s993 = scalar_lea.vmem %s6, %s992
      %s994 = smul.u32 32, %s19
      %p995 = scmp.lt.s32.totalorder %s994, 63
      %s996 = scalar_select %p995, %s994, 63
      %s997 = smul.addr %s996, 8
      %s998 = scalar_lea.vmem %s7, %s997
      // Predicated region
      $region41: #{gat_layer.2} parent=39 // pred_check
        %p999 = pneg %p147
      $region42: #{gat_layer.2} parent=39 // pred_check_branch
        %1001 = sbr.rel (%p999) target = $region44
      $region43: #{gat_layer.2} parent=39 // pred_region
        %s1002 = smul.u32 32, %s19
      $region44: #{gat_layer.2} parent=39 // pred_fallthru
        _
      // Predicated region
      $region45: #{gat_layer.2} parent=39 // pred_check
        %p1003 = pneg %p173
      $region46: #{gat_layer.2} parent=39 // pred_check_branch
        %1005 = sbr.rel (%p1003) target = $region48
      $region47: #{gat_layer.2} parent=39 // pred_region
        %s1006 = smul.u32 32, %s19
      $region48: #{gat_layer.2} parent=39 // pred_fallthru
        _
      // Predicated region
      $region49: #{gat_layer.2} parent=39 // pred_check
        %p1007 = pneg %p199
      $region50: #{gat_layer.2} parent=39 // pred_check_branch
        %1009 = sbr.rel (%p1007) target = $region52
      $region51: #{gat_layer.2} parent=39 // pred_region
        %s1010 = smul.u32 32, %s19
      $region52: #{gat_layer.2} parent=39 // pred_fallthru
        _
    $region40: #{gat_layer.2} parent=5 // pred_fallthru
      _
    %p1011 = scmp.le.s32.totalorder 2, %s14
    // Predicated region
    $region53: #{gat_layer.2} parent=5 // pred_check
      %p1012 = pneg %p1011
    $region54: #{gat_layer.2} parent=5 // pred_check_branch
      %1014 = sbr.rel (%p1012) target = $region56
    $region55: #{gat_layer.2} parent=5 // pred_region
      %s1015 = ssub.s32 %s14, 2
      // Predicated region
      $region57: #{gat_layer.2} parent=55 // pred_check
        %p1016 = pneg %p153
      $region58: #{gat_layer.2} parent=55 // pred_check_branch
        %1018 = sbr.rel (%p1016) target = $region60
      $region59: #{gat_layer.2} parent=55 // pred_region
        %s1019 = smul.u32 32, %s20
        %p1020 = scmp.lt.s32.totalorder %s1019, 63
        %s1021 = scalar_select %p1020, %s1019, 63
        %s1022 = smul.addr %s1021, 4
        %s1023 = scalar_lea.vmem %s5, %s1022
      $region60: #{gat_layer.2} parent=55 // pred_fallthru
        _
      // Predicated region
      $region61: #{gat_layer.2} parent=55 // pred_check
        %p1024 = pneg %p179
      $region62: #{gat_layer.2} parent=55 // pred_check_branch
        %1026 = sbr.rel (%p1024) target = $region64
      $region63: #{gat_layer.2} parent=55 // pred_region
        %s1027 = smul.u32 32, %s20
        %p1028 = scmp.lt.s32.totalorder %s1027, 63
        %s1029 = scalar_select %p1028, %s1027, 63
        %s1030 = smul.addr %s1029, 8
        %s1031 = scalar_lea.vmem %s6, %s1030
      $region64: #{gat_layer.2} parent=55 // pred_fallthru
        _
      // Predicated region
      $region65: #{gat_layer.2} parent=55 // pred_check
        %p1032 = pneg %p205
      $region66: #{gat_layer.2} parent=55 // pred_check_branch
        %1034 = sbr.rel (%p1032) target = $region68
      $region67: #{gat_layer.2} parent=55 // pred_region
        %s1035 = smul.u32 32, %s20
        %p1036 = scmp.lt.s32.totalorder %s1035, 63
        %s1037 = scalar_select %p1036, %s1035, 63
        %s1038 = smul.addr %s1037, 8
        %s1039 = scalar_lea.vmem %s7, %s1038
      $region68: #{gat_layer.2} parent=55 // pred_fallthru
        _
    $region56: #{gat_layer.2} parent=5 // pred_fallthru
      _
  $region6: #{gat_layer.2} parent=0 // loop_footer
    %s18 = sadd.s32 1, %s14
  $region7: #{gat_layer.2} parent=0 // loop_footer_branch
    %13 = sbr.rel target = $region3
  $region8: #{gat_layer.2} parent=0 // loop_exit
    _

// kernel: gat_layer.3
$region0: #{gat_layer.3}
  #allocation0 [shape = 'u32[]', space=smem, size = 0x4, offset = 0x4, fixed_abs, tag = 'smem constant byte address 0x4 - core index']
  #allocation1 [shape = 'u32[72,128]{1,0:T(1,128)}', space=vmem, size = 0x9000, scoped, tag = 'internal scratch']
  #allocation2 [shape = 'f32[256,1]{1,0:T(8,128)}', space=vmem, size = 0x20000, scoped, tag = 'scratch operand']
  #allocation3 [shape = 'f32[256,1]{1,0:T(8,128)}', space=vmem, size = 0x20000, scoped, tag = 'scratch operand']
  #allocation4 [shape = 'f32[256,128]{1,0:T(8,128)}', space=vmem, size = 0x20000, scoped, tag = 'scratch operand']
  %s0 = inlined_call_operand.vmem [shape: f32[512,1], index: 0, kind: input, shape index: {}]
  %s1 = inlined_call_operand.vmem [shape: f32[1,512], index: 1, kind: input, shape index: {}]
  %s2 = inlined_call_operand.vmem [shape: s8[512,512], index: 2, kind: input, shape index: {}]
  %s3 = inlined_call_operand.vmem [shape: bf16[512,128], index: 3, kind: input, shape index: {}]
  %s4 = inlined_call_operand.vmem [shape: f32[512,128], index: 4, kind: output, shape index: {}]
  %s5 = sld [smem:[#allocation0]]
  $region80: #{gat_layer.3} parent=0
    _
  %s7 = ssub.s32 1, %s5
  %s8 = scalar_select 0, %s7, %s5
  $region1: #{gat_layer.3} parent=0
    #allocation5 [shape = 'u8[131072]{0}', space=vmem, size = 0x20000, scoped, tag = 'input window, operand 2']
    loop: start=0, step=1, limit=6
    $region2: #{gat_layer.3} parent=1 // loop_pre_header
      _
    $region3: #{gat_layer.3} parent=1 // loop_header
      %s10 = sphi 0, %s14
      %p11 = scmp.ge.s32.totalorder %s10, 6
      %s17 = sphi 0, %s29
      %s18 = sphi 0, %s25
      %s19 = sphi 0, %s17
      %s20 = sphi 0, %s18
      %s21 = sphi 0, %s19
      %s22 = sphi 0, %s20
      %s32 = sphi 0, %s34
      %s35 = sphi 0, %s32
      %s36 = sphi 0, %s35
      %s52 = sphi 0, %s36
      %s58 = sphi 0, %s60
      %s61 = sphi 0, %s58
      %s62 = sphi 0, %s61
      %s78 = sphi 0, %s62
      %s86 = sphi 0, %s88
      %s89 = sphi 0, %s86
      %s90 = sphi 0, %s89
      %s106 = sphi 0, %s90
      %s112 = sphi 0, %s114
      %s115 = sphi 0, %s112
      %s116 = sphi 0, %s115
      %s132 = sphi 0, %s116
      %s138 = sphi 0, %s140
      %s141 = sphi 0, %s138
      %s142 = sphi 0, %s141
      %s158 = sphi 0, %s142
    $region4: #{gat_layer.3} parent=1 // loop_header_branch
      %13 = sbr.rel (%p11) target = $region8
    $region5: #{gat_layer.3} parent=1 // loop_body
      %s15 = ssub.s32 %s10, 1
      %s16 = ssub.s32 %s10, 2
      %s23 = sadd.s32 1, %s18
      %p24 = scmp.ge.s32.totalorder %s23, 2
      %s25 = scalar_select %p24, 0, %s23
      %s26 = sadd.s32 1, %s17
      %s27 = scalar_select %p24, %s26, %s17
      %p28 = scmp.ge.s32.totalorder %s27, 2
      %s29 = scalar_select %p28, 0, %s27
      %s30 = ssub.s32 %s17, %s29
      %p31 = scmp.eq.s32.totalorder %s30, 0
      %s33 = sadd.s32 %s32, 1
      %s34 = scalar_select %p31, %s32, %s33
      %p37 = pneg %p31
      %p38 = scmp.eq.s32.totalorder %s10, 3
      %p39 = por %p37, %p38
      %p40 = scmp.ne.s32.totalorder %s32, %s35
      %p41 = scmp.eq.s32.totalorder %s10, 0
      %p42 = por %p40, %p41
      %p43 = scmp.ne.s32.totalorder %s32, %s35
      %p44 = scmp.eq.s32.totalorder %s15, 3
      %p45 = por %p43, %p44
      %p46 = scmp.ne.s32.totalorder %s35, %s36
      %p47 = scmp.eq.s32.totalorder %s15, 0
      %p48 = por %p46, %p47
      %p49 = scmp.ne.s32.totalorder %s35, %s36
      %p50 = scmp.eq.s32.totalorder %s16, 3
      %p51 = por %p49, %p50
      %p53 = scmp.ne.s32.totalorder %s36, %s52
      %p54 = scmp.eq.s32.totalorder %s16, 0
      %p55 = por %p53, %p54
      %s56 = ssub.s32 %s18, %s25
      %p57 = scmp.eq.s32.totalorder %s56, 0
      %s59 = sadd.s32 %s58, 1
      %s60 = scalar_select %p57, %s58, %s59
      %p63 = pneg %p57
      %p64 = scmp.eq.s32.totalorder %s10, 3
      %p65 = por %p63, %p64
      %p66 = scmp.ne.s32.totalorder %s58, %s61
      %p67 = scmp.eq.s32.totalorder %s10, 0
      %p68 = por %p66, %p67
      %p69 = scmp.ne.s32.totalorder %s58, %s61
      %p70 = scmp.eq.s32.totalorder %s15, 3
      %p71 = por %p69, %p70
      %p72 = scmp.ne.s32.totalorder %s61, %s62
      %p73 = scmp.eq.s32.totalorder %s15, 0
      %p74 = por %p72, %p73
      %p75 = scmp.ne.s32.totalorder %s61, %s62
      %p76 = scmp.eq.s32.totalorder %s16, 3
      %p77 = por %p75, %p76
      %p79 = scmp.ne.s32.totalorder %s62, %s78
      %p80 = scmp.eq.s32.totalorder %s16, 0
      %p81 = por %p79, %p80
      %s82 = ssub.s32 %s17, %s29
      %s83 = ssub.s32 %s18, %s25
      %s84 = sor.u32 %s82, %s83
      %p85 = scmp.eq.s32.totalorder %s84, 0
      %s87 = sadd.s32 %s86, 1
      %s88 = scalar_select %p85, %s86, %s87
      %p91 = pneg %p85
      %p92 = scmp.eq.s32.totalorder %s10, 3
      %p93 = por %p91, %p92
      %p94 = scmp.ne.s32.totalorder %s86, %s89
      %p95 = scmp.eq.s32.totalorder %s10, 0
      %p96 = por %p94, %p95
      %p97 = scmp.ne.s32.totalorder %s86, %s89
      %p98 = scmp.eq.s32.totalorder %s15, 3
      %p99 = por %p97, %p98
      %p100 = scmp.ne.s32.totalorder %s89, %s90
      %p101 = scmp.eq.s32.totalorder %s15, 0
      %p102 = por %p100, %p101
      %p103 = scmp.ne.s32.totalorder %s89, %s90
      %p104 = scmp.eq.s32.totalorder %s16, 3
      %p105 = por %p103, %p104
      %p107 = scmp.ne.s32.totalorder %s90, %s106
      %p108 = scmp.eq.s32.totalorder %s16, 0
      %p109 = por %p107, %p108
      %s110 = ssub.s32 %s18, %s25
      %p111 = scmp.eq.s32.totalorder %s110, 0
      %s113 = sadd.s32 %s112, 1
      %s114 = scalar_select %p111, %s112, %s113
      %p117 = pneg %p111
      %p118 = scmp.eq.s32.totalorder %s10, 3
      %p119 = por %p117, %p118
      %p120 = scmp.ne.s32.totalorder %s112, %s115
      %p121 = scmp.eq.s32.totalorder %s10, 0
      %p122 = por %p120, %p121
      %p123 = scmp.ne.s32.totalorder %s112, %s115
      %p124 = scmp.eq.s32.totalorder %s15, 3
      %p125 = por %p123, %p124
      %p126 = scmp.ne.s32.totalorder %s115, %s116
      %p127 = scmp.eq.s32.totalorder %s15, 0
      %p128 = por %p126, %p127
      %p129 = scmp.ne.s32.totalorder %s115, %s116
      %p130 = scmp.eq.s32.totalorder %s16, 3
      %p131 = por %p129, %p130
      %p133 = scmp.ne.s32.totalorder %s116, %s132
      %p134 = scmp.eq.s32.totalorder %s16, 0
      %p135 = por %p133, %p134
      %s136 = ssub.s32 %s17, %s29
      %p137 = scmp.eq.s32.totalorder %s136, 0
      %s139 = sadd.s32 %s138, 1
      %s140 = scalar_select %p137, %s138, %s139
      %p143 = pneg %p137
      %p144 = scmp.eq.s32.totalorder %s10, 3
      %p145 = por %p143, %p144
      %p146 = scmp.ne.s32.totalorder %s138, %s141
      %p147 = scmp.eq.s32.totalorder %s10, 0
      %p148 = por %p146, %p147
      %p149 = scmp.ne.s32.totalorder %s138, %s141
      %p150 = scmp.eq.s32.totalorder %s15, 3
      %p151 = por %p149, %p150
      %p152 = scmp.ne.s32.totalorder %s141, %s142
      %p153 = scmp.eq.s32.totalorder %s15, 0
      %p154 = por %p152, %p153
      %p155 = scmp.ne.s32.totalorder %s141, %s142
      %p156 = scmp.eq.s32.totalorder %s16, 3
      %p157 = por %p155, %p156
      %p159 = scmp.ne.s32.totalorder %s142, %s158
      %p160 = scmp.eq.s32.totalorder %s16, 0
      %p161 = por %p159, %p160
      %p162 = scmp.le.s32.totalorder 1, %s10
      %p163 = scmp.lt.s32.totalorder %s10, 5
      %p164 = pnand %p162, %p163
      %p165 = pneg %p164
      // Predicated region
      $region9: #{gat_layer.3} parent=5 // pred_check
        _
      $region10: #{gat_layer.3} parent=5 // pred_check_branch
        %167 = sbr.rel (%p164) target = $region12
      $region11: #{gat_layer.3} parent=5 // pred_region
        %s168 = ssub.s32 %s10, 1
      $region12: #{gat_layer.3} parent=5 // pred_fallthru
        _
      %p169 = scmp.lt.s32.totalorder %s10, 4
      // Predicated region
      $region13: #{gat_layer.3} parent=5 // pred_check
        %p170 = pneg %p169
      $region14: #{gat_layer.3} parent=5 // pred_check_branch
        %172 = sbr.rel (%p170) target = $region16
      $region15: #{gat_layer.3} parent=5 // pred_region
        // Predicated region
        $region17: #{gat_layer.3} parent=15 // pred_check
          %p173 = pneg %p42
        $region18: #{gat_layer.3} parent=15 // pred_check_branch
          %175 = sbr.rel (%p173) target = $region20
        $region19: #{gat_layer.3} parent=15 // pred_region
          %s176 = smul.u32 32, %s17
          %p177 = scmp.lt.s32.totalorder %s176, 63
          %s178 = scalar_select %p177, %s176, 63
          %s179 = smul.addr %s178, 8
          %s180 = scalar_lea.vmem %s0, %s179
          %s181 = smul.u32 32, %s17
        $region20: #{gat_layer.3} parent=15 // pred_fallthru
          _
        // Predicated region
        $region21: #{gat_layer.3} parent=15 // pred_check
          %p182 = pneg %p68
        $region22: #{gat_layer.3} parent=15 // pred_check_branch
          %184 = sbr.rel (%p182) target = $region24
        $region23: #{gat_layer.3} parent=15 // pred_region
          %s185 = smul.u32 2, %s18
          %p186 = scmp.lt.s32.totalorder %s185, 3
          %s187 = scalar_select %p186, %s185, 3
          %s188 = scalar_lea.vmem %s1, %s187
          %s189 = smul.u32 2, %s18
        $region24: #{gat_layer.3} parent=15 // pred_fallthru
          _
        // Predicated region
        $region25: #{gat_layer.3} parent=15 // pred_check
          %p190 = pneg %p96
        $region26: #{gat_layer.3} parent=15 // pred_check_branch
          %192 = sbr.rel (%p190) target = $region28
        $region27: #{gat_layer.3} parent=15 // pred_region
          %s193 = sand.u32 %s86, 1
          %s194 = sand.u32 %s86, 1
          %s195 = smul.addr %s194, 128
          %s196 = scalar_lea.vmem [#allocation5], %s195
          %s197 = smul.u32 8, %s17
          %s198 = smul.u32 2, %s18
          %s199 = smul.addr %s197, 4
          %s200 = sadd.s32 %s198, %s199
          %s201 = smul.addr %s200, 8
          %s202 = scalar_lea.vmem %s2, %s201
          // Predicated region
          $region29: #{gat_layer.3} parent=27 // pred_check
            _
          $region30: #{gat_layer.3} parent=27 // pred_check_branch
            %204 = sbr.rel (0) target = $region32
          $region31: #{gat_layer.3} parent=27 // pred_region
            // Predicated region
            $region33: #{gat_layer.3} parent=31 // pred_check
              _
            $region34: #{gat_layer.3} parent=31 // pred_check_branch
              %206 = sbr.rel (0) target = $region36
            $region35: #{gat_layer.3} parent=31 // pred_region
              loop: start=0, step=1, limit=1
              $region37: #{gat_layer.3} parent=35 // loop_pre_header
                _
              $region38: #{gat_layer.3} parent=35 // loop_header
                %s208 = sphi 0, %s212
                %p209 = scmp.ge.s32.totalorder %s208, 1
                %s213 = sphi %s202, %s202
                %s214 = sphi %s196, %s196
              $region39: #{gat_layer.3} parent=35 // loop_header_branch
                %211 = sbr.rel (%p209) target = $region43
              $region40: #{gat_layer.3} parent=35 // loop_body
                %v215 = vld [vmem:[%s213] sm:$0xff]
                %216 = vst [vmem:[%s214] sm:$0xff] %v215
                %v217 = vld [vmem:[%s213 + $0x8] sm:$0xff]
                %218 = vst [vmem:[%s214 + $0x8] sm:$0xff] %v217
                %v219 = vld [vmem:[%s213 + $0x20] sm:$0xff]
                %220 = vst [vmem:[%s214 + $0x10] sm:$0xff] %v219
                %v221 = vld [vmem:[%s213 + $0x28] sm:$0xff]
                %222 = vst [vmem:[%s214 + $0x18] sm:$0xff] %v221
                %v223 = vld [vmem:[%s213 + $0x40] sm:$0xff]
                %224 = vst [vmem:[%s214 + $0x20] sm:$0xff] %v223
                %v225 = vld [vmem:[%s213 + $0x48] sm:$0xff]
                %226 = vst [vmem:[%s214 + $0x28] sm:$0xff] %v225
                %v227 = vld [vmem:[%s213 + $0x60] sm:$0xff]
                %228 = vst [vmem:[%s214 + $0x30] sm:$0xff] %v227
                %v229 = vld [vmem:[%s213 + $0x68] sm:$0xff]
                %230 = vst [vmem:[%s214 + $0x38] sm:$0xff] %v229
                %v231 = vld [vmem:[%s213 + $0x80] sm:$0xff]
                %232 = vst [vmem:[%s214 + $0x40] sm:$0xff] %v231
                %v233 = vld [vmem:[%s213 + $0x88] sm:$0xff]
                %234 = vst [vmem:[%s214 + $0x48] sm:$0xff] %v233
                %v235 = vld [vmem:[%s213 + $0xa0] sm:$0xff]
                %236 = vst [vmem:[%s214 + $0x50] sm:$0xff] %v235
                %v237 = vld [vmem:[%s213 + $0xa8] sm:$0xff]
                %238 = vst [vmem:[%s214 + $0x58] sm:$0xff] %v237
                %v239 = vld [vmem:[%s213 + $0xc0] sm:$0xff]
                %240 = vst [vmem:[%s214 + $0x60] sm:$0xff] %v239
                %v241 = vld [vmem:[%s213 + $0xc8] sm:$0xff]
                %242 = vst [vmem:[%s214 + $0x68] sm:$0xff] %v241
                %v243 = vld [vmem:[%s213 + $0xe0] sm:$0xff]
                %244 = vst [vmem:[%s214 + $0x70] sm:$0xff] %v243
                %v245 = vld [vmem:[%s213 + $0xe8] sm:$0xff]
                %246 = vst [vmem:[%s214 + $0x78] sm:$0xff] %v245
              $region41: #{gat_layer.3} parent=35 // loop_footer
                %s212 = sadd.s32 1, %s208
              $region42: #{gat_layer.3} parent=35 // loop_footer_branch
                %207 = sbr.rel target = $region38
              $region43: #{gat_layer.3} parent=35 // loop_exit
                _
            $region36: #{gat_layer.3} parent=31 // pred_fallthru
              _
            // Predicated region
            $region44: #{gat_layer.3} parent=31 // pred_check
              _
            $region45: #{gat_layer.3} parent=31 // pred_check_branch
              %248 = sbr.rel target = $region47
            $region46: #{gat_layer.3} parent=31 // pred_region
              _
            $region47: #{gat_layer.3} parent=31 // pred_fallthru
              _
          $region32: #{gat_layer.3} parent=27 // pred_fallthru
            _
          %249 = vnop
        $region28: #{gat_layer.3} parent=15 // pred_fallthru
          _
        // Predicated region
        $region48: #{gat_layer.3} parent=15 // pred_check
          %p250 = pneg %p122
        $region49: #{gat_layer.3} parent=15 // pred_check_branch
          %252 = sbr.rel (%p250) target = $region51
        $region50: #{gat_layer.3} parent=15 // pred_region
          %s253 = smul.u32 32, %s18
          %p254 = scmp.lt.s32.totalorder %s253, 63
          %s255 = scalar_select %p254, %s253, 63
          %s256 = smul.addr %s255, 4
          %s257 = scalar_lea.vmem %s3, %s256
          %s258 = smul.u32 32, %s18
        $region51: #{gat_layer.3} parent=15 // pred_fallthru
          _
      $region16: #{gat_layer.3} parent=5 // pred_fallthru
        _
      %p259 = scmp.le.s32.totalorder 1, %s10
      %p260 = scmp.lt.s32.totalorder %s10, 5
      %p261 = pnand %p259, %p260
      %p262 = pneg %p261
      // Predicated region
      $region52: #{gat_layer.3} parent=5 // pred_check
        _
      $region53: #{gat_layer.3} parent=5 // pred_check_branch
        %264 = sbr.rel (%p261) target = $region55
      $region54: #{gat_layer.3} parent=5 // pred_region
        %s265 = ssub.s32 %s10, 1
        %s266 = sand.u32 %s89, 1
        %s267 = sand.u32 %s89, 1
        %s268 = smul.addr %s267, 128
        %s269 = scalar_lea.vmem [#allocation5], %s268
        // Predicated region
        $region56: #{gat_layer.3} parent=54 // pred_check
          %p270 = pneg %p102
        $region57: #{gat_layer.3} parent=54 // pred_check_branch
          %272 = sbr.rel (%p270) target = $region59
        $region58: #{gat_layer.3} parent=54 // pred_region
          _
        $region59: #{gat_layer.3} parent=54 // pred_fallthru
          _
        %s273 = smul.u32 32, %s19
        %p274 = scmp.lt.s32.totalorder %s273, 63
        %s275 = scalar_select %p274, %s273, 63
        %s276 = smul.addr %s275, 8
        %s277 = scalar_lea.vmem %s0, %s276
        %p278 = pneg %p48
        %p279 = pneg %p45
        %s280 = smul.u32 2, %s20
        %p281 = scmp.lt.s32.totalorder %s280, 3
        %s282 = scalar_select %p281, %s280, 3
        %s283 = scalar_lea.vmem %s1, %s282
        %p284 = pneg %p74
        %p285 = pneg %p71
        %s286 = sand.u32 %s89, 1
        %s287 = sand.u32 %s89, 1
        %s288 = smul.addr %s287, 128
        %s289 = scalar_lea.vmem [#allocation5], %s288
        %p290 = pneg %p102
        %p291 = pneg %p99
        %s292 = smul.u32 32, %s20
        %p293 = scmp.lt.s32.totalorder %s292, 63
        %s294 = scalar_select %p293, %s292, 63
        %s295 = smul.addr %s294, 4
        %s296 = scalar_lea.vmem %s3, %s295
        %p297 = pneg %p128
        %p298 = pneg %p125
        %p299 = pneg %p154
        %p300 = pneg %p151
        %s301 = smul.u32 32, %s19
        %p302 = scmp.lt.s32.totalorder %s301, 63
        %s303 = scalar_select %p302, %s301, 63
        %s304 = smul.addr %s303, 8
        %s305 = scalar_lea.vmem %s4, %s304
        %s306 = smul.u32 32, %s19
        %p307 = scmp.lt.s32.totalorder %s306, 63
        %s308 = scalar_select %p307, %s306, 63
        %s309 = smul.addr %s308, 8
        %s310 = scalar_lea.vmem %s0, %s309
        %s311 = smul.u32 32, %s19
        %s312 = smul.u32 2, %s20
        %p313 = scmp.lt.s32.totalorder %s312, 3
        %s314 = scalar_select %p313, %s312, 3
        %s315 = scalar_lea.vmem %s1, %s314
        %s316 = smul.u32 2, %s20
        %s317 = smul.u32 8, %s19
        %s318 = smul.u32 2, %s20
        %s319 = smul.u32 32, %s20
        %p320 = scmp.lt.s32.totalorder %s319, 63
        %s321 = scalar_select %p320, %s319, 63
        %s322 = smul.addr %s321, 4
        %s323 = scalar_lea.vmem %s3, %s322
        %s324 = smul.u32 32, %s20
        %s325 = smul.u32 32, %s19
        %p326 = scmp.lt.s32.totalorder %s325, 63
        %s327 = scalar_select %p326, %s325, 63
        %s328 = smul.addr %s327, 8
        %s329 = scalar_lea.vmem %s4, %s328
        %s330 = smul.u32 32, %s19
        %p333 = scmp.eq.s32.totalorder %s20, 0
        // Predicated region
        $region60: #{gat_layer.3} parent=54 // pred_check
          %p334 = pneg %p333
        $region61: #{gat_layer.3} parent=54 // pred_check_branch
          %336 = sbr.rel (%p334) target = $region63
        $region62: #{gat_layer.3} parent=54 // pred_region
          %vm337 = vcmask 7168
          %338 = vst.msk [vmem:[#allocation2] sm:$0xff] %vm337, -inf
          %339 = vst.msk [vmem:[#allocation2 + $0x8] sm:$0xff] %vm337, -inf
          %340 = vst.msk [vmem:[#allocation2 + $0x10] sm:$0xff] %vm337, -inf
          %341 = vst.msk [vmem:[#allocation2 + $0x18] sm:$0xff] %vm337, -inf
          %342 = vst.msk [vmem:[#allocation2 + $0x20] sm:$0xff] %vm337, -inf
          %343 = vst.msk [vmem:[#allocation2 + $0x28] sm:$0xff] %vm337, -inf
          %344 = vst.msk [vmem:[#allocation2 + $0x30] sm:$0xff] %vm337, -inf
          %345 = vst.msk [vmem:[#allocation2 + $0x38] sm:$0xff] %vm337, -inf
          %346 = vst.msk [vmem:[#allocation2 + $0x40] sm:$0xff] %vm337, -inf
          %347 = vst.msk [vmem:[#allocation2 + $0x48] sm:$0xff] %vm337, -inf
          %348 = vst.msk [vmem:[#allocation2 + $0x50] sm:$0xff] %vm337, -inf
          %349 = vst.msk [vmem:[#allocation2 + $0x58] sm:$0xff] %vm337, -inf
          %350 = vst.msk [vmem:[#allocation2 + $0x60] sm:$0xff] %vm337, -inf
          %351 = vst.msk [vmem:[#allocation2 + $0x68] sm:$0xff] %vm337, -inf
          %352 = vst.msk [vmem:[#allocation2 + $0x70] sm:$0xff] %vm337, -inf
          %353 = vst.msk [vmem:[#allocation2 + $0x78] sm:$0xff] %vm337, -inf
          %354 = vst.msk [vmem:[#allocation2 + $0x80] sm:$0xff] %vm337, -inf
          %355 = vst.msk [vmem:[#allocation2 + $0x88] sm:$0xff] %vm337, -inf
          %356 = vst.msk [vmem:[#allocation2 + $0x90] sm:$0xff] %vm337, -inf
          %357 = vst.msk [vmem:[#allocation2 + $0x98] sm:$0xff] %vm337, -inf
          %358 = vst.msk [vmem:[#allocation2 + $0xa0] sm:$0xff] %vm337, -inf
          %359 = vst.msk [vmem:[#allocation2 + $0xa8] sm:$0xff] %vm337, -inf
          %360 = vst.msk [vmem:[#allocation2 + $0xb0] sm:$0xff] %vm337, -inf
          %361 = vst.msk [vmem:[#allocation2 + $0xb8] sm:$0xff] %vm337, -inf
          %362 = vst.msk [vmem:[#allocation2 + $0xc0] sm:$0xff] %vm337, -inf
          %363 = vst.msk [vmem:[#allocation2 + $0xc8] sm:$0xff] %vm337, -inf
          %364 = vst.msk [vmem:[#allocation2 + $0xd0] sm:$0xff] %vm337, -inf
          %365 = vst.msk [vmem:[#allocation2 + $0xd8] sm:$0xff] %vm337, -inf
          %366 = vst.msk [vmem:[#allocation2 + $0xe0] sm:$0xff] %vm337, -inf
          %367 = vst.msk [vmem:[#allocation2 + $0xe8] sm:$0xff] %vm337, -inf
          %368 = vst.msk [vmem:[#allocation2 + $0xf0] sm:$0xff] %vm337, -inf
          %369 = vst.msk [vmem:[#allocation2 + $0xf8] sm:$0xff] %vm337, -inf
          %370 = vst.msk [vmem:[#allocation3] sm:$0xff] %vm337, 0.0
          %371 = vst.msk [vmem:[#allocation3 + $0x8] sm:$0xff] %vm337, 0.0
          %372 = vst.msk [vmem:[#allocation3 + $0x10] sm:$0xff] %vm337, 0.0
          %373 = vst.msk [vmem:[#allocation3 + $0x18] sm:$0xff] %vm337, 0.0
          %374 = vst.msk [vmem:[#allocation3 + $0x20] sm:$0xff] %vm337, 0.0
          %375 = vst.msk [vmem:[#allocation3 + $0x28] sm:$0xff] %vm337, 0.0
          %376 = vst.msk [vmem:[#allocation3 + $0x30] sm:$0xff] %vm337, 0.0
          %377 = vst.msk [vmem:[#allocation3 + $0x38] sm:$0xff] %vm337, 0.0
          %378 = vst.msk [vmem:[#allocation3 + $0x40] sm:$0xff] %vm337, 0.0
          %379 = vst.msk [vmem:[#allocation3 + $0x48] sm:$0xff] %vm337, 0.0
          %380 = vst.msk [vmem:[#allocation3 + $0x50] sm:$0xff] %vm337, 0.0
          %381 = vst.msk [vmem:[#allocation3 + $0x58] sm:$0xff] %vm337, 0.0
          %382 = vst.msk [vmem:[#allocation3 + $0x60] sm:$0xff] %vm337, 0.0
          %383 = vst.msk [vmem:[#allocation3 + $0x68] sm:$0xff] %vm337, 0.0
          %384 = vst.msk [vmem:[#allocation3 + $0x70] sm:$0xff] %vm337, 0.0
          %385 = vst.msk [vmem:[#allocation3 + $0x78] sm:$0xff] %vm337, 0.0
          %386 = vst.msk [vmem:[#allocation3 + $0x80] sm:$0xff] %vm337, 0.0
          %387 = vst.msk [vmem:[#allocation3 + $0x88] sm:$0xff] %vm337, 0.0
          %388 = vst.msk [vmem:[#allocation3 + $0x90] sm:$0xff] %vm337, 0.0
          %389 = vst.msk [vmem:[#allocation3 + $0x98] sm:$0xff] %vm337, 0.0
          %390 = vst.msk [vmem:[#allocation3 + $0xa0] sm:$0xff] %vm337, 0.0
          %391 = vst.msk [vmem:[#allocation3 + $0xa8] sm:$0xff] %vm337, 0.0
          %392 = vst.msk [vmem:[#allocation3 + $0xb0] sm:$0xff] %vm337, 0.0
          %393 = vst.msk [vmem:[#allocation3 + $0xb8] sm:$0xff] %vm337, 0.0
          %394 = vst.msk [vmem:[#allocation3 + $0xc0] sm:$0xff] %vm337, 0.0
          %395 = vst.msk [vmem:[#allocation3 + $0xc8] sm:$0xff] %vm337, 0.0
          %396 = vst.msk [vmem:[#allocation3 + $0xd0] sm:$0xff] %vm337, 0.0
          %397 = vst.msk [vmem:[#allocation3 + $0xd8] sm:$0xff] %vm337, 0.0
          %398 = vst.msk [vmem:[#allocation3 + $0xe0] sm:$0xff] %vm337, 0.0
          %399 = vst.msk [vmem:[#allocation3 + $0xe8] sm:$0xff] %vm337, 0.0
          %400 = vst.msk [vmem:[#allocation3 + $0xf0] sm:$0xff] %vm337, 0.0
          %401 = vst.msk [vmem:[#allocation3 + $0xf8] sm:$0xff] %vm337, 0.0
          %402 = vst [vmem:[#allocation4] sm:$0xff] 0.0
          %403 = vst [vmem:[#allocation4 + $0x8] sm:$0xff] 0.0
          %404 = vst [vmem:[#allocation4 + $0x10] sm:$0xff] 0.0
          %405 = vst [vmem:[#allocation4 + $0x18] sm:$0xff] 0.0
          %406 = vst [vmem:[#allocation4 + $0x20] sm:$0xff] 0.0
          %407 = vst [vmem:[#allocation4 + $0x28] sm:$0xff] 0.0
          %408 = vst [vmem:[#allocation4 + $0x30] sm:$0xff] 0.0
          %409 = vst [vmem:[#allocation4 + $0x38] sm:$0xff] 0.0
          %410 = vst [vmem:[#allocation4 + $0x40] sm:$0xff] 0.0
          %411 = vst [vmem:[#allocation4 + $0x48] sm:$0xff] 0.0
          %412 = vst [vmem:[#allocation4 + $0x50] sm:$0xff] 0.0
          %413 = vst [vmem:[#allocation4 + $0x58] sm:$0xff] 0.0
          %414 = vst [vmem:[#allocation4 + $0x60] sm:$0xff] 0.0
          %415 = vst [vmem:[#allocation4 + $0x68] sm:$0xff] 0.0
          %416 = vst [vmem:[#allocation4 + $0x70] sm:$0xff] 0.0
          %417 = vst [vmem:[#allocation4 + $0x78] sm:$0xff] 0.0
          %418 = vst [vmem:[#allocation4 + $0x80] sm:$0xff] 0.0
          %419 = vst [vmem:[#allocation4 + $0x88] sm:$0xff] 0.0
          %420 = vst [vmem:[#allocation4 + $0x90] sm:$0xff] 0.0
          %421 = vst [vmem:[#allocation4 + $0x98] sm:$0xff] 0.0
          %422 = vst [vmem:[#allocation4 + $0xa0] sm:$0xff] 0.0
          %423 = vst [vmem:[#allocation4 + $0xa8] sm:$0xff] 0.0
          %424 = vst [vmem:[#allocation4 + $0xb0] sm:$0xff] 0.0
          %425 = vst [vmem:[#allocation4 + $0xb8] sm:$0xff] 0.0
          %426 = vst [vmem:[#allocation4 + $0xc0] sm:$0xff] 0.0
          %427 = vst [vmem:[#allocation4 + $0xc8] sm:$0xff] 0.0
          %428 = vst [vmem:[#allocation4 + $0xd0] sm:$0xff] 0.0
          %429 = vst [vmem:[#allocation4 + $0xd8] sm:$0xff] 0.0
          %430 = vst [vmem:[#allocation4 + $0xe0] sm:$0xff] 0.0
          %431 = vst [vmem:[#allocation4 + $0xe8] sm:$0xff] 0.0
          %432 = vst [vmem:[#allocation4 + $0xf0] sm:$0xff] 0.0
          %433 = vst [vmem:[#allocation4 + $0xf8] sm:$0xff] 0.0
        $region63: #{gat_layer.3} parent=54 // pred_fallthru
          _
        %v434 = vld [vmem:[%s310] sm:$0xff]
        %v435 = vld [vmem:[%s310 + $0x8] sm:$0xff]
        %v436 = vld [vmem:[%s310 + $0x10] sm:$0xff]
        %v437 = vld [vmem:[%s310 + $0x18] sm:$0xff]
        %v438 = vld [vmem:[%s310 + $0x20] sm:$0xff]
        %v439 = vld [vmem:[%s310 + $0x28] sm:$0xff]
        %v440 = vld [vmem:[%s310 + $0x30] sm:$0xff]
        %v441 = vld [vmem:[%s310 + $0x38] sm:$0xff]
        %v442 = vld [vmem:[%s310 + $0x40] sm:$0xff]
        %v443 = vld [vmem:[%s310 + $0x48] sm:$0xff]
        %v444 = vld [vmem:[%s310 + $0x50] sm:$0xff]
        %v445 = vld [vmem:[%s310 + $0x58] sm:$0xff]
        %v446 = vld [vmem:[%s310 + $0x60] sm:$0xff]
        %v447 = vld [vmem:[%s310 + $0x68] sm:$0xff]
        %v448 = vld [vmem:[%s310 + $0x70] sm:$0xff]
        %v449 = vld [vmem:[%s310 + $0x78] sm:$0xff]
        %v450 = vld [vmem:[%s310 + $0x80] sm:$0xff]
        %v451 = vld [vmem:[%s310 + $0x88] sm:$0xff]
        %v452 = vld [vmem:[%s310 + $0x90] sm:$0xff]
        %v453 = vld [vmem:[%s310 + $0x98] sm:$0xff]
        %v454 = vld [vmem:[%s310 + $0xa0] sm:$0xff]
        %v455 = vld [vmem:[%s310 + $0xa8] sm:$0xff]
        %v456 = vld [vmem:[%s310 + $0xb0] sm:$0xff]
        %v457 = vld [vmem:[%s310 + $0xb8] sm:$0xff]
        %v458 = vld [vmem:[%s310 + $0xc0] sm:$0xff]
        %v459 = vld [vmem:[%s310 + $0xc8] sm:$0xff]
        %v460 = vld [vmem:[%s310 + $0xd0] sm:$0xff]
        %v461 = vld [vmem:[%s310 + $0xd8] sm:$0xff]
        %v462 = vld [vmem:[%s310 + $0xe0] sm:$0xff]
        %v463 = vld [vmem:[%s310 + $0xe8] sm:$0xff]
        %v464 = vld [vmem:[%s310 + $0xf0] sm:$0xff]
        %v465 = vld [vmem:[%s310 + $0xf8] sm:$0xff]
        %v466 = vld [vmem:[%s315] sm:$0x3]
        %468 = vset.pattern.permute.xlu0 0
        %469 = vperm.xlu0 %468, %v434
        %v470 = vpop.permute.xlu0 %469
        %473 = vset.pattern.permute.xlu0 0
        %474 = vperm.xlu0 %473, %v435
        %v475 = vpop.permute.xlu0 %474
        %478 = vset.pattern.permute.xlu0 0
        %479 = vperm.xlu0 %478, %v436
        %v480 = vpop.permute.xlu0 %479
        %483 = vset.pattern.permute.xlu0 0
        %484 = vperm.xlu0 %483, %v437
        %v485 = vpop.permute.xlu0 %484
        %488 = vset.pattern.permute.xlu0 0
        %489 = vperm.xlu0 %488, %v438
        %v490 = vpop.permute.xlu0 %489
        %493 = vset.pattern.permute.xlu0 0
        %494 = vperm.xlu0 %493, %v439
        %v495 = vpop.permute.xlu0 %494
        %498 = vset.pattern.permute.xlu0 0
        %499 = vperm.xlu0 %498, %v440
        %v500 = vpop.permute.xlu0 %499
        %503 = vset.pattern.permute.xlu0 0
        %504 = vperm.xlu0 %503, %v441
        %v505 = vpop.permute.xlu0 %504
        %508 = vset.pattern.permute.xlu0 0
        %509 = vperm.xlu0 %508, %v442
        %v510 = vpop.permute.xlu0 %509
        %513 = vset.pattern.permute.xlu0 0
        %514 = vperm.xlu0 %513, %v443
        %v515 = vpop.permute.xlu0 %514
        %518 = vset.pattern.permute.xlu0 0
        %519 = vperm.xlu0 %518, %v444
        %v520 = vpop.permute.xlu0 %519
        %523 = vset.pattern.permute.xlu0 0
        %524 = vperm.xlu0 %523, %v445
        %v525 = vpop.permute.xlu0 %524
        %528 = vset.pattern.permute.xlu0 0
        %529 = vperm.xlu0 %528, %v446
        %v530 = vpop.permute.xlu0 %529
        %533 = vset.pattern.permute.xlu0 0
        %534 = vperm.xlu0 %533, %v447
        %v535 = vpop.permute.xlu0 %534
        %538 = vset.pattern.permute.xlu0 0
        %539 = vperm.xlu0 %538, %v448
        %v540 = vpop.permute.xlu0 %539
        %543 = vset.pattern.permute.xlu0 0
        %544 = vperm.xlu0 %543, %v449
        %v545 = vpop.permute.xlu0 %544
        %548 = vset.pattern.permute.xlu0 0
        %549 = vperm.xlu0 %548, %v450
        %v550 = vpop.permute.xlu0 %549
        %553 = vset.pattern.permute.xlu0 0
        %554 = vperm.xlu0 %553, %v451
        %v555 = vpop.permute.xlu0 %554
        %558 = vset.pattern.permute.xlu0 0
        %559 = vperm.xlu0 %558, %v452
        %v560 = vpop.permute.xlu0 %559
        %563 = vset.pattern.permute.xlu0 0
        %564 = vperm.xlu0 %563, %v453
        %v565 = vpop.permute.xlu0 %564
        %568 = vset.pattern.permute.xlu0 0
        %569 = vperm.xlu0 %568, %v454
        %v570 = vpop.permute.xlu0 %569
        %573 = vset.pattern.permute.xlu0 0
        %574 = vperm.xlu0 %573, %v455
        %v575 = vpop.permute.xlu0 %574
        %578 = vset.pattern.permute.xlu0 0
        %579 = vperm.xlu0 %578, %v456
        %v580 = vpop.permute.xlu0 %579
        %583 = vset.pattern.permute.xlu0 0
        %584 = vperm.xlu0 %583, %v457
        %v585 = vpop.permute.xlu0 %584
        %588 = vset.pattern.permute.xlu0 0
        %589 = vperm.xlu0 %588, %v458
        %v590 = vpop.permute.xlu0 %589
        %593 = vset.pattern.permute.xlu0 0
        %594 = vperm.xlu0 %593, %v459
        %v595 = vpop.permute.xlu0 %594
        %598 = vset.pattern.permute.xlu0 0
        %599 = vperm.xlu0 %598, %v460
        %v600 = vpop.permute.xlu0 %599
        %603 = vset.pattern.permute.xlu0 0
        %604 = vperm.xlu0 %603, %v461
        %v605 = vpop.permute.xlu0 %604
        %608 = vset.pattern.permute.xlu0 0
        %609 = vperm.xlu0 %608, %v462
        %v610 = vpop.permute.xlu0 %609
        %613 = vset.pattern.permute.xlu0 0
        %614 = vperm.xlu0 %613, %v463
        %v615 = vpop.permute.xlu0 %614
        %618 = vset.pattern.permute.xlu0 0
        %619 = vperm.xlu0 %618, %v464
        %v620 = vpop.permute.xlu0 %619
        %623 = vset.pattern.permute.xlu0 0
        %624 = vperm.xlu0 %623, %v465
        %v625 = vpop.permute.xlu0 %624
        %v628 = vperm.slane %v466, 0
        %v629 = vperm.slane %v466, 1
        %v632 = vadd.f32 %v470, %v628
        %v633 = vadd.f32 %v470, %v629
        %v634 = vadd.f32 %v475, %v628
        %v635 = vadd.f32 %v475, %v629
        %v636 = vadd.f32 %v480, %v628
        %v637 = vadd.f32 %v480, %v629
        %v638 = vadd.f32 %v485, %v628
        %v639 = vadd.f32 %v485, %v629
        %v640 = vadd.f32 %v490, %v628
        %v641 = vadd.f32 %v490, %v629
        %v642 = vadd.f32 %v495, %v628
        %v643 = vadd.f32 %v495, %v629
        %v644 = vadd.f32 %v500, %v628
        %v645 = vadd.f32 %v500, %v629
        %v646 = vadd.f32 %v505, %v628
        %v647 = vadd.f32 %v505, %v629
        %v648 = vadd.f32 %v510, %v628
        %v649 = vadd.f32 %v510, %v629
        %v650 = vadd.f32 %v515, %v628
        %v651 = vadd.f32 %v515, %v629
        %v652 = vadd.f32 %v520, %v628
        %v653 = vadd.f32 %v520, %v629
        %v654 = vadd.f32 %v525, %v628
        %v655 = vadd.f32 %v525, %v629
        %v656 = vadd.f32 %v530, %v628
        %v657 = vadd.f32 %v530, %v629
        %v658 = vadd.f32 %v535, %v628
        %v659 = vadd.f32 %v535, %v629
        %v660 = vadd.f32 %v540, %v628
        %v661 = vadd.f32 %v540, %v629
        %v662 = vadd.f32 %v545, %v628
        %v663 = vadd.f32 %v545, %v629
        %v664 = vadd.f32 %v550, %v628
        %v665 = vadd.f32 %v550, %v629
        %v666 = vadd.f32 %v555, %v628
        %v667 = vadd.f32 %v555, %v629
        %v668 = vadd.f32 %v560, %v628
        %v669 = vadd.f32 %v560, %v629
        %v670 = vadd.f32 %v565, %v628
        %v671 = vadd.f32 %v565, %v629
        %v672 = vadd.f32 %v570, %v628
        %v673 = vadd.f32 %v570, %v629
        %v674 = vadd.f32 %v575, %v628
        %v675 = vadd.f32 %v575, %v629
        %v676 = vadd.f32 %v580, %v628
        %v677 = vadd.f32 %v580, %v629
        %v678 = vadd.f32 %v585, %v628
        %v679 = vadd.f32 %v585, %v629
        %v680 = vadd.f32 %v590, %v628
        %v681 = vadd.f32 %v590, %v629
        %v682 = vadd.f32 %v595, %v628
        %v683 = vadd.f32 %v595, %v629
        %v684 = vadd.f32 %v600, %v628
        %v685 = vadd.f32 %v600, %v629
        %v686 = vadd.f32 %v605, %v628
        %v687 = vadd.f32 %v605, %v629
        %v688 = vadd.f32 %v610, %v628
        %v689 = vadd.f32 %v610, %v629
        %v690 = vadd.f32 %v615, %v628
        %v691 = vadd.f32 %v615, %v629
        %v692 = vadd.f32 %v620, %v628
        %v693 = vadd.f32 %v620, %v629
        %v694 = vadd.f32 %v625, %v628
        %v695 = vadd.f32 %v625, %v629
        %v696 = vmul.f32 %v632, 0.01
        %v697 = vmul.f32 %v633, 0.01
        %v698 = vmul.f32 %v634, 0.01
        %v699 = vmul.f32 %v635, 0.01
        %v700 = vmul.f32 %v636, 0.01
        %v701 = vmul.f32 %v637, 0.01
        %v702 = vmul.f32 %v638, 0.01
        %v703 = vmul.f32 %v639, 0.01
        %v704 = vmul.f32 %v640, 0.01
        %v705 = vmul.f32 %v641, 0.01
        %v706 = vmul.f32 %v642, 0.01
        %v707 = vmul.f32 %v643, 0.01
        %v708 = vmul.f32 %v644, 0.01
        %v709 = vmul.f32 %v645, 0.01
        %v710 = vmul.f32 %v646, 0.01
        %v711 = vmul.f32 %v647, 0.01
        %v712 = vmul.f32 %v648, 0.01
        %v713 = vmul.f32 %v649, 0.01
        %v714 = vmul.f32 %v650, 0.01
        %v715 = vmul.f32 %v651, 0.01
        %v716 = vmul.f32 %v652, 0.01
        %v717 = vmul.f32 %v653, 0.01
        %v718 = vmul.f32 %v654, 0.01
        %v719 = vmul.f32 %v655, 0.01
        %v720 = vmul.f32 %v656, 0.01
        %v721 = vmul.f32 %v657, 0.01
        %v722 = vmul.f32 %v658, 0.01
        %v723 = vmul.f32 %v659, 0.01
        %v724 = vmul.f32 %v660, 0.01
        %v725 = vmul.f32 %v661, 0.01
        %v726 = vmul.f32 %v662, 0.01
        %v727 = vmul.f32 %v663, 0.01
        %v728 = vmul.f32 %v664, 0.01
        %v729 = vmul.f32 %v665, 0.01
        %v730 = vmul.f32 %v666, 0.01
        %v731 = vmul.f32 %v667, 0.01
        %v732 = vmul.f32 %v668, 0.01
        %v733 = vmul.f32 %v669, 0.01
        %v734 = vmul.f32 %v670, 0.01
        %v735 = vmul.f32 %v671, 0.01
        %v736 = vmul.f32 %v672, 0.01
        %v737 = vmul.f32 %v673, 0.01
        %v738 = vmul.f32 %v674, 0.01
        %v739 = vmul.f32 %v675, 0.01
        %v740 = vmul.f32 %v676, 0.01
        %v741 = vmul.f32 %v677, 0.01
        %v742 = vmul.f32 %v678, 0.01
        %v743 = vmul.f32 %v679, 0.01
        %v744 = vmul.f32 %v680, 0.01
        %v745 = vmul.f32 %v681, 0.01
        %v746 = vmul.f32 %v682, 0.01
        %v747 = vmul.f32 %v683, 0.01
        %v748 = vmul.f32 %v684, 0.01
        %v749 = vmul.f32 %v685, 0.01
        %v750 = vmul.f32 %v686, 0.01
        %v751 = vmul.f32 %v687, 0.01
        %v752 = vmul.f32 %v688, 0.01
        %v753 = vmul.f32 %v689, 0.01
        %v754 = vmul.f32 %v690, 0.01
        %v755 = vmul.f32 %v691, 0.01
        %v756 = vmul.f32 %v692, 0.01
        %v757 = vmul.f32 %v693, 0.01
        %v758 = vmul.f32 %v694, 0.01
        %v759 = vmul.f32 %v695, 0.01
        %v760 = vmax.f32 %v632, %v696
        %v761 = vmax.f32 %v633, %v697
        %v762 = vmax.f32 %v634, %v698
        %v763 = vmax.f32 %v635, %v699
        %v764 = vmax.f32 %v636, %v700
        %v765 = vmax.f32 %v637, %v701
        %v766 = vmax.f32 %v638, %v702
        %v767 = vmax.f32 %v639, %v703
        %v768 = vmax.f32 %v640, %v704
        %v769 = vmax.f32 %v641, %v705
        %v770 = vmax.f32 %v642, %v706
        %v771 = vmax.f32 %v643, %v707
        %v772 = vmax.f32 %v644, %v708
        %v773 = vmax.f32 %v645, %v709
        %v774 = vmax.f32 %v646, %v710
        %v775 = vmax.f32 %v647, %v711
        %v776 = vmax.f32 %v648, %v712
        %v777 = vmax.f32 %v649, %v713
        %v778 = vmax.f32 %v650, %v714
        %v779 = vmax.f32 %v651, %v715
        %v780 = vmax.f32 %v652, %v716
        %v781 = vmax.f32 %v653, %v717
        %v782 = vmax.f32 %v654, %v718
        %v783 = vmax.f32 %v655, %v719
        %v784 = vmax.f32 %v656, %v720
        %v785 = vmax.f32 %v657, %v721
        %v786 = vmax.f32 %v658, %v722
        %v787 = vmax.f32 %v659, %v723
        %v788 = vmax.f32 %v660, %v724
        %v789 = vmax.f32 %v661, %v725
        %v790 = vmax.f32 %v662, %v726
        %v791 = vmax.f32 %v663, %v727
        %v792 = vmax.f32 %v664, %v728
        %v793 = vmax.f32 %v665, %v729
        %v794 = vmax.f32 %v666, %v730
        %v795 = vmax.f32 %v667, %v731
        %v796 = vmax.f32 %v668, %v732
        %v797 = vmax.f32 %v669, %v733
        %v798 = vmax.f32 %v670, %v734
        %v799 = vmax.f32 %v671, %v735
        %v800 = vmax.f32 %v672, %v736
        %v801 = vmax.f32 %v673, %v737
        %v802 = vmax.f32 %v674, %v738
        %v803 = vmax.f32 %v675, %v739
        %v804 = vmax.f32 %v676, %v740
        %v805 = vmax.f32 %v677, %v741
        %v806 = vmax.f32 %v678, %v742
        %v807 = vmax.f32 %v679, %v743
        %v808 = vmax.f32 %v680, %v744
        %v809 = vmax.f32 %v681, %v745
        %v810 = vmax.f32 %v682, %v746
        %v811 = vmax.f32 %v683, %v747
        %v812 = vmax.f32 %v684, %v748
        %v813 = vmax.f32 %v685, %v749
        %v814 = vmax.f32 %v686, %v750
        %v815 = vmax.f32 %v687, %v751
        %v816 = vmax.f32 %v688, %v752
        %v817 = vmax.f32 %v689, %v753
        %v818 = vmax.f32 %v690, %v754
        %v819 = vmax.f32 %v691, %v755
        %v820 = vmax.f32 %v692, %v756
        %v821 = vmax.f32 %v693, %v757
        %v822 = vmax.f32 %v694, %v758
        %v823 = vmax.f32 %v695, %v759
        %v824 = vld [vmem:[%s269] sm:$0xff]
        %v825 = vld [vmem:[%s269 + $0x8] sm:$0xff]
        %v826 = vld [vmem:[%s269 + $0x10] sm:$0xff]
        %v827 = vld [vmem:[%s269 + $0x18] sm:$0xff]
        %v828 = vld [vmem:[%s269 + $0x20] sm:$0xff]
        %v829 = vld [vmem:[%s269 + $0x28] sm:$0xff]
        %v830 = vld [vmem:[%s269 + $0x30] sm:$0xff]
        %v831 = vld [vmem:[%s269 + $0x38] sm:$0xff]
        %v832 = vld [vmem:[%s269 + $0x40] sm:$0xff]
        %v833 = vld [vmem:[%s269 + $0x48] sm:$0xff]
        %v834 = vld [vmem:[%s269 + $0x50] sm:$0xff]
        %v835 = vld [vmem:[%s269 + $0x58] sm:$0xff]
        %v836 = vld [vmem:[%s269 + $0x60] sm:$0xff]
        %v837 = vld [vmem:[%s269 + $0x68] sm:$0xff]
        %v838 = vld [vmem:[%s269 + $0x70] sm:$0xff]
        %v839 = vld [vmem:[%s269 + $0x78] sm:$0xff]
        %vm840 = vnez %v824
        %vm841 = vnez %v825
        %vm842 = vnez %v826
        %vm843 = vnez %v827
        %vm844 = vnez %v828
        %vm845 = vnez %v829
        %vm846 = vnez %v830
        %vm847 = vnez %v831
        %vm848 = vnez %v832
        %vm849 = vnez %v833
        %vm850 = vnez %v834
        %vm851 = vnez %v835
        %vm852 = vnez %v836
        %vm853 = vnez %v837
        %vm854 = vnez %v838
        %vm855 = vnez %v839
        %v856 = vsel %vm840, 16843009, 0
        %v857 = vsel %vm841, 16843009, 0
        %v858 = vsel %vm842, 16843009, 0
        %v859 = vsel %vm843, 16843009, 0
        %v860 = vsel %vm844, 16843009, 0
        %v861 = vsel %vm845, 16843009, 0
        %v862 = vsel %vm846, 16843009, 0
        %v863 = vsel %vm847, 16843009, 0
        %v864 = vsel %vm848, 16843009, 0
        %v865 = vsel %vm849, 16843009, 0
        %v866 = vsel %vm850, 16843009, 0
        %v867 = vsel %vm851, 16843009, 0
        %v868 = vsel %vm852, 16843009, 0
        %v869 = vsel %vm853, 16843009, 0
        %v870 = vsel %vm854, 16843009, 0
        %v871 = vsel %vm855, 16843009, 0
        %v872 = vunpack.c.0.s8 %v856
        %v873 = vunpack.c.0.s8 %v857
        %v874 = vunpack.c.1.s8 %v856
        %v875 = vunpack.c.1.s8 %v857
        %v876 = vunpack.c.2.s8 %v856
        %v877 = vunpack.c.2.s8 %v857
        %v878 = vunpack.c.3.s8 %v856
        %v879 = vunpack.c.3.s8 %v857
        %v880 = vunpack.c.0.s8 %v858
        %v881 = vunpack.c.0.s8 %v859
        %v882 = vunpack.c.1.s8 %v858
        %v883 = vunpack.c.1.s8 %v859
        %v884 = vunpack.c.2.s8 %v858
        %v885 = vunpack.c.2.s8 %v859
        %v886 = vunpack.c.3.s8 %v858
        %v887 = vunpack.c.3.s8 %v859
        %v888 = vunpack.c.0.s8 %v860
        %v889 = vunpack.c.0.s8 %v861
        %v890 = vunpack.c.1.s8 %v860
        %v891 = vunpack.c.1.s8 %v861
        %v892 = vunpack.c.2.s8 %v860
        %v893 = vunpack.c.2.s8 %v861
        %v894 = vunpack.c.3.s8 %v860
        %v895 = vunpack.c.3.s8 %v861
        %v896 = vunpack.c.0.s8 %v862
        %v897 = vunpack.c.0.s8 %v863
        %v898 = vunpack.c.1.s8 %v862
        %v899 = vunpack.c.1.s8 %v863
        %v900 = vunpack.c.2.s8 %v862
        %v901 = vunpack.c.2.s8 %v863
        %v902 = vunpack.c.3.s8 %v862
        %v903 = vunpack.c.3.s8 %v863
        %v904 = vunpack.c.0.s8 %v864
        %v905 = vunpack.c.0.s8 %v865
        %v906 = vunpack.c.1.s8 %v864
        %v907 = vunpack.c.1.s8 %v865
        %v908 = vunpack.c.2.s8 %v864
        %v909 = vunpack.c.2.s8 %v865
        %v910 = vunpack.c.3.s8 %v864
        %v911 = vunpack.c.3.s8 %v865
        %v912 = vunpack.c.0.s8 %v866
        %v913 = vunpack.c.0.s8 %v867
        %v914 = vunpack.c.1.s8 %v866
        %v915 = vunpack.c.1.s8 %v867
        %v916 = vunpack.c.2.s8 %v866
        %v917 = vunpack.c.2.s8 %v867
        %v918 = vunpack.c.3.s8 %v866
        %v919 = vunpack.c.3.s8 %v867
        %v920 = vunpack.c.0.s8 %v868
        %v921 = vunpack.c.0.s8 %v869
        %v922 = vunpack.c.1.s8 %v868
        %v923 = vunpack.c.1.s8 %v869
        %v924 = vunpack.c.2.s8 %v868
        %v925 = vunpack.c.2.s8 %v869
        %v926 = vunpack.c.3.s8 %v868
        %v927 = vunpack.c.3.s8 %v869
        %v928 = vunpack.c.0.s8 %v870
        %v929 = vunpack.c.0.s8 %v871
        %v930 = vunpack.c.1.s8 %v870
        %v931 = vunpack.c.1.s8 %v871
        %v932 = vunpack.c.2.s8 %v870
        %v933 = vunpack.c.2.s8 %v871
        %v934 = vunpack.c.3.s8 %v870
        %v935 = vunpack.c.3.s8 %v871
        %v936 = vpack.c.b16 %v873, %v872
        %v937 = vpack.c.b8 %v936, %v936
        %v938 = vpack.c.b16 %v875, %v874
        %v939 = vpack.c.b8 %v938, %v938
        %v940 = vpack.c.b16 %v877, %v876
        %v941 = vpack.c.b8 %v940, %v940
        %v942 = vpack.c.b16 %v879, %v878
        %v943 = vpack.c.b8 %v942, %v942
        %v944 = vpack.c.b16 %v881, %v880
        %v945 = vpack.c.b8 %v944, %v944
        %v946 = vpack.c.b16 %v883, %v882
        %v947 = vpack.c.b8 %v946, %v946
        %v948 = vpack.c.b16 %v885, %v884
        %v949 = vpack.c.b8 %v948, %v948
        %v950 = vpack.c.b16 %v887, %v886
        %v951 = vpack.c.b8 %v950, %v950
        %v952 = vpack.c.b16 %v889, %v888
        %v953 = vpack.c.b8 %v952, %v952
        %v954 = vpack.c.b16 %v891, %v890
        %v955 = vpack.c.b8 %v954, %v954
        %v956 = vpack.c.b16 %v893, %v892
        %v957 = vpack.c.b8 %v956, %v956
        %v958 = vpack.c.b16 %v895, %v894
        %v959 = vpack.c.b8 %v958, %v958
        %v960 = vpack.c.b16 %v897, %v896
        %v961 = vpack.c.b8 %v960, %v960
        %v962 = vpack.c.b16 %v899, %v898
        %v963 = vpack.c.b8 %v962, %v962
        %v964 = vpack.c.b16 %v901, %v900
        %v965 = vpack.c.b8 %v964, %v964
        %v966 = vpack.c.b16 %v903, %v902
        %v967 = vpack.c.b8 %v966, %v966
        %v968 = vpack.c.b16 %v905, %v904
        %v969 = vpack.c.b8 %v968, %v968
        %v970 = vpack.c.b16 %v907, %v906
        %v971 = vpack.c.b8 %v970, %v970
        %v972 = vpack.c.b16 %v909, %v908
        %v973 = vpack.c.b8 %v972, %v972
        %v974 = vpack.c.b16 %v911, %v910
        %v975 = vpack.c.b8 %v974, %v974
        %v976 = vpack.c.b16 %v913, %v912
        %v977 = vpack.c.b8 %v976, %v976
        %v978 = vpack.c.b16 %v915, %v914
        %v979 = vpack.c.b8 %v978, %v978
        %v980 = vpack.c.b16 %v917, %v916
        %v981 = vpack.c.b8 %v980, %v980
        %v982 = vpack.c.b16 %v919, %v918
        %v983 = vpack.c.b8 %v982, %v982
        %v984 = vpack.c.b16 %v921, %v920
        %v985 = vpack.c.b8 %v984, %v984
        %v986 = vpack.c.b16 %v923, %v922
        %v987 = vpack.c.b8 %v986, %v986
        %v988 = vpack.c.b16 %v925, %v924
        %v989 = vpack.c.b8 %v988, %v988
        %v990 = vpack.c.b16 %v927, %v926
        %v991 = vpack.c.b8 %v990, %v990
        %v992 = vpack.c.b16 %v929, %v928
        %v993 = vpack.c.b8 %v992, %v992
        %v994 = vpack.c.b16 %v931, %v930
        %v995 = vpack.c.b8 %v994, %v994
        %v996 = vpack.c.b16 %v933, %v932
        %v997 = vpack.c.b8 %v996, %v996
        %v998 = vpack.c.b16 %v935, %v934
        %v999 = vpack.c.b8 %v998, %v998
        %vm1000 = vnez %v937
        %vm1001 = vnez %v939
        %vm1002 = vnez %v941
        %vm1003 = vnez %v943
        %vm1004 = vnez %v945
        %vm1005 = vnez %v947
        %vm1006 = vnez %v949
        %vm1007 = vnez %v951
        %vm1008 = vnez %v953
        %vm1009 = vnez %v955
        %vm1010 = vnez %v957
        %vm1011 = vnez %v959
        %vm1012 = vnez %v961
        %vm1013 = vnez %v963
        %vm1014 = vnez %v965
        %vm1015 = vnez %v967
        %vm1016 = vnez %v969
        %vm1017 = vnez %v971
        %vm1018 = vnez %v973
        %vm1019 = vnez %v975
        %vm1020 = vnez %v977
        %vm1021 = vnez %v979
        %vm1022 = vnez %v981
        %vm1023 = vnez %v983
        %vm1024 = vnez %v985
        %vm1025 = vnez %v987
        %vm1026 = vnez %v989
        %vm1027 = vnez %v991
        %vm1028 = vnez %v993
        %vm1029 = vnez %v995
        %vm1030 = vnez %v997
        %vm1031 = vnez %v999
        %v1032 = vsel %vm1000, 16843009, 0
        %v1033 = vsel %vm1001, 16843009, 0
        %v1034 = vsel %vm1002, 16843009, 0
        %v1035 = vsel %vm1003, 16843009, 0
        %v1036 = vsel %vm1004, 16843009, 0
        %v1037 = vsel %vm1005, 16843009, 0
        %v1038 = vsel %vm1006, 16843009, 0
        %v1039 = vsel %vm1007, 16843009, 0
        %v1040 = vsel %vm1008, 16843009, 0
        %v1041 = vsel %vm1009, 16843009, 0
        %v1042 = vsel %vm1010, 16843009, 0
        %v1043 = vsel %vm1011, 16843009, 0
        %v1044 = vsel %vm1012, 16843009, 0
        %v1045 = vsel %vm1013, 16843009, 0
        %v1046 = vsel %vm1014, 16843009, 0
        %v1047 = vsel %vm1015, 16843009, 0
        %v1048 = vsel %vm1016, 16843009, 0
        %v1049 = vsel %vm1017, 16843009, 0
        %v1050 = vsel %vm1018, 16843009, 0
        %v1051 = vsel %vm1019, 16843009, 0
        %v1052 = vsel %vm1020, 16843009, 0
        %v1053 = vsel %vm1021, 16843009, 0
        %v1054 = vsel %vm1022, 16843009, 0
        %v1055 = vsel %vm1023, 16843009, 0
        %v1056 = vsel %vm1024, 16843009, 0
        %v1057 = vsel %vm1025, 16843009, 0
        %v1058 = vsel %vm1026, 16843009, 0
        %v1059 = vsel %vm1027, 16843009, 0
        %v1060 = vsel %vm1028, 16843009, 0
        %v1061 = vsel %vm1029, 16843009, 0
        %v1062 = vsel %vm1030, 16843009, 0
        %v1063 = vsel %vm1031, 16843009, 0
        %v1064 = vunpack.c.0.s8 %v1032
        %v1065 = vunpack.c.1.s8 %v1032
        %v1066 = vunpack.c.0.s8 %v1033
        %v1067 = vunpack.c.1.s8 %v1033
        %v1068 = vunpack.c.0.s8 %v1034
        %v1069 = vunpack.c.1.s8 %v1034
        %v1070 = vunpack.c.0.s8 %v1035
        %v1071 = vunpack.c.1.s8 %v1035
        %v1072 = vunpack.c.0.s8 %v1036
        %v1073 = vunpack.c.1.s8 %v1036
        %v1074 = vunpack.c.0.s8 %v1037
        %v1075 = vunpack.c.1.s8 %v1037
        %v1076 = vunpack.c.0.s8 %v1038
        %v1077 = vunpack.c.1.s8 %v1038
        %v1078 = vunpack.c.0.s8 %v1039
        %v1079 = vunpack.c.1.s8 %v1039
        %v1080 = vunpack.c.0.s8 %v1040
        %v1081 = vunpack.c.1.s8 %v1040
        %v1082 = vunpack.c.0.s8 %v1041
        %v1083 = vunpack.c.1.s8 %v1041
        %v1084 = vunpack.c.0.s8 %v1042
        %v1085 = vunpack.c.1.s8 %v1042
        %v1086 = vunpack.c.0.s8 %v1043
        %v1087 = vunpack.c.1.s8 %v1043
        %v1088 = vunpack.c.0.s8 %v1044
        %v1089 = vunpack.c.1.s8 %v1044
        %v1090 = vunpack.c.0.s8 %v1045
        %v1091 = vunpack.c.1.s8 %v1045
        %v1092 = vunpack.c.0.s8 %v1046
        %v1093 = vunpack.c.1.s8 %v1046
        %v1094 = vunpack.c.0.s8 %v1047
        %v1095 = vunpack.c.1.s8 %v1047
        %v1096 = vunpack.c.0.s8 %v1048
        %v1097 = vunpack.c.1.s8 %v1048
        %v1098 = vunpack.c.0.s8 %v1049
        %v1099 = vunpack.c.1.s8 %v1049
        %v1100 = vunpack.c.0.s8 %v1050
        %v1101 = vunpack.c.1.s8 %v1050
        %v1102 = vunpack.c.0.s8 %v1051
        %v1103 = vunpack.c.1.s8 %v1051
        %v1104 = vunpack.c.0.s8 %v1052
        %v1105 = vunpack.c.1.s8 %v1052
        %v1106 = vunpack.c.0.s8 %v1053
        %v1107 = vunpack.c.1.s8 %v1053
        %v1108 = vunpack.c.0.s8 %v1054
        %v1109 = vunpack.c.1.s8 %v1054
        %v1110 = vunpack.c.0.s8 %v1055
        %v1111 = vunpack.c.1.s8 %v1055
        %v1112 = vunpack.c.0.s8 %v1056
        %v1113 = vunpack.c.1.s8 %v1056
        %v1114 = vunpack.c.0.s8 %v1057
        %v1115 = vunpack.c.1.s8 %v1057
        %v1116 = vunpack.c.0.s8 %v1058
        %v1117 = vunpack.c.1.s8 %v1058
        %v1118 = vunpack.c.0.s8 %v1059
        %v1119 = vunpack.c.1.s8 %v1059
        %v1120 = vunpack.c.0.s8 %v1060
        %v1121 = vunpack.c.1.s8 %v1060
        %v1122 = vunpack.c.0.s8 %v1061
        %v1123 = vunpack.c.1.s8 %v1061
        %v1124 = vunpack.c.0.s8 %v1062
        %v1125 = vunpack.c.1.s8 %v1062
        %v1126 = vunpack.c.0.s8 %v1063
        %v1127 = vunpack.c.1.s8 %v1063
        %vm1128 = vcmp.ne.s32.totalorder %v1064, 0
        %vm1129 = vcmp.ne.s32.totalorder %v1065, 0
        %vm1130 = vcmp.ne.s32.totalorder %v1066, 0
        %vm1131 = vcmp.ne.s32.totalorder %v1067, 0
        %vm1132 = vcmp.ne.s32.totalorder %v1068, 0
        %vm1133 = vcmp.ne.s32.totalorder %v1069, 0
        %vm1134 = vcmp.ne.s32.totalorder %v1070, 0
        %vm1135 = vcmp.ne.s32.totalorder %v1071, 0
        %vm1136 = vcmp.ne.s32.totalorder %v1072, 0
        %vm1137 = vcmp.ne.s32.totalorder %v1073, 0
        %vm1138 = vcmp.ne.s32.totalorder %v1074, 0
        %vm1139 = vcmp.ne.s32.totalorder %v1075, 0
        %vm1140 = vcmp.ne.s32.totalorder %v1076, 0
        %vm1141 = vcmp.ne.s32.totalorder %v1077, 0
        %vm1142 = vcmp.ne.s32.totalorder %v1078, 0
        %vm1143 = vcmp.ne.s32.totalorder %v1079, 0
        %vm1144 = vcmp.ne.s32.totalorder %v1080, 0
        %vm1145 = vcmp.ne.s32.totalorder %v1081, 0
        %vm1146 = vcmp.ne.s32.totalorder %v1082, 0
        %vm1147 = vcmp.ne.s32.totalorder %v1083, 0
        %vm1148 = vcmp.ne.s32.totalorder %v1084, 0
        %vm1149 = vcmp.ne.s32.totalorder %v1085, 0
        %vm1150 = vcmp.ne.s32.totalorder %v1086, 0
        %vm1151 = vcmp.ne.s32.totalorder %v1087, 0
        %vm1152 = vcmp.ne.s32.totalorder %v1088, 0
        %vm1153 = vcmp.ne.s32.totalorder %v1089, 0
        %vm1154 = vcmp.ne.s32.totalorder %v1090, 0
        %vm1155 = vcmp.ne.s32.totalorder %v1091, 0
        %vm1156 = vcmp.ne.s32.totalorder %v1092, 0
        %vm1157 = vcmp.ne.s32.totalorder %v1093, 0
        %vm1158 = vcmp.ne.s32.totalorder %v1094, 0
        %vm1159 = vcmp.ne.s32.totalorder %v1095, 0
        %vm1160 = vcmp.ne.s32.totalorder %v1096, 0
        %vm1161 = vcmp.ne.s32.totalorder %v1097, 0
        %vm1162 = vcmp.ne.s32.totalorder %v1098, 0
        %vm1163 = vcmp.ne.s32.totalorder %v1099, 0
        %vm1164 = vcmp.ne.s32.totalorder %v1100, 0
        %vm1165 = vcmp.ne.s32.totalorder %v1101, 0
        %vm1166 = vcmp.ne.s32.totalorder %v1102, 0
        %vm1167 = vcmp.ne.s32.totalorder %v1103, 0
        %vm1168 = vcmp.ne.s32.totalorder %v1104, 0
        %vm1169 = vcmp.ne.s32.totalorder %v1105, 0
        %vm1170 = vcmp.ne.s32.totalorder %v1106, 0
        %vm1171 = vcmp.ne.s32.totalorder %v1107, 0
        %vm1172 = vcmp.ne.s32.totalorder %v1108, 0
        %vm1173 = vcmp.ne.s32.totalorder %v1109, 0
        %vm1174 = vcmp.ne.s32.totalorder %v1110, 0
        %vm1175 = vcmp.ne.s32.totalorder %v1111, 0
        %vm1176 = vcmp.ne.s32.totalorder %v1112, 0
        %vm1177 = vcmp.ne.s32.totalorder %v1113, 0
        %vm1178 = vcmp.ne.s32.totalorder %v1114, 0
        %vm1179 = vcmp.ne.s32.totalorder %v1115, 0
        %vm1180 = vcmp.ne.s32.totalorder %v1116, 0
        %vm1181 = vcmp.ne.s32.totalorder %v1117, 0
        %vm1182 = vcmp.ne.s32.totalorder %v1118, 0
        %vm1183 = vcmp.ne.s32.totalorder %v1119, 0
        %vm1184 = vcmp.ne.s32.totalorder %v1120, 0
        %vm1185 = vcmp.ne.s32.totalorder %v1121, 0
        %vm1186 = vcmp.ne.s32.totalorder %v1122, 0
        %vm1187 = vcmp.ne.s32.totalorder %v1123, 0
        %vm1188 = vcmp.ne.s32.totalorder %v1124, 0
        %vm1189 = vcmp.ne.s32.totalorder %v1125, 0
        %vm1190 = vcmp.ne.s32.totalorder %v1126, 0
        %vm1191 = vcmp.ne.s32.totalorder %v1127, 0
        %v1192 = vsel %vm1128, %v760, -9e+15
        %v1193 = vsel %vm1129, %v761, -9e+15
        %v1194 = vsel %vm1130, %v762, -9e+15
        %v1195 = vsel %vm1131, %v763, -9e+15
        %v1196 = vsel %vm1132, %v764, -9e+15
        %v1197 = vsel %vm1133, %v765, -9e+15
        %v1198 = vsel %vm1134, %v766, -9e+15
        %v1199 = vsel %vm1135, %v767, -9e+15
        %v1200 = vsel %vm1136, %v768, -9e+15
        %v1201 = vsel %vm1137, %v769, -9e+15
        %v1202 = vsel %vm1138, %v770, -9e+15
        %v1203 = vsel %vm1139, %v771, -9e+15
        %v1204 = vsel %vm1140, %v772, -9e+15
        %v1205 = vsel %vm1141, %v773, -9e+15
        %v1206 = vsel %vm1142, %v774, -9e+15
        %v1207 = vsel %vm1143, %v775, -9e+15
        %v1208 = vsel %vm1144, %v776, -9e+15
        %v1209 = vsel %vm1145, %v777, -9e+15
        %v1210 = vsel %vm1146, %v778, -9e+15
        %v1211 = vsel %vm1147, %v779, -9e+15
        %v1212 = vsel %vm1148, %v780, -9e+15
        %v1213 = vsel %vm1149, %v781, -9e+15
        %v1214 = vsel %vm1150, %v782, -9e+15
        %v1215 = vsel %vm1151, %v783, -9e+15
        %v1216 = vsel %vm1152, %v784, -9e+15
        %v1217 = vsel %vm1153, %v785, -9e+15
        %v1218 = vsel %vm1154, %v786, -9e+15
        %v1219 = vsel %vm1155, %v787, -9e+15
        %v1220 = vsel %vm1156, %v788, -9e+15
        %v1221 = vsel %vm1157, %v789, -9e+15
        %v1222 = vsel %vm1158, %v790, -9e+15
        %v1223 = vsel %vm1159, %v791, -9e+15
        %v1224 = vsel %vm1160, %v792, -9e+15
        %v1225 = vsel %vm1161, %v793, -9e+15
        %v1226 = vsel %vm1162, %v794, -9e+15
        %v1227 = vsel %vm1163, %v795, -9e+15
        %v1228 = vsel %vm1164, %v796, -9e+15
        %v1229 = vsel %vm1165, %v797, -9e+15
        %v1230 = vsel %vm1166, %v798, -9e+15
        %v1231 = vsel %vm1167, %v799, -9e+15
        %v1232 = vsel %vm1168, %v800, -9e+15
        %v1233 = vsel %vm1169, %v801, -9e+15
        %v1234 = vsel %vm1170, %v802, -9e+15
        %v1235 = vsel %vm1171, %v803, -9e+15
        %v1236 = vsel %vm1172, %v804, -9e+15
        %v1237 = vsel %vm1173, %v805, -9e+15
        %v1238 = vsel %vm1174, %v806, -9e+15
        %v1239 = vsel %vm1175, %v807, -9e+15
        %v1240 = vsel %vm1176, %v808, -9e+15
        %v1241 = vsel %vm1177, %v809, -9e+15
        %v1242 = vsel %vm1178, %v810, -9e+15
        %v1243 = vsel %vm1179, %v811, -9e+15
        %v1244 = vsel %vm1180, %v812, -9e+15
        %v1245 = vsel %vm1181, %v813, -9e+15
        %v1246 = vsel %vm1182, %v814, -9e+15
        %v1247 = vsel %vm1183, %v815, -9e+15
        %v1248 = vsel %vm1184, %v816, -9e+15
        %v1249 = vsel %vm1185, %v817, -9e+15
        %v1250 = vsel %vm1186, %v818, -9e+15
        %v1251 = vsel %vm1187, %v819, -9e+15
        %v1252 = vsel %vm1188, %v820, -9e+15
        %v1253 = vsel %vm1189, %v821, -9e+15
        %v1254 = vsel %vm1190, %v822, -9e+15
        %v1255 = vsel %vm1191, %v823, -9e+15
        %v1256 = vld [vmem:[#allocation2] sm:$0xff]
        %v1257 = vld [vmem:[#allocation2 + $0x8] sm:$0xff]
        %v1258 = vld [vmem:[#allocation2 + $0x10] sm:$0xff]
        %v1259 = vld [vmem:[#allocation2 + $0x18] sm:$0xff]
        %v1260 = vld [vmem:[#allocation2 + $0x20] sm:$0xff]
        %v1261 = vld [vmem:[#allocation2 + $0x28] sm:$0xff]
        %v1262 = vld [vmem:[#allocation2 + $0x30] sm:$0xff]
        %v1263 = vld [vmem:[#allocation2 + $0x38] sm:$0xff]
        %v1264 = vld [vmem:[#allocation2 + $0x40] sm:$0xff]
        %v1265 = vld [vmem:[#allocation2 + $0x48] sm:$0xff]
        %v1266 = vld [vmem:[#allocation2 + $0x50] sm:$0xff]
        %v1267 = vld [vmem:[#allocation2 + $0x58] sm:$0xff]
        %v1268 = vld [vmem:[#allocation2 + $0x60] sm:$0xff]
        %v1269 = vld [vmem:[#allocation2 + $0x68] sm:$0xff]
        %v1270 = vld [vmem:[#allocation2 + $0x70] sm:$0xff]
        %v1271 = vld [vmem:[#allocation2 + $0x78] sm:$0xff]
        %v1272 = vld [vmem:[#allocation2 + $0x80] sm:$0xff]
        %v1273 = vld [vmem:[#allocation2 + $0x88] sm:$0xff]
        %v1274 = vld [vmem:[#allocation2 + $0x90] sm:$0xff]
        %v1275 = vld [vmem:[#allocation2 + $0x98] sm:$0xff]
        %v1276 = vld [vmem:[#allocation2 + $0xa0] sm:$0xff]
        %v1277 = vld [vmem:[#allocation2 + $0xa8] sm:$0xff]
        %v1278 = vld [vmem:[#allocation2 + $0xb0] sm:$0xff]
        %v1279 = vld [vmem:[#allocation2 + $0xb8] sm:$0xff]
        %v1280 = vld [vmem:[#allocation2 + $0xc0] sm:$0xff]
        %v1281 = vld [vmem:[#allocation2 + $0xc8] sm:$0xff]
        %v1282 = vld [vmem:[#allocation2 + $0xd0] sm:$0xff]
        %v1283 = vld [vmem:[#allocation2 + $0xd8] sm:$0xff]
        %v1284 = vld [vmem:[#allocation2 + $0xe0] sm:$0xff]
        %v1285 = vld [vmem:[#allocation2 + $0xe8] sm:$0xff]
        %v1286 = vld [vmem:[#allocation2 + $0xf0] sm:$0xff]
        %v1287 = vld [vmem:[#allocation2 + $0xf8] sm:$0xff]
        %v1288 = vmax.f32 %v1192, %v1193
        %1289 = vmax.xlane.f32.xlu0 %v1288
        %v1290 = vpop.xlane.xlu0 %1289
        %v1291 = vmax.f32 %v1194, %v1195
        %1292 = vmax.xlane.f32.xlu0 %v1291
        %v1293 = vpop.xlane.xlu0 %1292
        %v1294 = vmax.f32 %v1196, %v1197
        %1295 = vmax.xlane.f32.xlu0 %v1294
        %v1296 = vpop.xlane.xlu0 %1295
        %v1297 = vmax.f32 %v1198, %v1199
        %1298 = vmax.xlane.f32.xlu0 %v1297
        %v1299 = vpop.xlane.xlu0 %1298
        %v1300 = vmax.f32 %v1200, %v1201
        %1301 = vmax.xlane.f32.xlu0 %v1300
        %v1302 = vpop.xlane.xlu0 %1301
        %v1303 = vmax.f32 %v1202, %v1203
        %1304 = vmax.xlane.f32.xlu0 %v1303
        %v1305 = vpop.xlane.xlu0 %1304
        %v1306 = vmax.f32 %v1204, %v1205
        %1307 = vmax.xlane.f32.xlu0 %v1306
        %v1308 = vpop.xlane.xlu0 %1307
        %v1309 = vmax.f32 %v1206, %v1207
        %1310 = vmax.xlane.f32.xlu0 %v1309
        %v1311 = vpop.xlane.xlu0 %1310
        %v1312 = vmax.f32 %v1208, %v1209
        %1313 = vmax.xlane.f32.xlu0 %v1312
        %v1314 = vpop.xlane.xlu0 %1313
        %v1315 = vmax.f32 %v1210, %v1211
        %1316 = vmax.xlane.f32.xlu0 %v1315
        %v1317 = vpop.xlane.xlu0 %1316
        %v1318 = vmax.f32 %v1212, %v1213
        %1319 = vmax.xlane.f32.xlu0 %v1318
        %v1320 = vpop.xlane.xlu0 %1319
        %v1321 = vmax.f32 %v1214, %v1215
        %1322 = vmax.xlane.f32.xlu0 %v1321
        %v1323 = vpop.xlane.xlu0 %1322
        %v1324 = vmax.f32 %v1216, %v1217
        %1325 = vmax.xlane.f32.xlu0 %v1324
        %v1326 = vpop.xlane.xlu0 %1325
        %v1327 = vmax.f32 %v1218, %v1219
        %1328 = vmax.xlane.f32.xlu0 %v1327
        %v1329 = vpop.xlane.xlu0 %1328
        %v1330 = vmax.f32 %v1220, %v1221
        %1331 = vmax.xlane.f32.xlu0 %v1330
        %v1332 = vpop.xlane.xlu0 %1331
        %v1333 = vmax.f32 %v1222, %v1223
        %1334 = vmax.xlane.f32.xlu0 %v1333
        %v1335 = vpop.xlane.xlu0 %1334
        %v1336 = vmax.f32 %v1224, %v1225
        %1337 = vmax.xlane.f32.xlu0 %v1336
        %v1338 = vpop.xlane.xlu0 %1337
        %v1339 = vmax.f32 %v1226, %v1227
        %1340 = vmax.xlane.f32.xlu0 %v1339
        %v1341 = vpop.xlane.xlu0 %1340
        %v1342 = vmax.f32 %v1228, %v1229
        %1343 = vmax.xlane.f32.xlu0 %v1342
        %v1344 = vpop.xlane.xlu0 %1343
        %v1345 = vmax.f32 %v1230, %v1231
        %1346 = vmax.xlane.f32.xlu0 %v1345
        %v1347 = vpop.xlane.xlu0 %1346
        %v1348 = vmax.f32 %v1232, %v1233
        %1349 = vmax.xlane.f32.xlu0 %v1348
        %v1350 = vpop.xlane.xlu0 %1349
        %v1351 = vmax.f32 %v1234, %v1235
        %1352 = vmax.xlane.f32.xlu0 %v1351
        %v1353 = vpop.xlane.xlu0 %1352
        %v1354 = vmax.f32 %v1236, %v1237
        %1355 = vmax.xlane.f32.xlu0 %v1354
        %v1356 = vpop.xlane.xlu0 %1355
        %v1357 = vmax.f32 %v1238, %v1239
        %1358 = vmax.xlane.f32.xlu0 %v1357
        %v1359 = vpop.xlane.xlu0 %1358
        %v1360 = vmax.f32 %v1240, %v1241
        %1361 = vmax.xlane.f32.xlu0 %v1360
        %v1362 = vpop.xlane.xlu0 %1361
        %v1363 = vmax.f32 %v1242, %v1243
        %1364 = vmax.xlane.f32.xlu0 %v1363
        %v1365 = vpop.xlane.xlu0 %1364
        %v1366 = vmax.f32 %v1244, %v1245
        %1367 = vmax.xlane.f32.xlu0 %v1366
        %v1368 = vpop.xlane.xlu0 %1367
        %v1369 = vmax.f32 %v1246, %v1247
        %1370 = vmax.xlane.f32.xlu0 %v1369
        %v1371 = vpop.xlane.xlu0 %1370
        %v1372 = vmax.f32 %v1248, %v1249
        %1373 = vmax.xlane.f32.xlu0 %v1372
        %v1374 = vpop.xlane.xlu0 %1373
        %v1375 = vmax.f32 %v1250, %v1251
        %1376 = vmax.xlane.f32.xlu0 %v1375
        %v1377 = vpop.xlane.xlu0 %1376
        %v1378 = vmax.f32 %v1252, %v1253
        %1379 = vmax.xlane.f32.xlu0 %v1378
        %v1380 = vpop.xlane.xlu0 %1379
        %v1381 = vmax.f32 %v1254, %v1255
        %1382 = vmax.xlane.f32.xlu0 %v1381
        %v1383 = vpop.xlane.xlu0 %1382
        %v1384 = vmax.f32 %v1256, %v1290
        %v1385 = vmax.f32 %v1257, %v1293
        %v1386 = vmax.f32 %v1258, %v1296
        %v1387 = vmax.f32 %v1259, %v1299
        %v1388 = vmax.f32 %v1260, %v1302
        %v1389 = vmax.f32 %v1261, %v1305
        %v1390 = vmax.f32 %v1262, %v1308
        %v1391 = vmax.f32 %v1263, %v1311
        %v1392 = vmax.f32 %v1264, %v1314
        %v1393 = vmax.f32 %v1265, %v1317
        %v1394 = vmax.f32 %v1266, %v1320
        %v1395 = vmax.f32 %v1267, %v1323
        %v1396 = vmax.f32 %v1268, %v1326
        %v1397 = vmax.f32 %v1269, %v1329
        %v1398 = vmax.f32 %v1270, %v1332
        %v1399 = vmax.f32 %v1271, %v1335
        %v1400 = vmax.f32 %v1272, %v1338
        %v1401 = vmax.f32 %v1273, %v1341
        %v1402 = vmax.f32 %v1274, %v1344
        %v1403 = vmax.f32 %v1275, %v1347
        %v1404 = vmax.f32 %v1276, %v1350
        %v1405 = vmax.f32 %v1277, %v1353
        %v1406 = vmax.f32 %v1278, %v1356
        %v1407 = vmax.f32 %v1279, %v1359
        %v1408 = vmax.f32 %v1280, %v1362
        %v1409 = vmax.f32 %v1281, %v1365
        %v1410 = vmax.f32 %v1282, %v1368
        %v1411 = vmax.f32 %v1283, %v1371
        %v1412 = vmax.f32 %v1284, %v1374
        %v1413 = vmax.f32 %v1285, %v1377
        %v1414 = vmax.f32 %v1286, %v1380
        %v1415 = vmax.f32 %v1287, %v1383
        %v1416 = vsub.f32 %v1256, %v1384
        %v1417 = vsub.f32 %v1257, %v1385
        %v1418 = vsub.f32 %v1258, %v1386
        %v1419 = vsub.f32 %v1259, %v1387
        %v1420 = vsub.f32 %v1260, %v1388
        %v1421 = vsub.f32 %v1261, %v1389
        %v1422 = vsub.f32 %v1262, %v1390
        %v1423 = vsub.f32 %v1263, %v1391
        %v1424 = vsub.f32 %v1264, %v1392
        %v1425 = vsub.f32 %v1265, %v1393
        %v1426 = vsub.f32 %v1266, %v1394
        %v1427 = vsub.f32 %v1267, %v1395
        %v1428 = vsub.f32 %v1268, %v1396
        %v1429 = vsub.f32 %v1269, %v1397
        %v1430 = vsub.f32 %v1270, %v1398
        %v1431 = vsub.f32 %v1271, %v1399
        %v1432 = vsub.f32 %v1272, %v1400
        %v1433 = vsub.f32 %v1273, %v1401
        %v1434 = vsub.f32 %v1274, %v1402
        %v1435 = vsub.f32 %v1275, %v1403
        %v1436 = vsub.f32 %v1276, %v1404
        %v1437 = vsub.f32 %v1277, %v1405
        %v1438 = vsub.f32 %v1278, %v1406
        %v1439 = vsub.f32 %v1279, %v1407
        %v1440 = vsub.f32 %v1280, %v1408
        %v1441 = vsub.f32 %v1281, %v1409
        %v1442 = vsub.f32 %v1282, %v1410
        %v1443 = vsub.f32 %v1283, %v1411
        %v1444 = vsub.f32 %v1284, %v1412
        %v1445 = vsub.f32 %v1285, %v1413
        %v1446 = vsub.f32 %v1286, %v1414
        %v1447 = vsub.f32 %v1287, %v1415
        %v1448 = vmul.f32 %v1416, 1.442695
        %v1449 = vpow.pop %v1448
        %v1450 = vmul.f32 %v1417, 1.442695
        %v1451 = vpow.pop %v1450
        %v1452 = vmul.f32 %v1418, 1.442695
        %v1453 = vpow.pop %v1452
        %v1454 = vmul.f32 %v1419, 1.442695
        %v1455 = vpow.pop %v1454
        %v1456 = vmul.f32 %v1420, 1.442695
        %v1457 = vpow.pop %v1456
        %v1458 = vmul.f32 %v1421, 1.442695
        %v1459 = vpow.pop %v1458
        %v1460 = vmul.f32 %v1422, 1.442695
        %v1461 = vpow.pop %v1460
        %v1462 = vmul.f32 %v1423, 1.442695
        %v1463 = vpow.pop %v1462
        %v1464 = vmul.f32 %v1424, 1.442695
        %v1465 = vpow.pop %v1464
        %v1466 = vmul.f32 %v1425, 1.442695
        %v1467 = vpow.pop %v1466
        %v1468 = vmul.f32 %v1426, 1.442695
        %v1469 = vpow.pop %v1468
        %v1470 = vmul.f32 %v1427, 1.442695
        %v1471 = vpow.pop %v1470
        %v1472 = vmul.f32 %v1428, 1.442695
        %v1473 = vpow.pop %v1472
        %v1474 = vmul.f32 %v1429, 1.442695
        %v1475 = vpow.pop %v1474
        %v1476 = vmul.f32 %v1430, 1.442695
        %v1477 = vpow.pop %v1476
        %v1478 = vmul.f32 %v1431, 1.442695
        %v1479 = vpow.pop %v1478
        %v1480 = vmul.f32 %v1432, 1.442695
        %v1481 = vpow.pop %v1480
        %v1482 = vmul.f32 %v1433, 1.442695
        %v1483 = vpow.pop %v1482
        %v1484 = vmul.f32 %v1434, 1.442695
        %v1485 = vpow.pop %v1484
        %v1486 = vmul.f32 %v1435, 1.442695
        %v1487 = vpow.pop %v1486
        %v1488 = vmul.f32 %v1436, 1.442695
        %v1489 = vpow.pop %v1488
        %v1490 = vmul.f32 %v1437, 1.442695
        %v1491 = vpow.pop %v1490
        %v1492 = vmul.f32 %v1438, 1.442695
        %v1493 = vpow.pop %v1492
        %v1494 = vmul.f32 %v1439, 1.442695
        %v1495 = vpow.pop %v1494
        %v1496 = vmul.f32 %v1440, 1.442695
        %v1497 = vpow.pop %v1496
        %v1498 = vmul.f32 %v1441, 1.442695
        %v1499 = vpow.pop %v1498
        %v1500 = vmul.f32 %v1442, 1.442695
        %v1501 = vpow.pop %v1500
        %v1502 = vmul.f32 %v1443, 1.442695
        %v1503 = vpow.pop %v1502
        %v1504 = vmul.f32 %v1444, 1.442695
        %v1505 = vpow.pop %v1504
        %v1506 = vmul.f32 %v1445, 1.442695
        %v1507 = vpow.pop %v1506
        %v1508 = vmul.f32 %v1446, 1.442695
        %v1509 = vpow.pop %v1508
        %v1510 = vmul.f32 %v1447, 1.442695
        %v1511 = vpow.pop %v1510
        %1513 = vset.pattern.permute.xlu0 0
        %1514 = vperm.xlu0 %1513, %v1384
        %v1515 = vpop.permute.xlu0 %1514
        %1518 = vset.pattern.permute.xlu0 0
        %1519 = vperm.xlu0 %1518, %v1385
        %v1520 = vpop.permute.xlu0 %1519
        %1523 = vset.pattern.permute.xlu0 0
        %1524 = vperm.xlu0 %1523, %v1386
        %v1525 = vpop.permute.xlu0 %1524
        %1528 = vset.pattern.permute.xlu0 0
        %1529 = vperm.xlu0 %1528, %v1387
        %v1530 = vpop.permute.xlu0 %1529
        %1533 = vset.pattern.permute.xlu0 0
        %1534 = vperm.xlu0 %1533, %v1388
        %v1535 = vpop.permute.xlu0 %1534
        %1538 = vset.pattern.permute.xlu0 0
        %1539 = vperm.xlu0 %1538, %v1389
        %v1540 = vpop.permute.xlu0 %1539
        %1543 = vset.pattern.permute.xlu0 0
        %1544 = vperm.xlu0 %1543, %v1390
        %v1545 = vpop.permute.xlu0 %1544
        %1548 = vset.pattern.permute.xlu0 0
        %1549 = vperm.xlu0 %1548, %v1391
        %v1550 = vpop.permute.xlu0 %1549
        %1553 = vset.pattern.permute.xlu0 0
        %1554 = vperm.xlu0 %1553, %v1392
        %v1555 = vpop.permute.xlu0 %1554
        %1558 = vset.pattern.permute.xlu0 0
        %1559 = vperm.xlu0 %1558, %v1393
        %v1560 = vpop.permute.xlu0 %1559
        %1563 = vset.pattern.permute.xlu0 0
        %1564 = vperm.xlu0 %1563, %v1394
        %v1565 = vpop.permute.xlu0 %1564
        %1568 = vset.pattern.permute.xlu0 0
        %1569 = vperm.xlu0 %1568, %v1395
        %v1570 = vpop.permute.xlu0 %1569
        %1573 = vset.pattern.permute.xlu0 0
        %1574 = vperm.xlu0 %1573, %v1396
        %v1575 = vpop.permute.xlu0 %1574
        %1578 = vset.pattern.permute.xlu0 0
        %1579 = vperm.xlu0 %1578, %v1397
        %v1580 = vpop.permute.xlu0 %1579
        %1583 = vset.pattern.permute.xlu0 0
        %1584 = vperm.xlu0 %1583, %v1398
        %v1585 = vpop.permute.xlu0 %1584
        %1588 = vset.pattern.permute.xlu0 0
        %1589 = vperm.xlu0 %1588, %v1399
        %v1590 = vpop.permute.xlu0 %1589
        %1593 = vset.pattern.permute.xlu0 0
        %1594 = vperm.xlu0 %1593, %v1400
        %v1595 = vpop.permute.xlu0 %1594
        %1598 = vset.pattern.permute.xlu0 0
        %1599 = vperm.xlu0 %1598, %v1401
        %v1600 = vpop.permute.xlu0 %1599
        %1603 = vset.pattern.permute.xlu0 0
        %1604 = vperm.xlu0 %1603, %v1402
        %v1605 = vpop.permute.xlu0 %1604
        %1608 = vset.pattern.permute.xlu0 0
        %1609 = vperm.xlu0 %1608, %v1403
        %v1610 = vpop.permute.xlu0 %1609
        %1613 = vset.pattern.permute.xlu0 0
        %1614 = vperm.xlu0 %1613, %v1404
        %v1615 = vpop.permute.xlu0 %1614
        %1618 = vset.pattern.permute.xlu0 0
        %1619 = vperm.xlu0 %1618, %v1405
        %v1620 = vpop.permute.xlu0 %1619
        %1623 = vset.pattern.permute.xlu0 0
        %1624 = vperm.xlu0 %1623, %v1406
        %v1625 = vpop.permute.xlu0 %1624
        %1628 = vset.pattern.permute.xlu0 0
        %1629 = vperm.xlu0 %1628, %v1407
        %v1630 = vpop.permute.xlu0 %1629
        %1633 = vset.pattern.permute.xlu0 0
        %1634 = vperm.xlu0 %1633, %v1408
        %v1635 = vpop.permute.xlu0 %1634
        %1638 = vset.pattern.permute.xlu0 0
        %1639 = vperm.xlu0 %1638, %v1409
        %v1640 = vpop.permute.xlu0 %1639
        %1643 = vset.pattern.permute.xlu0 0
        %1644 = vperm.xlu0 %1643, %v1410
        %v1645 = vpop.permute.xlu0 %1644
        %1648 = vset.pattern.permute.xlu0 0
        %1649 = vperm.xlu0 %1648, %v1411
        %v1650 = vpop.permute.xlu0 %1649
        %1653 = vset.pattern.permute.xlu0 0
        %1654 = vperm.xlu0 %1653, %v1412
        %v1655 = vpop.permute.xlu0 %1654
        %1658 = vset.pattern.permute.xlu0 0
        %1659 = vperm.xlu0 %1658, %v1413
        %v1660 = vpop.permute.xlu0 %1659
        %1663 = vset.pattern.permute.xlu0 0
        %1664 = vperm.xlu0 %1663, %v1414
        %v1665 = vpop.permute.xlu0 %1664
        %1668 = vset.pattern.permute.xlu0 0
        %1669 = vperm.xlu0 %1668, %v1415
        %v1670 = vpop.permute.xlu0 %1669
        %v1672 = vsub.f32 %v1192, %v1515
        %v1673 = vsub.f32 %v1193, %v1515
        %v1674 = vsub.f32 %v1194, %v1520
        %v1675 = vsub.f32 %v1195, %v1520
        %v1676 = vsub.f32 %v1196, %v1525
        %v1677 = vsub.f32 %v1197, %v1525
        %v1678 = vsub.f32 %v1198, %v1530
        %v1679 = vsub.f32 %v1199, %v1530
        %v1680 = vsub.f32 %v1200, %v1535
        %v1681 = vsub.f32 %v1201, %v1535
        %v1682 = vsub.f32 %v1202, %v1540
        %v1683 = vsub.f32 %v1203, %v1540
        %v1684 = vsub.f32 %v1204, %v1545
        %v1685 = vsub.f32 %v1205, %v1545
        %v1686 = vsub.f32 %v1206, %v1550
        %v1687 = vsub.f32 %v1207, %v1550
        %v1688 = vsub.f32 %v1208, %v1555
        %v1689 = vsub.f32 %v1209, %v1555
        %v1690 = vsub.f32 %v1210, %v1560
        %v1691 = vsub.f32 %v1211, %v1560
        %v1692 = vsub.f32 %v1212, %v1565
        %v1693 = vsub.f32 %v1213, %v1565
        %v1694 = vsub.f32 %v1214, %v1570
        %v1695 = vsub.f32 %v1215, %v1570
        %v1696 = vsub.f32 %v1216, %v1575
        %v1697 = vsub.f32 %v1217, %v1575
        %v1698 = vsub.f32 %v1218, %v1580
        %v1699 = vsub.f32 %v1219, %v1580
        %v1700 = vsub.f32 %v1220, %v1585
        %v1701 = vsub.f32 %v1221, %v1585
        %v1702 = vsub.f32 %v1222, %v1590
        %v1703 = vsub.f32 %v1223, %v1590
        %v1704 = vsub.f32 %v1224, %v1595
        %v1705 = vsub.f32 %v1225, %v1595
        %v1706 = vsub.f32 %v1226, %v1600
        %v1707 = vsub.f32 %v1227, %v1600
        %v1708 = vsub.f32 %v1228, %v1605
        %v1709 = vsub.f32 %v1229, %v1605
        %v1710 = vsub.f32 %v1230, %v1610
        %v1711 = vsub.f32 %v1231, %v1610
        %v1712 = vsub.f32 %v1232, %v1615
        %v1713 = vsub.f32 %v1233, %v1615
        %v1714 = vsub.f32 %v1234, %v1620
        %v1715 = vsub.f32 %v1235, %v1620
        %v1716 = vsub.f32 %v1236, %v1625
        %v1717 = vsub.f32 %v1237, %v1625
        %v1718 = vsub.f32 %v1238, %v1630
        %v1719 = vsub.f32 %v1239, %v1630
        %v1720 = vsub.f32 %v1240, %v1635
        %v1721 = vsub.f32 %v1241, %v1635
        %v1722 = vsub.f32 %v1242, %v1640
        %v1723 = vsub.f32 %v1243, %v1640
        %v1724 = vsub.f32 %v1244, %v1645
        %v1725 = vsub.f32 %v1245, %v1645
        %v1726 = vsub.f32 %v1246, %v1650
        %v1727 = vsub.f32 %v1247, %v1650
        %v1728 = vsub.f32 %v1248, %v1655
        %v1729 = vsub.f32 %v1249, %v1655
        %v1730 = vsub.f32 %v1250, %v1660
        %v1731 = vsub.f32 %v1251, %v1660
        %v1732 = vsub.f32 %v1252, %v1665
        %v1733 = vsub.f32 %v1253, %v1665
        %v1734 = vsub.f32 %v1254, %v1670
        %v1735 = vsub.f32 %v1255, %v1670
        %v1736 = vmul.f32 %v1672, 1.442695
        %v1737 = vpow.pop %v1736
        %v1738 = vmul.f32 %v1673, 1.442695
        %v1739 = vpow.pop %v1738
        %v1740 = vmul.f32 %v1674, 1.442695
        %v1741 = vpow.pop %v1740
        %v1742 = vmul.f32 %v1675, 1.442695
        %v1743 = vpow.pop %v1742
        %v1744 = vmul.f32 %v1676, 1.442695
        %v1745 = vpow.pop %v1744
        %v1746 = vmul.f32 %v1677, 1.442695
        %v1747 = vpow.pop %v1746
        %v1748 = vmul.f32 %v1678, 1.442695
        %v1749 = vpow.pop %v1748
        %v1750 = vmul.f32 %v1679, 1.442695
        %v1751 = vpow.pop %v1750
        %v1752 = vmul.f32 %v1680, 1.442695
        %v1753 = vpow.pop %v1752
        %v1754 = vmul.f32 %v1681, 1.442695
        %v1755 = vpow.pop %v1754
        %v1756 = vmul.f32 %v1682, 1.442695
        %v1757 = vpow.pop %v1756
        %v1758 = vmul.f32 %v1683, 1.442695
        %v1759 = vpow.pop %v1758
        %v1760 = vmul.f32 %v1684, 1.442695
        %v1761 = vpow.pop %v1760
        %v1762 = vmul.f32 %v1685, 1.442695
        %v1763 = vpow.pop %v1762
        %v1764 = vmul.f32 %v1686, 1.442695
        %v1765 = vpow.pop %v1764
        %v1766 = vmul.f32 %v1687, 1.442695
        %v1767 = vpow.pop %v1766
        %v1768 = vmul.f32 %v1688, 1.442695
        %v1769 = vpow.pop %v1768
        %v1770 = vmul.f32 %v1689, 1.442695
        %v1771 = vpow.pop %v1770
        %v1772 = vmul.f32 %v1690, 1.442695
        %v1773 = vpow.pop %v1772
        %v1774 = vmul.f32 %v1691, 1.442695
        %v1775 = vpow.pop %v1774
        %v1776 = vmul.f32 %v1692, 1.442695
        %v1777 = vpow.pop %v1776
        %v1778 = vmul.f32 %v1693, 1.442695
        %v1779 = vpow.pop %v1778
        %v1780 = vmul.f32 %v1694, 1.442695
        %v1781 = vpow.pop %v1780
        %v1782 = vmul.f32 %v1695, 1.442695
        %v1783 = vpow.pop %v1782
        %v1784 = vmul.f32 %v1696, 1.442695
        %v1785 = vpow.pop %v1784
        %v1786 = vmul.f32 %v1697, 1.442695
        %v1787 = vpow.pop %v1786
        %v1788 = vmul.f32 %v1698, 1.442695
        %v1789 = vpow.pop %v1788
        %v1790 = vmul.f32 %v1699, 1.442695
        %v1791 = vpow.pop %v1790
        %v1792 = vmul.f32 %v1700, 1.442695
        %v1793 = vpow.pop %v1792
        %v1794 = vmul.f32 %v1701, 1.442695
        %v1795 = vpow.pop %v1794
        %v1796 = vmul.f32 %v1702, 1.442695
        %v1797 = vpow.pop %v1796
        %v1798 = vmul.f32 %v1703, 1.442695
        %v1799 = vpow.pop %v1798
        %v1800 = vmul.f32 %v1704, 1.442695
        %v1801 = vpow.pop %v1800
        %v1802 = vmul.f32 %v1705, 1.442695
        %v1803 = vpow.pop %v1802
        %v1804 = vmul.f32 %v1706, 1.442695
        %v1805 = vpow.pop %v1804
        %v1806 = vmul.f32 %v1707, 1.442695
        %v1807 = vpow.pop %v1806
        %v1808 = vmul.f32 %v1708, 1.442695
        %v1809 = vpow.pop %v1808
        %v1810 = vmul.f32 %v1709, 1.442695
        %v1811 = vpow.pop %v1810
        %v1812 = vmul.f32 %v1710, 1.442695
        %v1813 = vpow.pop %v1812
        %v1814 = vmul.f32 %v1711, 1.442695
        %v1815 = vpow.pop %v1814
        %v1816 = vmul.f32 %v1712, 1.442695
        %v1817 = vpow.pop %v1816
        %v1818 = vmul.f32 %v1713, 1.442695
        %v1819 = vpow.pop %v1818
        %v1820 = vmul.f32 %v1714, 1.442695
        %v1821 = vpow.pop %v1820
        %v1822 = vmul.f32 %v1715, 1.442695
        %v1823 = vpow.pop %v1822
        %v1824 = vmul.f32 %v1716, 1.442695
        %v1825 = vpow.pop %v1824
        %v1826 = vmul.f32 %v1717, 1.442695
        %v1827 = vpow.pop %v1826
        %v1828 = vmul.f32 %v1718, 1.442695
        %v1829 = vpow.pop %v1828
        %v1830 = vmul.f32 %v1719, 1.442695
        %v1831 = vpow.pop %v1830
        %v1832 = vmul.f32 %v1720, 1.442695
        %v1833 = vpow.pop %v1832
        %v1834 = vmul.f32 %v1721, 1.442695
        %v1835 = vpow.pop %v1834
        %v1836 = vmul.f32 %v1722, 1.442695
        %v1837 = vpow.pop %v1836
        %v1838 = vmul.f32 %v1723, 1.442695
        %v1839 = vpow.pop %v1838
        %v1840 = vmul.f32 %v1724, 1.442695
        %v1841 = vpow.pop %v1840
        %v1842 = vmul.f32 %v1725, 1.442695
        %v1843 = vpow.pop %v1842
        %v1844 = vmul.f32 %v1726, 1.442695
        %v1845 = vpow.pop %v1844
        %v1846 = vmul.f32 %v1727, 1.442695
        %v1847 = vpow.pop %v1846
        %v1848 = vmul.f32 %v1728, 1.442695
        %v1849 = vpow.pop %v1848
        %v1850 = vmul.f32 %v1729, 1.442695
        %v1851 = vpow.pop %v1850
        %v1852 = vmul.f32 %v1730, 1.442695
        %v1853 = vpow.pop %v1852
        %v1854 = vmul.f32 %v1731, 1.442695
        %v1855 = vpow.pop %v1854
        %v1856 = vmul.f32 %v1732, 1.442695
        %v1857 = vpow.pop %v1856
        %v1858 = vmul.f32 %v1733, 1.442695
        %v1859 = vpow.pop %v1858
        %v1860 = vmul.f32 %v1734, 1.442695
        %v1861 = vpow.pop %v1860
        %v1862 = vmul.f32 %v1735, 1.442695
        %v1863 = vpow.pop %v1862
        %v1864 = vpack.c.bf16 %v1741, %v1737
        %v1865 = vpack.c.bf16 %v1743, %v1739
        %v1866 = vpack.c.bf16 %v1749, %v1745
        %v1867 = vpack.c.bf16 %v1751, %v1747
        %v1868 = vpack.c.bf16 %v1757, %v1753
        %v1869 = vpack.c.bf16 %v1759, %v1755
        %v1870 = vpack.c.bf16 %v1765, %v1761
        %v1871 = vpack.c.bf16 %v1767, %v1763
        %v1872 = vpack.c.bf16 %v1773, %v1769
        %v1873 = vpack.c.bf16 %v1775, %v1771
        %v1874 = vpack.c.bf16 %v1781, %v1777
        %v1875 = vpack.c.bf16 %v1783, %v1779
        %v1876 = vpack.c.bf16 %v1789, %v1785
        %v1877 = vpack.c.bf16 %v1791, %v1787
        %v1878 = vpack.c.bf16 %v1797, %v1793
        %v1879 = vpack.c.bf16 %v1799, %v1795
        %v1880 = vpack.c.bf16 %v1805, %v1801
        %v1881 = vpack.c.bf16 %v1807, %v1803
        %v1882 = vpack.c.bf16 %v1813, %v1809
        %v1883 = vpack.c.bf16 %v1815, %v1811
        %v1884 = vpack.c.bf16 %v1821, %v1817
        %v1885 = vpack.c.bf16 %v1823, %v1819
        %v1886 = vpack.c.bf16 %v1829, %v1825
        %v1887 = vpack.c.bf16 %v1831, %v1827
        %v1888 = vpack.c.bf16 %v1837, %v1833
        %v1889 = vpack.c.bf16 %v1839, %v1835
        %v1890 = vpack.c.bf16 %v1845, %v1841
        %v1891 = vpack.c.bf16 %v1847, %v1843
        %v1892 = vpack.c.bf16 %v1853, %v1849
        %v1893 = vpack.c.bf16 %v1855, %v1851
        %v1894 = vpack.c.bf16 %v1861, %v1857
        %v1895 = vpack.c.bf16 %v1863, %v1859
        %v1896 = vadd.f32 %v1737, %v1739
        %1897 = vadd.xlane.f32.xlu0 %v1896
        %v1898 = vpop.xlane.xlu0 %1897
        %v1899 = vadd.f32 %v1741, %v1743
        %1900 = vadd.xlane.f32.xlu0 %v1899
        %v1901 = vpop.xlane.xlu0 %1900
        %v1902 = vadd.f32 %v1745, %v1747
        %1903 = vadd.xlane.f32.xlu0 %v1902
        %v1904 = vpop.xlane.xlu0 %1903
        %v1905 = vadd.f32 %v1749, %v1751
        %1906 = vadd.xlane.f32.xlu0 %v1905
        %v1907 = vpop.xlane.xlu0 %1906
        %v1908 = vadd.f32 %v1753, %v1755
        %1909 = vadd.xlane.f32.xlu0 %v1908
        %v1910 = vpop.xlane.xlu0 %1909
        %v1911 = vadd.f32 %v1757, %v1759
        %1912 = vadd.xlane.f32.xlu0 %v1911
        %v1913 = vpop.xlane.xlu0 %1912
        %v1914 = vadd.f32 %v1761, %v1763
        %1915 = vadd.xlane.f32.xlu0 %v1914
        %v1916 = vpop.xlane.xlu0 %1915
        %v1917 = vadd.f32 %v1765, %v1767
        %1918 = vadd.xlane.f32.xlu0 %v1917
        %v1919 = vpop.xlane.xlu0 %1918
        %v1920 = vadd.f32 %v1769, %v1771
        %1921 = vadd.xlane.f32.xlu0 %v1920
        %v1922 = vpop.xlane.xlu0 %1921
        %v1923 = vadd.f32 %v1773, %v1775
        %1924 = vadd.xlane.f32.xlu0 %v1923
        %v1925 = vpop.xlane.xlu0 %1924
        %v1926 = vadd.f32 %v1777, %v1779
        %1927 = vadd.xlane.f32.xlu0 %v1926
        %v1928 = vpop.xlane.xlu0 %1927
        %v1929 = vadd.f32 %v1781, %v1783
        %1930 = vadd.xlane.f32.xlu0 %v1929
        %v1931 = vpop.xlane.xlu0 %1930
        %v1932 = vadd.f32 %v1785, %v1787
        %1933 = vadd.xlane.f32.xlu0 %v1932
        %v1934 = vpop.xlane.xlu0 %1933
        %v1935 = vadd.f32 %v1789, %v1791
        %1936 = vadd.xlane.f32.xlu0 %v1935
        %v1937 = vpop.xlane.xlu0 %1936
        %v1938 = vadd.f32 %v1793, %v1795
        %1939 = vadd.xlane.f32.xlu0 %v1938
        %v1940 = vpop.xlane.xlu0 %1939
        %v1941 = vadd.f32 %v1797, %v1799
        %1942 = vadd.xlane.f32.xlu0 %v1941
        %v1943 = vpop.xlane.xlu0 %1942
        %v1944 = vadd.f32 %v1801, %v1803
        %1945 = vadd.xlane.f32.xlu0 %v1944
        %v1946 = vpop.xlane.xlu0 %1945
        %v1947 = vadd.f32 %v1805, %v1807
        %1948 = vadd.xlane.f32.xlu0 %v1947
        %v1949 = vpop.xlane.xlu0 %1948
        %v1950 = vadd.f32 %v1809, %v1811
        %1951 = vadd.xlane.f32.xlu0 %v1950
        %v1952 = vpop.xlane.xlu0 %1951
        %v1953 = vadd.f32 %v1813, %v1815
        %1954 = vadd.xlane.f32.xlu0 %v1953
        %v1955 = vpop.xlane.xlu0 %1954
        %v1956 = vadd.f32 %v1817, %v1819
        %1957 = vadd.xlane.f32.xlu0 %v1956
        %v1958 = vpop.xlane.xlu0 %1957
        %v1959 = vadd.f32 %v1821, %v1823
        %1960 = vadd.xlane.f32.xlu0 %v1959
        %v1961 = vpop.xlane.xlu0 %1960
        %v1962 = vadd.f32 %v1825, %v1827
        %1963 = vadd.xlane.f32.xlu0 %v1962
        %v1964 = vpop.xlane.xlu0 %1963
        %v1965 = vadd.f32 %v1829, %v1831
        %1966 = vadd.xlane.f32.xlu0 %v1965
        %v1967 = vpop.xlane.xlu0 %1966
        %v1968 = vadd.f32 %v1833, %v1835
        %1969 = vadd.xlane.f32.xlu0 %v1968
        %v1970 = vpop.xlane.xlu0 %1969
        %v1971 = vadd.f32 %v1837, %v1839
        %1972 = vadd.xlane.f32.xlu0 %v1971
        %v1973 = vpop.xlane.xlu0 %1972
        %v1974 = vadd.f32 %v1841, %v1843
        %1975 = vadd.xlane.f32.xlu0 %v1974
        %v1976 = vpop.xlane.xlu0 %1975
        %v1977 = vadd.f32 %v1845, %v1847
        %1978 = vadd.xlane.f32.xlu0 %v1977
        %v1979 = vpop.xlane.xlu0 %1978
        %v1980 = vadd.f32 %v1849, %v1851
        %1981 = vadd.xlane.f32.xlu0 %v1980
        %v1982 = vpop.xlane.xlu0 %1981
        %v1983 = vadd.f32 %v1853, %v1855
        %1984 = vadd.xlane.f32.xlu0 %v1983
        %v1985 = vpop.xlane.xlu0 %1984
        %v1986 = vadd.f32 %v1857, %v1859
        %1987 = vadd.xlane.f32.xlu0 %v1986
        %v1988 = vpop.xlane.xlu0 %1987
        %v1989 = vadd.f32 %v1861, %v1863
        %1990 = vadd.xlane.f32.xlu0 %v1989
        %v1991 = vpop.xlane.xlu0 %1990
        %v1992 = vld [vmem:[#allocation3] sm:$0xff]
        %v1993 = vld [vmem:[#allocation3 + $0x8] sm:$0xff]
        %v1994 = vld [vmem:[#allocation3 + $0x10] sm:$0xff]
        %v1995 = vld [vmem:[#allocation3 + $0x18] sm:$0xff]
        %v1996 = vld [vmem:[#allocation3 + $0x20] sm:$0xff]
        %v1997 = vld [vmem:[#allocation3 + $0x28] sm:$0xff]
        %v1998 = vld [vmem:[#allocation3 + $0x30] sm:$0xff]
        %v1999 = vld [vmem:[#allocation3 + $0x38] sm:$0xff]
        %v2000 = vld [vmem:[#allocation3 + $0x40] sm:$0xff]
        %v2001 = vld [vmem:[#allocation3 + $0x48] sm:$0xff]
        %v2002 = vld [vmem:[#allocation3 + $0x50] sm:$0xff]
        %v2003 = vld [vmem:[#allocation3 + $0x58] sm:$0xff]
        %v2004 = vld [vmem:[#allocation3 + $0x60] sm:$0xff]
        %v2005 = vld [vmem:[#allocation3 + $0x68] sm:$0xff]
        %v2006 = vld [vmem:[#allocation3 + $0x70] sm:$0xff]
        %v2007 = vld [vmem:[#allocation3 + $0x78] sm:$0xff]
        %v2008 = vld [vmem:[#allocation3 + $0x80] sm:$0xff]
        %v2009 = vld [vmem:[#allocation3 + $0x88] sm:$0xff]
        %v2010 = vld [vmem:[#allocation3 + $0x90] sm:$0xff]
        %v2011 = vld [vmem:[#allocation3 + $0x98] sm:$0xff]
        %v2012 = vld [vmem:[#allocation3 + $0xa0] sm:$0xff]
        %v2013 = vld [vmem:[#allocation3 + $0xa8] sm:$0xff]
        %v2014 = vld [vmem:[#allocation3 + $0xb0] sm:$0xff]
        %v2015 = vld [vmem:[#allocation3 + $0xb8] sm:$0xff]
        %v2016 = vld [vmem:[#allocation3 + $0xc0] sm:$0xff]
        %v2017 = vld [vmem:[#allocation3 + $0xc8] sm:$0xff]
        %v2018 = vld [vmem:[#allocation3 + $0xd0] sm:$0xff]
        %v2019 = vld [vmem:[#allocation3 + $0xd8] sm:$0xff]
        %v2020 = vld [vmem:[#allocation3 + $0xe0] sm:$0xff]
        %v2021 = vld [vmem:[#allocation3 + $0xe8] sm:$0xff]
        %v2022 = vld [vmem:[#allocation3 + $0xf0] sm:$0xff]
        %v2023 = vld [vmem:[#allocation3 + $0xf8] sm:$0xff]
        %v2024 = vmul.f32 %v1449, %v1992
        %v2025 = vmul.f32 %v1451, %v1993
        %v2026 = vmul.f32 %v1453, %v1994
        %v2027 = vmul.f32 %v1455, %v1995
        %v2028 = vmul.f32 %v1457, %v1996
        %v2029 = vmul.f32 %v1459, %v1997
        %v2030 = vmul.f32 %v1461, %v1998
        %v2031 = vmul.f32 %v1463, %v1999
        %v2032 = vmul.f32 %v1465, %v2000
        %v2033 = vmul.f32 %v1467, %v2001
        %v2034 = vmul.f32 %v1469, %v2002
        %v2035 = vmul.f32 %v1471, %v2003
        %v2036 = vmul.f32 %v1473, %v2004
        %v2037 = vmul.f32 %v1475, %v2005
        %v2038 = vmul.f32 %v1477, %v2006
        %v2039 = vmul.f32 %v1479, %v2007
        %v2040 = vmul.f32 %v1481, %v2008
        %v2041 = vmul.f32 %v1483, %v2009
        %v2042 = vmul.f32 %v1485, %v2010
        %v2043 = vmul.f32 %v1487, %v2011
        %v2044 = vmul.f32 %v1489, %v2012
        %v2045 = vmul.f32 %v1491, %v2013
        %v2046 = vmul.f32 %v1493, %v2014
        %v2047 = vmul.f32 %v1495, %v2015
        %v2048 = vmul.f32 %v1497, %v2016
        %v2049 = vmul.f32 %v1499, %v2017
        %v2050 = vmul.f32 %v1501, %v2018
        %v2051 = vmul.f32 %v1503, %v2019
        %v2052 = vmul.f32 %v1505, %v2020
        %v2053 = vmul.f32 %v1507, %v2021
        %v2054 = vmul.f32 %v1509, %v2022
        %v2055 = vmul.f32 %v1511, %v2023
        %v2056 = vadd.f32 %v2024, %v1898
        %v2057 = vadd.f32 %v2025, %v1901
        %v2058 = vadd.f32 %v2026, %v1904
        %v2059 = vadd.f32 %v2027, %v1907
        %v2060 = vadd.f32 %v2028, %v1910
        %v2061 = vadd.f32 %v2029, %v1913
        %v2062 = vadd.f32 %v2030, %v1916
        %v2063 = vadd.f32 %v2031, %v1919
        %v2064 = vadd.f32 %v2032, %v1922
        %v2065 = vadd.f32 %v2033, %v1925
        %v2066 = vadd.f32 %v2034, %v1928
        %v2067 = vadd.f32 %v2035, %v1931
        %v2068 = vadd.f32 %v2036, %v1934
        %v2069 = vadd.f32 %v2037, %v1937
        %v2070 = vadd.f32 %v2038, %v1940
        %v2071 = vadd.f32 %v2039, %v1943
        %v2072 = vadd.f32 %v2040, %v1946
        %v2073 = vadd.f32 %v2041, %v1949
        %v2074 = vadd.f32 %v2042, %v1952
        %v2075 = vadd.f32 %v2043, %v1955
        %v2076 = vadd.f32 %v2044, %v1958
        %v2077 = vadd.f32 %v2045, %v1961
        %v2078 = vadd.f32 %v2046, %v1964
        %v2079 = vadd.f32 %v2047, %v1967
        %v2080 = vadd.f32 %v2048, %v1970
        %v2081 = vadd.f32 %v2049, %v1973
        %v2082 = vadd.f32 %v2050, %v1976
        %v2083 = vadd.f32 %v2051, %v1979
        %v2084 = vadd.f32 %v2052, %v1982
        %v2085 = vadd.f32 %v2053, %v1985
        %v2086 = vadd.f32 %v2054, %v1988
        %v2087 = vadd.f32 %v2055, %v1991
        %vm2088 = vcmask 7168
        %2089 = vst.msk [vmem:[#allocation3] sm:$0xff] %vm2088, %v2056
        %2090 = vst.msk [vmem:[#allocation3 + $0x8] sm:$0xff] %vm2088, %v2057
        %2091 = vst.msk [vmem:[#allocation3 + $0x10] sm:$0xff] %vm2088, %v2058
        %2092 = vst.msk [vmem:[#allocation3 + $0x18] sm:$0xff] %vm2088, %v2059
        %2093 = vst.msk [vmem:[#allocation3 + $0x20] sm:$0xff] %vm2088, %v2060
        %2094 = vst.msk [vmem:[#allocation3 + $0x28] sm:$0xff] %vm2088, %v2061
        %2095 = vst.msk [vmem:[#allocation3 + $0x30] sm:$0xff] %vm2088, %v2062
        %2096 = vst.msk [vmem:[#allocation3 + $0x38] sm:$0xff] %vm2088, %v2063
        %2097 = vst.msk [vmem:[#allocation3 + $0x40] sm:$0xff] %vm2088, %v2064
        %2098 = vst.msk [vmem:[#allocation3 + $0x48] sm:$0xff] %vm2088, %v2065
        %2099 = vst.msk [vmem:[#allocation3 + $0x50] sm:$0xff] %vm2088, %v2066
        %2100 = vst.msk [vmem:[#allocation3 + $0x58] sm:$0xff] %vm2088, %v2067
        %2101 = vst.msk [vmem:[#allocation3 + $0x60] sm:$0xff] %vm2088, %v2068
        %2102 = vst.msk [vmem:[#allocation3 + $0x68] sm:$0xff] %vm2088, %v2069
        %2103 = vst.msk [vmem:[#allocation3 + $0x70] sm:$0xff] %vm2088, %v2070
        %2104 = vst.msk [vmem:[#allocation3 + $0x78] sm:$0xff] %vm2088, %v2071
        %2105 = vst.msk [vmem:[#allocation3 + $0x80] sm:$0xff] %vm2088, %v2072
        %2106 = vst.msk [vmem:[#allocation3 + $0x88] sm:$0xff] %vm2088, %v2073
        %2107 = vst.msk [vmem:[#allocation3 + $0x90] sm:$0xff] %vm2088, %v2074
        %2108 = vst.msk [vmem:[#allocation3 + $0x98] sm:$0xff] %vm2088, %v2075
        %2109 = vst.msk [vmem:[#allocation3 + $0xa0] sm:$0xff] %vm2088, %v2076
        %2110 = vst.msk [vmem:[#allocation3 + $0xa8] sm:$0xff] %vm2088, %v2077
        %2111 = vst.msk [vmem:[#allocation3 + $0xb0] sm:$0xff] %vm2088, %v2078
        %2112 = vst.msk [vmem:[#allocation3 + $0xb8] sm:$0xff] %vm2088, %v2079
        %2113 = vst.msk [vmem:[#allocation3 + $0xc0] sm:$0xff] %vm2088, %v2080
        %2114 = vst.msk [vmem:[#allocation3 + $0xc8] sm:$0xff] %vm2088, %v2081
        %2115 = vst.msk [vmem:[#allocation3 + $0xd0] sm:$0xff] %vm2088, %v2082
        %2116 = vst.msk [vmem:[#allocation3 + $0xd8] sm:$0xff] %vm2088, %v2083
        %2117 = vst.msk [vmem:[#allocation3 + $0xe0] sm:$0xff] %vm2088, %v2084
        %2118 = vst.msk [vmem:[#allocation3 + $0xe8] sm:$0xff] %vm2088, %v2085
        %2119 = vst.msk [vmem:[#allocation3 + $0xf0] sm:$0xff] %vm2088, %v2086
        %2120 = vst.msk [vmem:[#allocation3 + $0xf8] sm:$0xff] %vm2088, %v2087
        %v2121 = vld [vmem:[#allocation4] sm:$0xff]
        %v2122 = vld [vmem:[#allocation4 + $0x8] sm:$0xff]
        %v2123 = vld [vmem:[#allocation4 + $0x10] sm:$0xff]
        %v2124 = vld [vmem:[#allocation4 + $0x18] sm:$0xff]
        %v2125 = vld [vmem:[#allocation4 + $0x20] sm:$0xff]
        %v2126 = vld [vmem:[#allocation4 + $0x28] sm:$0xff]
        %v2127 = vld [vmem:[#allocation4 + $0x30] sm:$0xff]
        %v2128 = vld [vmem:[#allocation4 + $0x38] sm:$0xff]
        %v2129 = vld [vmem:[#allocation4 + $0x40] sm:$0xff]
        %v2130 = vld [vmem:[#allocation4 + $0x48] sm:$0xff]
        %v2131 = vld [vmem:[#allocation4 + $0x50] sm:$0xff]
        %v2132 = vld [vmem:[#allocation4 + $0x58] sm:$0xff]
        %v2133 = vld [vmem:[#allocation4 + $0x60] sm:$0xff]
        %v2134 = vld [vmem:[#allocation4 + $0x68] sm:$0xff]
        %v2135 = vld [vmem:[#allocation4 + $0x70] sm:$0xff]
        %v2136 = vld [vmem:[#allocation4 + $0x78] sm:$0xff]
        %v2137 = vld [vmem:[#allocation4 + $0x80] sm:$0xff]
        %v2138 = vld [vmem:[#allocation4 + $0x88] sm:$0xff]
        %v2139 = vld [vmem:[#allocation4 + $0x90] sm:$0xff]
        %v2140 = vld [vmem:[#allocation4 + $0x98] sm:$0xff]
        %v2141 = vld [vmem:[#allocation4 + $0xa0] sm:$0xff]
        %v2142 = vld [vmem:[#allocation4 + $0xa8] sm:$0xff]
        %v2143 = vld [vmem:[#allocation4 + $0xb0] sm:$0xff]
        %v2144 = vld [vmem:[#allocation4 + $0xb8] sm:$0xff]
        %v2145 = vld [vmem:[#allocation4 + $0xc0] sm:$0xff]
        %v2146 = vld [vmem:[#allocation4 + $0xc8] sm:$0xff]
        %v2147 = vld [vmem:[#allocation4 + $0xd0] sm:$0xff]
        %v2148 = vld [vmem:[#allocation4 + $0xd8] sm:$0xff]
        %v2149 = vld [vmem:[#allocation4 + $0xe0] sm:$0xff]
        %v2150 = vld [vmem:[#allocation4 + $0xe8] sm:$0xff]
        %v2151 = vld [vmem:[#allocation4 + $0xf0] sm:$0xff]
        %v2152 = vld [vmem:[#allocation4 + $0xf8] sm:$0xff]
        %2154 = vset.pattern.permute.xlu0 0
        %2155 = vperm.xlu0 %2154, %v1449
        %v2156 = vpop.permute.xlu0 %2155
        %2159 = vset.pattern.permute.xlu0 0
        %2160 = vperm.xlu0 %2159, %v1451
        %v2161 = vpop.permute.xlu0 %2160
        %2164 = vset.pattern.permute.xlu0 0
        %2165 = vperm.xlu0 %2164, %v1453
        %v2166 = vpop.permute.xlu0 %2165
        %2169 = vset.pattern.permute.xlu0 0
        %2170 = vperm.xlu0 %2169, %v1455
        %v2171 = vpop.permute.xlu0 %2170
        %2174 = vset.pattern.permute.xlu0 0
        %2175 = vperm.xlu0 %2174, %v1457
        %v2176 = vpop.permute.xlu0 %2175
        %2179 = vset.pattern.permute.xlu0 0
        %2180 = vperm.xlu0 %2179, %v1459
        %v2181 = vpop.permute.xlu0 %2180
        %2184 = vset.pattern.permute.xlu0 0
        %2185 = vperm.xlu0 %2184, %v1461
        %v2186 = vpop.permute.xlu0 %2185
        %2189 = vset.pattern.permute.xlu0 0
        %2190 = vperm.xlu0 %2189, %v1463
        %v2191 = vpop.permute.xlu0 %2190
        %2194 = vset.pattern.permute.xlu0 0
        %2195 = vperm.xlu0 %2194, %v1465
        %v2196 = vpop.permute.xlu0 %2195
        %2199 = vset.pattern.permute.xlu0 0
        %2200 = vperm.xlu0 %2199, %v1467
        %v2201 = vpop.permute.xlu0 %2200
        %2204 = vset.pattern.permute.xlu0 0
        %2205 = vperm.xlu0 %2204, %v1469
        %v2206 = vpop.permute.xlu0 %2205
        %2209 = vset.pattern.permute.xlu0 0
        %2210 = vperm.xlu0 %2209, %v1471
        %v2211 = vpop.permute.xlu0 %2210
        %2214 = vset.pattern.permute.xlu0 0
        %2215 = vperm.xlu0 %2214, %v1473
        %v2216 = vpop.permute.xlu0 %2215
        %2219 = vset.pattern.permute.xlu0 0
        %2220 = vperm.xlu0 %2219, %v1475
        %v2221 = vpop.permute.xlu0 %2220
        %2224 = vset.pattern.permute.xlu0 0
        %2225 = vperm.xlu0 %2224, %v1477
        %v2226 = vpop.permute.xlu0 %2225
        %2229 = vset.pattern.permute.xlu0 0
        %2230 = vperm.xlu0 %2229, %v1479
        %v2231 = vpop.permute.xlu0 %2230
        %2234 = vset.pattern.permute.xlu0 0
        %2235 = vperm.xlu0 %2234, %v1481
        %v2236 = vpop.permute.xlu0 %2235
        %2239 = vset.pattern.permute.xlu0 0
        %2240 = vperm.xlu0 %2239, %v1483
        %v2241 = vpop.permute.xlu0 %2240
        %2244 = vset.pattern.permute.xlu0 0
        %2245 = vperm.xlu0 %2244, %v1485
        %v2246 = vpop.permute.xlu0 %2245
        %2249 = vset.pattern.permute.xlu0 0
        %2250 = vperm.xlu0 %2249, %v1487
        %v2251 = vpop.permute.xlu0 %2250
        %2254 = vset.pattern.permute.xlu0 0
        %2255 = vperm.xlu0 %2254, %v1489
        %v2256 = vpop.permute.xlu0 %2255
        %2259 = vset.pattern.permute.xlu0 0
        %2260 = vperm.xlu0 %2259, %v1491
        %v2261 = vpop.permute.xlu0 %2260
        %2264 = vset.pattern.permute.xlu0 0
        %2265 = vperm.xlu0 %2264, %v1493
        %v2266 = vpop.permute.xlu0 %2265
        %2269 = vset.pattern.permute.xlu0 0
        %2270 = vperm.xlu0 %2269, %v1495
        %v2271 = vpop.permute.xlu0 %2270
        %2274 = vset.pattern.permute.xlu0 0
        %2275 = vperm.xlu0 %2274, %v1497
        %v2276 = vpop.permute.xlu0 %2275
        %2279 = vset.pattern.permute.xlu0 0
        %2280 = vperm.xlu0 %2279, %v1499
        %v2281 = vpop.permute.xlu0 %2280
        %2284 = vset.pattern.permute.xlu0 0
        %2285 = vperm.xlu0 %2284, %v1501
        %v2286 = vpop.permute.xlu0 %2285
        %2289 = vset.pattern.permute.xlu0 0
        %2290 = vperm.xlu0 %2289, %v1503
        %v2291 = vpop.permute.xlu0 %2290
        %2294 = vset.pattern.permute.xlu0 0
        %2295 = vperm.xlu0 %2294, %v1505
        %v2296 = vpop.permute.xlu0 %2295
        %2299 = vset.pattern.permute.xlu0 0
        %2300 = vperm.xlu0 %2299, %v1507
        %v2301 = vpop.permute.xlu0 %2300
        %2304 = vset.pattern.permute.xlu0 0
        %2305 = vperm.xlu0 %2304, %v1509
        %v2306 = vpop.permute.xlu0 %2305
        %2309 = vset.pattern.permute.xlu0 0
        %2310 = vperm.xlu0 %2309, %v1511
        %v2311 = vpop.permute.xlu0 %2310
        %v2313 = vmul.f32 %v2156, %v2121
        %v2314 = vmul.f32 %v2161, %v2122
        %v2315 = vmul.f32 %v2166, %v2123
        %v2316 = vmul.f32 %v2171, %v2124
        %v2317 = vmul.f32 %v2176, %v2125
        %v2318 = vmul.f32 %v2181, %v2126
        %v2319 = vmul.f32 %v2186, %v2127
        %v2320 = vmul.f32 %v2191, %v2128
        %v2321 = vmul.f32 %v2196, %v2129
        %v2322 = vmul.f32 %v2201, %v2130
        %v2323 = vmul.f32 %v2206, %v2131
        %v2324 = vmul.f32 %v2211, %v2132
        %v2325 = vmul.f32 %v2216, %v2133
        %v2326 = vmul.f32 %v2221, %v2134
        %v2327 = vmul.f32 %v2226, %v2135
        %v2328 = vmul.f32 %v2231, %v2136
        %v2329 = vmul.f32 %v2236, %v2137
        %v2330 = vmul.f32 %v2241, %v2138
        %v2331 = vmul.f32 %v2246, %v2139
        %v2332 = vmul.f32 %v2251, %v2140
        %v2333 = vmul.f32 %v2256, %v2141
        %v2334 = vmul.f32 %v2261, %v2142
        %v2335 = vmul.f32 %v2266, %v2143
        %v2336 = vmul.f32 %v2271, %v2144
        %v2337 = vmul.f32 %v2276, %v2145
        %v2338 = vmul.f32 %v2281, %v2146
        %v2339 = vmul.f32 %v2286, %v2147
        %v2340 = vmul.f32 %v2291, %v2148
        %v2341 = vmul.f32 %v2296, %v2149
        %v2342 = vmul.f32 %v2301, %v2150
        %v2343 = vmul.f32 %v2306, %v2151
        %v2344 = vmul.f32 %v2311, %v2152
        %v2345 = vld [vmem:[%s323] sm:$0xf]
        %v2346 = vld [vmem:[%s323 + $0x4] sm:$0xf]
        %v2347 = vld [vmem:[%s323 + $0x8] sm:$0xf]
        %v2348 = vld [vmem:[%s323 + $0xc] sm:$0xf]
        %v2349 = vld [vmem:[%s323 + $0x10] sm:$0xf]
        %v2350 = vld [vmem:[%s323 + $0x14] sm:$0xf]
        %v2351 = vld [vmem:[%s323 + $0x18] sm:$0xf]
        %v2352 = vld [vmem:[%s323 + $0x1c] sm:$0xf]
        %v2353 = vld [vmem:[%s323 + $0x20] sm:$0xf]
        %v2354 = vld [vmem:[%s323 + $0x24] sm:$0xf]
        %v2355 = vld [vmem:[%s323 + $0x28] sm:$0xf]
        %v2356 = vld [vmem:[%s323 + $0x2c] sm:$0xf]
        %v2357 = vld [vmem:[%s323 + $0x30] sm:$0xf]
        %v2358 = vld [vmem:[%s323 + $0x34] sm:$0xf]
        %v2359 = vld [vmem:[%s323 + $0x38] sm:$0xf]
        %v2360 = vld [vmem:[%s323 + $0x3c] sm:$0xf]
        %v2361 = vld [vmem:[%s323 + $0x40] sm:$0xf]
        %v2362 = vld [vmem:[%s323 + $0x44] sm:$0xf]
        %v2363 = vld [vmem:[%s323 + $0x48] sm:$0xf]
        %v2364 = vld [vmem:[%s323 + $0x4c] sm:$0xf]
        %v2365 = vld [vmem:[%s323 + $0x50] sm:$0xf]
        %v2366 = vld [vmem:[%s323 + $0x54] sm:$0xf]
        %v2367 = vld [vmem:[%s323 + $0x58] sm:$0xf]
        %v2368 = vld [vmem:[%s323 + $0x5c] sm:$0xf]
        %v2369 = vld [vmem:[%s323 + $0x60] sm:$0xf]
        %v2370 = vld [vmem:[%s323 + $0x64] sm:$0xf]
        %v2371 = vld [vmem:[%s323 + $0x68] sm:$0xf]
        %v2372 = vld [vmem:[%s323 + $0x6c] sm:$0xf]
        %v2373 = vld [vmem:[%s323 + $0x70] sm:$0xf]
        %v2374 = vld [vmem:[%s323 + $0x74] sm:$0xf]
        %v2375 = vld [vmem:[%s323 + $0x78] sm:$0xf]
        %v2376 = vld [vmem:[%s323 + $0x7c] sm:$0xf]
        %v2409 = vunpack.c.l.b16 %v2345
        %v2410 = vunpack.c.l.b16 %v2346
        %v2411 = vunpack.c.l.b16 %v2347
        %v2412 = vunpack.c.l.b16 %v2348
        %v2413 = vunpack.c.l.b16 %v2349
        %v2414 = vunpack.c.l.b16 %v2350
        %v2415 = vunpack.c.l.b16 %v2351
        %v2416 = vunpack.c.l.b16 %v2352
        %v2417 = vunpack.c.l.b16 %v2353
        %v2418 = vunpack.c.l.b16 %v2354
        %v2419 = vunpack.c.l.b16 %v2355
        %v2420 = vunpack.c.l.b16 %v2356
        %v2421 = vunpack.c.l.b16 %v2357
        %v2422 = vunpack.c.l.b16 %v2358
        %v2423 = vunpack.c.l.b16 %v2359
        %v2424 = vunpack.c.l.b16 %v2360
        %v2425 = vunpack.c.l.b16 %v2361
        %v2426 = vunpack.c.l.b16 %v2362
        %v2427 = vunpack.c.l.b16 %v2363
        %v2428 = vunpack.c.l.b16 %v2364
        %v2429 = vunpack.c.l.b16 %v2365
        %v2430 = vunpack.c.l.b16 %v2366
        %v2431 = vunpack.c.l.b16 %v2367
        %v2432 = vunpack.c.l.b16 %v2368
        %v2433 = vunpack.c.l.b16 %v2369
        %v2434 = vunpack.c.l.b16 %v2370
        %v2435 = vunpack.c.l.b16 %v2371
        %v2436 = vunpack.c.l.b16 %v2372
        %v2437 = vunpack.c.l.b16 %v2373
        %v2438 = vunpack.c.l.b16 %v2374
        %v2439 = vunpack.c.l.b16 %v2375
        %v2440 = vunpack.c.l.b16 %v2376
        %v2441 = vpack.c.b16 %v2410, %v2409
        %v2442 = vpack.c.b16 %v2412, %v2411
        %v2443 = vpack.c.b16 %v2414, %v2413
        %v2444 = vpack.c.b16 %v2416, %v2415
        %v2445 = vpack.c.b16 %v2418, %v2417
        %v2446 = vpack.c.b16 %v2420, %v2419
        %v2447 = vpack.c.b16 %v2422, %v2421
        %v2448 = vpack.c.b16 %v2424, %v2423
        %v2449 = vpack.c.b16 %v2426, %v2425
        %v2450 = vpack.c.b16 %v2428, %v2427
        %v2451 = vpack.c.b16 %v2430, %v2429
        %v2452 = vpack.c.b16 %v2432, %v2431
        %v2453 = vpack.c.b16 %v2434, %v2433
        %v2454 = vpack.c.b16 %v2436, %v2435
        %v2455 = vpack.c.b16 %v2438, %v2437
        %v2456 = vpack.c.b16 %v2440, %v2439
        %2473 = vmatpush.bf16.msra.mxu0 %v2448
        %2474 = vmatpush.bf16.msra.mxu0 %v2447
        %2475 = vmatpush.bf16.msra.mxu0 %v2446
        %2476 = vmatpush.bf16.msra.mxu0 %v2445
        %2477 = vmatpush.bf16.msra.mxu0 %v2444
        %2478 = vmatpush.bf16.msra.mxu0 %v2443
        %2479 = vmatpush.bf16.msra.mxu0 %v2442
        %2480 = vmatpush.bf16.msra.mxu0 %v2441
        %2481 = vmatmul.bf16.gmra.mxu0 %v1864
        %v2482 = vpop.f32.mrf.mxu0
        %v2483 = vadd.f32 0.0, %v2482
        %v2484 = vpop.f32.mrf.mxu0
        %v2485 = vadd.f32 0.0, %v2484
        %2486 = vmatmul.bf16.gmra.mxu0 %v1866
        %v2487 = vpop.f32.mrf.mxu0
        %v2488 = vadd.f32 0.0, %v2487
        %v2489 = vpop.f32.mrf.mxu0
        %v2490 = vadd.f32 0.0, %v2489
        %2491 = vmatmul.bf16.gmra.mxu0 %v1868
        %v2492 = vpop.f32.mrf.mxu0
        %v2493 = vadd.f32 0.0, %v2492
        %v2494 = vpop.f32.mrf.mxu0
        %v2495 = vadd.f32 0.0, %v2494
        %2496 = vmatmul.bf16.gmra.mxu0 %v1870
        %v2497 = vpop.f32.mrf.mxu0
        %v2498 = vadd.f32 0.0, %v2497
        %v2499 = vpop.f32.mrf.mxu0
        %v2500 = vadd.f32 0.0, %v2499
        %2501 = vmatmul.bf16.gmra.mxu0 %v1872
        %v2502 = vpop.f32.mrf.mxu0
        %v2503 = vadd.f32 0.0, %v2502
        %v2504 = vpop.f32.mrf.mxu0
        %v2505 = vadd.f32 0.0, %v2504
        %2506 = vmatmul.bf16.gmra.mxu0 %v1874
        %v2507 = vpop.f32.mrf.mxu0
        %v2508 = vadd.f32 0.0, %v2507
        %v2509 = vpop.f32.mrf.mxu0
        %v2510 = vadd.f32 0.0, %v2509
        %2511 = vmatmul.bf16.gmra.mxu0 %v1876
        %v2512 = vpop.f32.mrf.mxu0
        %v2513 = vadd.f32 0.0, %v2512
        %v2514 = vpop.f32.mrf.mxu0
        %v2515 = vadd.f32 0.0, %v2514
        %2516 = vmatmul.bf16.gmra.mxu0 %v1878
        %v2517 = vpop.f32.mrf.mxu0
        %v2518 = vadd.f32 0.0, %v2517
        %v2519 = vpop.f32.mrf.mxu0
        %v2520 = vadd.f32 0.0, %v2519
        %2521 = vmatmul.bf16.gmra.mxu0 %v1880
        %v2522 = vpop.f32.mrf.mxu0
        %v2523 = vadd.f32 0.0, %v2522
        %v2524 = vpop.f32.mrf.mxu0
        %v2525 = vadd.f32 0.0, %v2524
        %2526 = vmatmul.bf16.gmra.mxu0 %v1882
        %v2527 = vpop.f32.mrf.mxu0
        %v2528 = vadd.f32 0.0, %v2527
        %v2529 = vpop.f32.mrf.mxu0
        %v2530 = vadd.f32 0.0, %v2529
        %2531 = vmatmul.bf16.gmra.mxu0 %v1884
        %v2532 = vpop.f32.mrf.mxu0
        %v2533 = vadd.f32 0.0, %v2532
        %v2534 = vpop.f32.mrf.mxu0
        %v2535 = vadd.f32 0.0, %v2534
        %2536 = vmatmul.bf16.gmra.mxu0 %v1886
        %v2537 = vpop.f32.mrf.mxu0
        %v2538 = vadd.f32 0.0, %v2537
        %v2539 = vpop.f32.mrf.mxu0
        %v2540 = vadd.f32 0.0, %v2539
        %2541 = vmatmul.bf16.gmra.mxu0 %v1888
        %v2542 = vpop.f32.mrf.mxu0
        %v2543 = vadd.f32 0.0, %v2542
        %v2544 = vpop.f32.mrf.mxu0
        %v2545 = vadd.f32 0.0, %v2544
        %2546 = vmatmul.bf16.gmra.mxu0 %v1890
        %v2547 = vpop.f32.mrf.mxu0
        %v2548 = vadd.f32 0.0, %v2547
        %v2549 = vpop.f32.mrf.mxu0
        %v2550 = vadd.f32 0.0, %v2549
        %2551 = vmatmul.bf16.gmra.mxu0 %v1892
        %v2552 = vpop.f32.mrf.mxu0
        %v2553 = vadd.f32 0.0, %v2552
        %v2554 = vpop.f32.mrf.mxu0
        %v2555 = vadd.f32 0.0, %v2554
        %2556 = vmatmul.bf16.gmra.mxu0 %v1894
        %v2557 = vpop.f32.mrf.mxu0
        %v2558 = vadd.f32 0.0, %v2557
        %v2559 = vpop.f32.mrf.mxu0
        %v2560 = vadd.f32 0.0, %v2559
        %2561 = vdwg.mxu0
        %2562 = vmatpush.bf16.msra.mxu0 %v2456
        %2563 = vmatpush.bf16.msra.mxu0 %v2455
        %2564 = vmatpush.bf16.msra.mxu0 %v2454
        %2565 = vmatpush.bf16.msra.mxu0 %v2453
        %2566 = vmatpush.bf16.msra.mxu0 %v2452
        %2567 = vmatpush.bf16.msra.mxu0 %v2451
        %2568 = vmatpush.bf16.msra.mxu0 %v2450
        %2569 = vmatpush.bf16.msra.mxu0 %v2449
        %2570 = vmatmul.bf16.gmra.mxu0 %v1865
        %v2571 = vpop.f32.mrf.mxu0
        %v2572 = vadd.f32 %v2483, %v2571
        %v2573 = vpop.f32.mrf.mxu0
        %v2574 = vadd.f32 %v2485, %v2573
        %2575 = vmatmul.bf16.gmra.mxu0 %v1867
        %v2576 = vpop.f32.mrf.mxu0
        %v2577 = vadd.f32 %v2488, %v2576
        %v2578 = vpop.f32.mrf.mxu0
        %v2579 = vadd.f32 %v2490, %v2578
        %2580 = vmatmul.bf16.gmra.mxu0 %v1869
        %v2581 = vpop.f32.mrf.mxu0
        %v2582 = vadd.f32 %v2493, %v2581
        %v2583 = vpop.f32.mrf.mxu0
        %v2584 = vadd.f32 %v2495, %v2583
        %2585 = vmatmul.bf16.gmra.mxu0 %v1871
        %v2586 = vpop.f32.mrf.mxu0
        %v2587 = vadd.f32 %v2498, %v2586
        %v2588 = vpop.f32.mrf.mxu0
        %v2589 = vadd.f32 %v2500, %v2588
        %2590 = vmatmul.bf16.gmra.mxu0 %v1873
        %v2591 = vpop.f32.mrf.mxu0
        %v2592 = vadd.f32 %v2503, %v2591
        %v2593 = vpop.f32.mrf.mxu0
        %v2594 = vadd.f32 %v2505, %v2593
        %2595 = vmatmul.bf16.gmra.mxu0 %v1875
        %v2596 = vpop.f32.mrf.mxu0
        %v2597 = vadd.f32 %v2508, %v2596
        %v2598 = vpop.f32.mrf.mxu0
        %v2599 = vadd.f32 %v2510, %v2598
        %2600 = vmatmul.bf16.gmra.mxu0 %v1877
        %v2601 = vpop.f32.mrf.mxu0
        %v2602 = vadd.f32 %v2513, %v2601
        %v2603 = vpop.f32.mrf.mxu0
        %v2604 = vadd.f32 %v2515, %v2603
        %2605 = vmatmul.bf16.gmra.mxu0 %v1879
        %v2606 = vpop.f32.mrf.mxu0
        %v2607 = vadd.f32 %v2518, %v2606
        %v2608 = vpop.f32.mrf.mxu0
        %v2609 = vadd.f32 %v2520, %v2608
        %2610 = vmatmul.bf16.gmra.mxu0 %v1881
        %v2611 = vpop.f32.mrf.mxu0
        %v2612 = vadd.f32 %v2523, %v2611
        %v2613 = vpop.f32.mrf.mxu0
        %v2614 = vadd.f32 %v2525, %v2613
        %2615 = vmatmul.bf16.gmra.mxu0 %v1883
        %v2616 = vpop.f32.mrf.mxu0
        %v2617 = vadd.f32 %v2528, %v2616
        %v2618 = vpop.f32.mrf.mxu0
        %v2619 = vadd.f32 %v2530, %v2618
        %2620 = vmatmul.bf16.gmra.mxu0 %v1885
        %v2621 = vpop.f32.mrf.mxu0
        %v2622 = vadd.f32 %v2533, %v2621
        %v2623 = vpop.f32.mrf.mxu0
        %v2624 = vadd.f32 %v2535, %v2623
        %2625 = vmatmul.bf16.gmra.mxu0 %v1887
        %v2626 = vpop.f32.mrf.mxu0
        %v2627 = vadd.f32 %v2538, %v2626
        %v2628 = vpop.f32.mrf.mxu0
        %v2629 = vadd.f32 %v2540, %v2628
        %2630 = vmatmul.bf16.gmra.mxu0 %v1889
        %v2631 = vpop.f32.mrf.mxu0
        %v2632 = vadd.f32 %v2543, %v2631
        %v2633 = vpop.f32.mrf.mxu0
        %v2634 = vadd.f32 %v2545, %v2633
        %2635 = vmatmul.bf16.gmra.mxu0 %v1891
        %v2636 = vpop.f32.mrf.mxu0
        %v2637 = vadd.f32 %v2548, %v2636
        %v2638 = vpop.f32.mrf.mxu0
        %v2639 = vadd.f32 %v2550, %v2638
        %2640 = vmatmul.bf16.gmra.mxu0 %v1893
        %v2641 = vpop.f32.mrf.mxu0
        %v2642 = vadd.f32 %v2553, %v2641
        %v2643 = vpop.f32.mrf.mxu0
        %v2644 = vadd.f32 %v2555, %v2643
        %2645 = vmatmul.bf16.gmra.mxu0 %v1895
        %v2646 = vpop.f32.mrf.mxu0
        %v2647 = vadd.f32 %v2558, %v2646
        %v2648 = vpop.f32.mrf.mxu0
        %v2649 = vadd.f32 %v2560, %v2648
        %2650 = vdwg.mxu0
        %v2651 = vadd.f32 %v2313, %v2572
        %v2652 = vadd.f32 %v2314, %v2574
        %v2653 = vadd.f32 %v2315, %v2577
        %v2654 = vadd.f32 %v2316, %v2579
        %v2655 = vadd.f32 %v2317, %v2582
        %v2656 = vadd.f32 %v2318, %v2584
        %v2657 = vadd.f32 %v2319, %v2587
        %v2658 = vadd.f32 %v2320, %v2589
        %v2659 = vadd.f32 %v2321, %v2592
        %v2660 = vadd.f32 %v2322, %v2594
        %v2661 = vadd.f32 %v2323, %v2597
        %v2662 = vadd.f32 %v2324, %v2599
        %v2663 = vadd.f32 %v2325, %v2602
        %v2664 = vadd.f32 %v2326, %v2604
        %v2665 = vadd.f32 %v2327, %v2607
        %v2666 = vadd.f32 %v2328, %v2609
        %v2667 = vadd.f32 %v2329, %v2612
        %v2668 = vadd.f32 %v2330, %v2614
        %v2669 = vadd.f32 %v2331, %v2617
        %v2670 = vadd.f32 %v2332, %v2619
        %v2671 = vadd.f32 %v2333, %v2622
        %v2672 = vadd.f32 %v2334, %v2624
        %v2673 = vadd.f32 %v2335, %v2627
        %v2674 = vadd.f32 %v2336, %v2629
        %v2675 = vadd.f32 %v2337, %v2632
        %v2676 = vadd.f32 %v2338, %v2634
        %v2677 = vadd.f32 %v2339, %v2637
        %v2678 = vadd.f32 %v2340, %v2639
        %v2679 = vadd.f32 %v2341, %v2642
        %v2680 = vadd.f32 %v2342, %v2644
        %v2681 = vadd.f32 %v2343, %v2647
        %v2682 = vadd.f32 %v2344, %v2649
        %2683 = vst [vmem:[#allocation4] sm:$0xff] %v2651
        %2684 = vst [vmem:[#allocation4 + $0x8] sm:$0xff] %v2652
        %2685 = vst [vmem:[#allocation4 + $0x10] sm:$0xff] %v2653
        %2686 = vst [vmem:[#allocation4 + $0x18] sm:$0xff] %v2654
        %2687 = vst [vmem:[#allocation4 + $0x20] sm:$0xff] %v2655
        %2688 = vst [vmem:[#allocation4 + $0x28] sm:$0xff] %v2656
        %2689 = vst [vmem:[#allocation4 + $0x30] sm:$0xff] %v2657
        %2690 = vst [vmem:[#allocation4 + $0x38] sm:$0xff] %v2658
        %2691 = vst [vmem:[#allocation4 + $0x40] sm:$0xff] %v2659
        %2692 = vst [vmem:[#allocation4 + $0x48] sm:$0xff] %v2660
        %2693 = vst [vmem:[#allocation4 + $0x50] sm:$0xff] %v2661
        %2694 = vst [vmem:[#allocation4 + $0x58] sm:$0xff] %v2662
        %2695 = vst [vmem:[#allocation4 + $0x60] sm:$0xff] %v2663
        %2696 = vst [vmem:[#allocation4 + $0x68] sm:$0xff] %v2664
        %2697 = vst [vmem:[#allocation4 + $0x70] sm:$0xff] %v2665
        %2698 = vst [vmem:[#allocation4 + $0x78] sm:$0xff] %v2666
        %2699 = vst [vmem:[#allocation4 + $0x80] sm:$0xff] %v2667
        %2700 = vst [vmem:[#allocation4 + $0x88] sm:$0xff] %v2668
        %2701 = vst [vmem:[#allocation4 + $0x90] sm:$0xff] %v2669
        %2702 = vst [vmem:[#allocation4 + $0x98] sm:$0xff] %v2670
        %2703 = vst [vmem:[#allocation4 + $0xa0] sm:$0xff] %v2671
        %2704 = vst [vmem:[#allocation4 + $0xa8] sm:$0xff] %v2672
        %2705 = vst [vmem:[#allocation4 + $0xb0] sm:$0xff] %v2673
        %2706 = vst [vmem:[#allocation4 + $0xb8] sm:$0xff] %v2674
        %2707 = vst [vmem:[#allocation4 + $0xc0] sm:$0xff] %v2675
        %2708 = vst [vmem:[#allocation4 + $0xc8] sm:$0xff] %v2676
        %2709 = vst [vmem:[#allocation4 + $0xd0] sm:$0xff] %v2677
        %2710 = vst [vmem:[#allocation4 + $0xd8] sm:$0xff] %v2678
        %2711 = vst [vmem:[#allocation4 + $0xe0] sm:$0xff] %v2679
        %2712 = vst [vmem:[#allocation4 + $0xe8] sm:$0xff] %v2680
        %2713 = vst [vmem:[#allocation4 + $0xf0] sm:$0xff] %v2681
        %2714 = vst [vmem:[#allocation4 + $0xf8] sm:$0xff] %v2682
        %2715 = vst.msk [vmem:[#allocation2] sm:$0xff] %vm2088, %v1384
        %2716 = vst.msk [vmem:[#allocation2 + $0x8] sm:$0xff] %vm2088, %v1385
        %2717 = vst.msk [vmem:[#allocation2 + $0x10] sm:$0xff] %vm2088, %v1386
        %2718 = vst.msk [vmem:[#allocation2 + $0x18] sm:$0xff] %vm2088, %v1387
        %2719 = vst.msk [vmem:[#allocation2 + $0x20] sm:$0xff] %vm2088, %v1388
        %2720 = vst.msk [vmem:[#allocation2 + $0x28] sm:$0xff] %vm2088, %v1389
        %2721 = vst.msk [vmem:[#allocation2 + $0x30] sm:$0xff] %vm2088, %v1390
        %2722 = vst.msk [vmem:[#allocation2 + $0x38] sm:$0xff] %vm2088, %v1391
        %2723 = vst.msk [vmem:[#allocation2 + $0x40] sm:$0xff] %vm2088, %v1392
        %2724 = vst.msk [vmem:[#allocation2 + $0x48] sm:$0xff] %vm2088, %v1393
        %2725 = vst.msk [vmem:[#allocation2 + $0x50] sm:$0xff] %vm2088, %v1394
        %2726 = vst.msk [vmem:[#allocation2 + $0x58] sm:$0xff] %vm2088, %v1395
        %2727 = vst.msk [vmem:[#allocation2 + $0x60] sm:$0xff] %vm2088, %v1396
        %2728 = vst.msk [vmem:[#allocation2 + $0x68] sm:$0xff] %vm2088, %v1397
        %2729 = vst.msk [vmem:[#allocation2 + $0x70] sm:$0xff] %vm2088, %v1398
        %2730 = vst.msk [vmem:[#allocation2 + $0x78] sm:$0xff] %vm2088, %v1399
        %2731 = vst.msk [vmem:[#allocation2 + $0x80] sm:$0xff] %vm2088, %v1400
        %2732 = vst.msk [vmem:[#allocation2 + $0x88] sm:$0xff] %vm2088, %v1401
        %2733 = vst.msk [vmem:[#allocation2 + $0x90] sm:$0xff] %vm2088, %v1402
        %2734 = vst.msk [vmem:[#allocation2 + $0x98] sm:$0xff] %vm2088, %v1403
        %2735 = vst.msk [vmem:[#allocation2 + $0xa0] sm:$0xff] %vm2088, %v1404
        %2736 = vst.msk [vmem:[#allocation2 + $0xa8] sm:$0xff] %vm2088, %v1405
        %2737 = vst.msk [vmem:[#allocation2 + $0xb0] sm:$0xff] %vm2088, %v1406
        %2738 = vst.msk [vmem:[#allocation2 + $0xb8] sm:$0xff] %vm2088, %v1407
        %2739 = vst.msk [vmem:[#allocation2 + $0xc0] sm:$0xff] %vm2088, %v1408
        %2740 = vst.msk [vmem:[#allocation2 + $0xc8] sm:$0xff] %vm2088, %v1409
        %2741 = vst.msk [vmem:[#allocation2 + $0xd0] sm:$0xff] %vm2088, %v1410
        %2742 = vst.msk [vmem:[#allocation2 + $0xd8] sm:$0xff] %vm2088, %v1411
        %2743 = vst.msk [vmem:[#allocation2 + $0xe0] sm:$0xff] %vm2088, %v1412
        %2744 = vst.msk [vmem:[#allocation2 + $0xe8] sm:$0xff] %vm2088, %v1413
        %2745 = vst.msk [vmem:[#allocation2 + $0xf0] sm:$0xff] %vm2088, %v1414
        %2746 = vst.msk [vmem:[#allocation2 + $0xf8] sm:$0xff] %vm2088, %v1415
        %p2747 = scmp.eq.s32.totalorder %s20, 1
        // Predicated region
        $region64: #{gat_layer.3} parent=54 // pred_check
          %p2748 = pneg %p2747
        $region65: #{gat_layer.3} parent=54 // pred_check_branch
          %2750 = sbr.rel (%p2748) target = $region67
        $region66: #{gat_layer.3} parent=54 // pred_region
          %v2751 = vld [vmem:[#allocation4] sm:$0xff]
          %v2752 = vld [vmem:[#allocation4 + $0x8] sm:$0xff]
          %v2753 = vld [vmem:[#allocation4 + $0x10] sm:$0xff]
          %v2754 = vld [vmem:[#allocation4 + $0x18] sm:$0xff]
          %v2755 = vld [vmem:[#allocation4 + $0x20] sm:$0xff]
          %v2756 = vld [vmem:[#allocation4 + $0x28] sm:$0xff]
          %v2757 = vld [vmem:[#allocation4 + $0x30] sm:$0xff]
          %v2758 = vld [vmem:[#allocation4 + $0x38] sm:$0xff]
          %v2759 = vld [vmem:[#allocation4 + $0x40] sm:$0xff]
          %v2760 = vld [vmem:[#allocation4 + $0x48] sm:$0xff]
          %v2761 = vld [vmem:[#allocation4 + $0x50] sm:$0xff]
          %v2762 = vld [vmem:[#allocation4 + $0x58] sm:$0xff]
          %v2763 = vld [vmem:[#allocation4 + $0x60] sm:$0xff]
          %v2764 = vld [vmem:[#allocation4 + $0x68] sm:$0xff]
          %v2765 = vld [vmem:[#allocation4 + $0x70] sm:$0xff]
          %v2766 = vld [vmem:[#allocation4 + $0x78] sm:$0xff]
          %v2767 = vld [vmem:[#allocation4 + $0x80] sm:$0xff]
          %v2768 = vld [vmem:[#allocation4 + $0x88] sm:$0xff]
          %v2769 = vld [vmem:[#allocation4 + $0x90] sm:$0xff]
          %v2770 = vld [vmem:[#allocation4 + $0x98] sm:$0xff]
          %v2771 = vld [vmem:[#allocation4 + $0xa0] sm:$0xff]
          %v2772 = vld [vmem:[#allocation4 + $0xa8] sm:$0xff]
          %v2773 = vld [vmem:[#allocation4 + $0xb0] sm:$0xff]
          %v2774 = vld [vmem:[#allocation4 + $0xb8] sm:$0xff]
          %v2775 = vld [vmem:[#allocation4 + $0xc0] sm:$0xff]
          %v2776 = vld [vmem:[#allocation4 + $0xc8] sm:$0xff]
          %v2777 = vld [vmem:[#allocation4 + $0xd0] sm:$0xff]
          %v2778 = vld [vmem:[#allocation4 + $0xd8] sm:$0xff]
          %v2779 = vld [vmem:[#allocation4 + $0xe0] sm:$0xff]
          %v2780 = vld [vmem:[#allocation4 + $0xe8] sm:$0xff]
          %v2781 = vld [vmem:[#allocation4 + $0xf0] sm:$0xff]
          %v2782 = vld [vmem:[#allocation4 + $0xf8] sm:$0xff]
          %v2783 = vld [vmem:[#allocation3] sm:$0xff]
          %v2784 = vld [vmem:[#allocation3 + $0x8] sm:$0xff]
          %v2785 = vld [vmem:[#allocation3 + $0x10] sm:$0xff]
          %v2786 = vld [vmem:[#allocation3 + $0x18] sm:$0xff]
          %v2787 = vld [vmem:[#allocation3 + $0x20] sm:$0xff]
          %v2788 = vld [vmem:[#allocation3 + $0x28] sm:$0xff]
          %v2789 = vld [vmem:[#allocation3 + $0x30] sm:$0xff]
          %v2790 = vld [vmem:[#allocation3 + $0x38] sm:$0xff]
          %v2791 = vld [vmem:[#allocation3 + $0x40] sm:$0xff]
          %v2792 = vld [vmem:[#allocation3 + $0x48] sm:$0xff]
          %v2793 = vld [vmem:[#allocation3 + $0x50] sm:$0xff]
          %v2794 = vld [vmem:[#allocation3 + $0x58] sm:$0xff]
          %v2795 = vld [vmem:[#allocation3 + $0x60] sm:$0xff]
          %v2796 = vld [vmem:[#allocation3 + $0x68] sm:$0xff]
          %v2797 = vld [vmem:[#allocation3 + $0x70] sm:$0xff]
          %v2798 = vld [vmem:[#allocation3 + $0x78] sm:$0xff]
          %v2799 = vld [vmem:[#allocation3 + $0x80] sm:$0xff]
          %v2800 = vld [vmem:[#allocation3 + $0x88] sm:$0xff]
          %v2801 = vld [vmem:[#allocation3 + $0x90] sm:$0xff]
          %v2802 = vld [vmem:[#allocation3 + $0x98] sm:$0xff]
          %v2803 = vld [vmem:[#allocation3 + $0xa0] sm:$0xff]
          %v2804 = vld [vmem:[#allocation3 + $0xa8] sm:$0xff]
          %v2805 = vld [vmem:[#allocation3 + $0xb0] sm:$0xff]
          %v2806 = vld [vmem:[#allocation3 + $0xb8] sm:$0xff]
          %v2807 = vld [vmem:[#allocation3 + $0xc0] sm:$0xff]
          %v2808 = vld [vmem:[#allocation3 + $0xc8] sm:$0xff]
          %v2809 = vld [vmem:[#allocation3 + $0xd0] sm:$0xff]
          %v2810 = vld [vmem:[#allocation3 + $0xd8] sm:$0xff]
          %v2811 = vld [vmem:[#allocation3 + $0xe0] sm:$0xff]
          %v2812 = vld [vmem:[#allocation3 + $0xe8] sm:$0xff]
          %v2813 = vld [vmem:[#allocation3 + $0xf0] sm:$0xff]
          %v2814 = vld [vmem:[#allocation3 + $0xf8] sm:$0xff]
          %v2815 = vrcp.pop %v2783
          %v2816 = vrcp.pop %v2784
          %v2817 = vrcp.pop %v2785
          %v2818 = vrcp.pop %v2786
          %v2819 = vrcp.pop %v2787
          %v2820 = vrcp.pop %v2788
          %v2821 = vrcp.pop %v2789
          %v2822 = vrcp.pop %v2790
          %v2823 = vrcp.pop %v2791
          %v2824 = vrcp.pop %v2792
          %v2825 = vrcp.pop %v2793
          %v2826 = vrcp.pop %v2794
          %v2827 = vrcp.pop %v2795
          %v2828 = vrcp.pop %v2796
          %v2829 = vrcp.pop %v2797
          %v2830 = vrcp.pop %v2798
          %v2831 = vrcp.pop %v2799
          %v2832 = vrcp.pop %v2800
          %v2833 = vrcp.pop %v2801
          %v2834 = vrcp.pop %v2802
          %v2835 = vrcp.pop %v2803
          %v2836 = vrcp.pop %v2804
          %v2837 = vrcp.pop %v2805
          %v2838 = vrcp.pop %v2806
          %v2839 = vrcp.pop %v2807
          %v2840 = vrcp.pop %v2808
          %v2841 = vrcp.pop %v2809
          %v2842 = vrcp.pop %v2810
          %v2843 = vrcp.pop %v2811
          %v2844 = vrcp.pop %v2812
          %v2845 = vrcp.pop %v2813
          %v2846 = vrcp.pop %v2814
          %2848 = vset.pattern.permute.xlu0 0
          %2849 = vperm.xlu0 %2848, %v2815
          %v2850 = vpop.permute.xlu0 %2849
          %2853 = vset.pattern.permute.xlu0 0
          %2854 = vperm.xlu0 %2853, %v2816
          %v2855 = vpop.permute.xlu0 %2854
          %2858 = vset.pattern.permute.xlu0 0
          %2859 = vperm.xlu0 %2858, %v2817
          %v2860 = vpop.permute.xlu0 %2859
          %2863 = vset.pattern.permute.xlu0 0
          %2864 = vperm.xlu0 %2863, %v2818
          %v2865 = vpop.permute.xlu0 %2864
          %2868 = vset.pattern.permute.xlu0 0
          %2869 = vperm.xlu0 %2868, %v2819
          %v2870 = vpop.permute.xlu0 %2869
          %2873 = vset.pattern.permute.xlu0 0
          %2874 = vperm.xlu0 %2873, %v2820
          %v2875 = vpop.permute.xlu0 %2874
          %2878 = vset.pattern.permute.xlu0 0
          %2879 = vperm.xlu0 %2878, %v2821
          %v2880 = vpop.permute.xlu0 %2879
          %2883 = vset.pattern.permute.xlu0 0
          %2884 = vperm.xlu0 %2883, %v2822
          %v2885 = vpop.permute.xlu0 %2884
          %2888 = vset.pattern.permute.xlu0 0
          %2889 = vperm.xlu0 %2888, %v2823
          %v2890 = vpop.permute.xlu0 %2889
          %2893 = vset.pattern.permute.xlu0 0
          %2894 = vperm.xlu0 %2893, %v2824
          %v2895 = vpop.permute.xlu0 %2894
          %2898 = vset.pattern.permute.xlu0 0
          %2899 = vperm.xlu0 %2898, %v2825
          %v2900 = vpop.permute.xlu0 %2899
          %2903 = vset.pattern.permute.xlu0 0
          %2904 = vperm.xlu0 %2903, %v2826
          %v2905 = vpop.permute.xlu0 %2904
          %2908 = vset.pattern.permute.xlu0 0
          %2909 = vperm.xlu0 %2908, %v2827
          %v2910 = vpop.permute.xlu0 %2909
          %2913 = vset.pattern.permute.xlu0 0
          %2914 = vperm.xlu0 %2913, %v2828
          %v2915 = vpop.permute.xlu0 %2914
          %2918 = vset.pattern.permute.xlu0 0
          %2919 = vperm.xlu0 %2918, %v2829
          %v2920 = vpop.permute.xlu0 %2919
          %2923 = vset.pattern.permute.xlu0 0
          %2924 = vperm.xlu0 %2923, %v2830
          %v2925 = vpop.permute.xlu0 %2924
          %2928 = vset.pattern.permute.xlu0 0
          %2929 = vperm.xlu0 %2928, %v2831
          %v2930 = vpop.permute.xlu0 %2929
          %2933 = vset.pattern.permute.xlu0 0
          %2934 = vperm.xlu0 %2933, %v2832
          %v2935 = vpop.permute.xlu0 %2934
          %2938 = vset.pattern.permute.xlu0 0
          %2939 = vperm.xlu0 %2938, %v2833
          %v2940 = vpop.permute.xlu0 %2939
          %2943 = vset.pattern.permute.xlu0 0
          %2944 = vperm.xlu0 %2943, %v2834
          %v2945 = vpop.permute.xlu0 %2944
          %2948 = vset.pattern.permute.xlu0 0
          %2949 = vperm.xlu0 %2948, %v2835
          %v2950 = vpop.permute.xlu0 %2949
          %2953 = vset.pattern.permute.xlu0 0
          %2954 = vperm.xlu0 %2953, %v2836
          %v2955 = vpop.permute.xlu0 %2954
          %2958 = vset.pattern.permute.xlu0 0
          %2959 = vperm.xlu0 %2958, %v2837
          %v2960 = vpop.permute.xlu0 %2959
          %2963 = vset.pattern.permute.xlu0 0
          %2964 = vperm.xlu0 %2963, %v2838
          %v2965 = vpop.permute.xlu0 %2964
          %2968 = vset.pattern.permute.xlu0 0
          %2969 = vperm.xlu0 %2968, %v2839
          %v2970 = vpop.permute.xlu0 %2969
          %2973 = vset.pattern.permute.xlu0 0
          %2974 = vperm.xlu0 %2973, %v2840
          %v2975 = vpop.permute.xlu0 %2974
          %2978 = vset.pattern.permute.xlu0 0
          %2979 = vperm.xlu0 %2978, %v2841
          %v2980 = vpop.permute.xlu0 %2979
          %2983 = vset.pattern.permute.xlu0 0
          %2984 = vperm.xlu0 %2983, %v2842
          %v2985 = vpop.permute.xlu0 %2984
          %2988 = vset.pattern.permute.xlu0 0
          %2989 = vperm.xlu0 %2988, %v2843
          %v2990 = vpop.permute.xlu0 %2989
          %2993 = vset.pattern.permute.xlu0 0
          %2994 = vperm.xlu0 %2993, %v2844
          %v2995 = vpop.permute.xlu0 %2994
          %2998 = vset.pattern.permute.xlu0 0
          %2999 = vperm.xlu0 %2998, %v2845
          %v3000 = vpop.permute.xlu0 %2999
          %3003 = vset.pattern.permute.xlu0 0
          %3004 = vperm.xlu0 %3003, %v2846
          %v3005 = vpop.permute.xlu0 %3004
          %v3007 = vmul.f32 %v2751, %v2850
          %v3008 = vmul.f32 %v2752, %v2855
          %v3009 = vmul.f32 %v2753, %v2860
          %v3010 = vmul.f32 %v2754, %v2865
          %v3011 = vmul.f32 %v2755, %v2870
          %v3012 = vmul.f32 %v2756, %v2875
          %v3013 = vmul.f32 %v2757, %v2880
          %v3014 = vmul.f32 %v2758, %v2885
          %v3015 = vmul.f32 %v2759, %v2890
          %v3016 = vmul.f32 %v2760, %v2895
          %v3017 = vmul.f32 %v2761, %v2900
          %v3018 = vmul.f32 %v2762, %v2905
          %v3019 = vmul.f32 %v2763, %v2910
          %v3020 = vmul.f32 %v2764, %v2915
          %v3021 = vmul.f32 %v2765, %v2920
          %v3022 = vmul.f32 %v2766, %v2925
          %v3023 = vmul.f32 %v2767, %v2930
          %v3024 = vmul.f32 %v2768, %v2935
          %v3025 = vmul.f32 %v2769, %v2940
          %v3026 = vmul.f32 %v2770, %v2945
          %v3027 = vmul.f32 %v2771, %v2950
          %v3028 = vmul.f32 %v2772, %v2955
          %v3029 = vmul.f32 %v2773, %v2960
          %v3030 = vmul.f32 %v2774, %v2965
          %v3031 = vmul.f32 %v2775, %v2970
          %v3032 = vmul.f32 %v2776, %v2975
          %v3033 = vmul.f32 %v2777, %v2980
          %v3034 = vmul.f32 %v2778, %v2985
          %v3035 = vmul.f32 %v2779, %v2990
          %v3036 = vmul.f32 %v2780, %v2995
          %v3037 = vmul.f32 %v2781, %v3000
          %v3038 = vmul.f32 %v2782, %v3005
          %3039 = vst [vmem:[%s329] sm:$0xff] %v3007
          %3040 = vst [vmem:[%s329 + $0x8] sm:$0xff] %v3008
          %3041 = vst [vmem:[%s329 + $0x10] sm:$0xff] %v3009
          %3042 = vst [vmem:[%s329 + $0x18] sm:$0xff] %v3010
          %3043 = vst [vmem:[%s329 + $0x20] sm:$0xff] %v3011
          %3044 = vst [vmem:[%s329 + $0x28] sm:$0xff] %v3012
          %3045 = vst [vmem:[%s329 + $0x30] sm:$0xff] %v3013
          %3046 = vst [vmem:[%s329 + $0x38] sm:$0xff] %v3014
          %3047 = vst [vmem:[%s329 + $0x40] sm:$0xff] %v3015
          %3048 = vst [vmem:[%s329 + $0x48] sm:$0xff] %v3016
          %3049 = vst [vmem:[%s329 + $0x50] sm:$0xff] %v3017
          %3050 = vst [vmem:[%s329 + $0x58] sm:$0xff] %v3018
          %3051 = vst [vmem:[%s329 + $0x60] sm:$0xff] %v3019
          %3052 = vst [vmem:[%s329 + $0x68] sm:$0xff] %v3020
          %3053 = vst [vmem:[%s329 + $0x70] sm:$0xff] %v3021
          %3054 = vst [vmem:[%s329 + $0x78] sm:$0xff] %v3022
          %3055 = vst [vmem:[%s329 + $0x80] sm:$0xff] %v3023
          %3056 = vst [vmem:[%s329 + $0x88] sm:$0xff] %v3024
          %3057 = vst [vmem:[%s329 + $0x90] sm:$0xff] %v3025
          %3058 = vst [vmem:[%s329 + $0x98] sm:$0xff] %v3026
          %3059 = vst [vmem:[%s329 + $0xa0] sm:$0xff] %v3027
          %3060 = vst [vmem:[%s329 + $0xa8] sm:$0xff] %v3028
          %3061 = vst [vmem:[%s329 + $0xb0] sm:$0xff] %v3029
          %3062 = vst [vmem:[%s329 + $0xb8] sm:$0xff] %v3030
          %3063 = vst [vmem:[%s329 + $0xc0] sm:$0xff] %v3031
          %3064 = vst [vmem:[%s329 + $0xc8] sm:$0xff] %v3032
          %3065 = vst [vmem:[%s329 + $0xd0] sm:$0xff] %v3033
          %3066 = vst [vmem:[%s329 + $0xd8] sm:$0xff] %v3034
          %3067 = vst [vmem:[%s329 + $0xe0] sm:$0xff] %v3035
          %3068 = vst [vmem:[%s329 + $0xe8] sm:$0xff] %v3036
          %3069 = vst [vmem:[%s329 + $0xf0] sm:$0xff] %v3037
          %3070 = vst [vmem:[%s329 + $0xf8] sm:$0xff] %v3038
        $region67: #{gat_layer.3} parent=54 // pred_fallthru
          _
        %s3071 = smul.u32 32, %s19
        %p3072 = scmp.lt.s32.totalorder %s3071, 63
        %s3073 = scalar_select %p3072, %s3071, 63
        %s3074 = smul.addr %s3073, 8
        %s3075 = scalar_lea.vmem %s4, %s3074
        // Predicated region
        $region68: #{gat_layer.3} parent=54 // pred_check
          %p3076 = pneg %p151
        $region69: #{gat_layer.3} parent=54 // pred_check_branch
          %3078 = sbr.rel (%p3076) target = $region71
        $region70: #{gat_layer.3} parent=54 // pred_region
          %s3079 = smul.u32 32, %s19
        $region71: #{gat_layer.3} parent=54 // pred_fallthru
          _
      $region55: #{gat_layer.3} parent=5 // pred_fallthru
        _
      %p3080 = scmp.le.s32.totalorder 2, %s10
      // Predicated region
      $region72: #{gat_layer.3} parent=5 // pred_check
        %p3081 = pneg %p3080
      $region73: #{gat_layer.3} parent=5 // pred_check_branch
        %3083 = sbr.rel (%p3081) target = $region75
      $region74: #{gat_layer.3} parent=5 // pred_region
        %s3084 = ssub.s32 %s10, 2
        // Predicated region
        $region76: #{gat_layer.3} parent=74 // pred_check
          %p3085 = pneg %p157
        $region77: #{gat_layer.3} parent=74 // pred_check_branch
          %3087 = sbr.rel (%p3085) target = $region79
        $region78: #{gat_layer.3} parent=74 // pred_region
          %s3088 = smul.u32 32, %s21
          %p3089 = scmp.lt.s32.totalorder %s3088, 63
          %s3090 = scalar_select %p3089, %s3088, 63
          %s3091 = smul.addr %s3090, 8
          %s3092 = scalar_lea.vmem %s4, %s3091
        $region79: #{gat_layer.3} parent=74 // pred_fallthru
          _
      $region75: #{gat_layer.3} parent=5 // pred_fallthru
        _
    $region6: #{gat_layer.3} parent=1 // loop_footer
      %s14 = sadd.s32 1, %s10
    $region7: #{gat_layer.3} parent=1 // loop_footer_branch
      %9 = sbr.rel target = $region3
    $region8: #{gat_layer.3} parent=1 // loop_exit
      _

</llo_original>
